<compile_context>
chip_gen: v7x
topology: tpu7x:2x2x1
jax: 0.10.0
libtpu: 0.0.40
codegen_flags: <defaults>
</compile_context>

<pallas_src>
import jax
import jax.numpy as jnp
from jax import lax
from jax.experimental import pallas as pl
from jax.experimental.pallas import tpu as pltpu


# ---------------------------------------------------------------------------
# Fused Pallas kernel
# ---------------------------------------------------------------------------
def _make_fused_kernel(T, B, H):
    G = 4 * H
    f32 = jnp.float32

    def lstm_cell(pre, c):
        # Gate lanes are packed (i | f | o | g); one sigmoid pass covers i/f/o,
        # one (narrow) tanh pass covers g.  Static lane slices, no MXU traffic.
        sg = jax.nn.sigmoid(pre[:, :3 * H])
        g = jnp.tanh(pre[:, 3 * H:])
        i_g = sg[:, :H]
        f_g = sg[:, H:2 * H]
        o_g = sg[:, 2 * H:3 * H]
        c_new = f_g * c + i_g * g
        h_new = o_g * jnp.tanh(c_new)
        return h_new, c_new

    def kernel(x_ref, wih1_ref, b1_ref, whh1_ref, wih2_ref, b2_ref, whh2_ref,
               fcw_ref, fcb_ref, out_ref, xwf_ref, xwb_ref, l1f_ref, l1b_ref):
        x = x_ref[...]                                    # [T*B, 1] time-major

        # ---- layer-1 input projection (input_size == 1): hoisted broadcast multiply.
        xwf_ref[...] = x * wih1_ref[0:1, :] + b1_ref[0:1, :]     # [T*B, 4H]
        xwb_ref[...] = x * wih1_ref[1:2, :] + b1_ref[1:2, :]

        # ---- layer-1 recurrence: fw & bw interleaved per unrolled step.
        zero = jnp.zeros((B, H), f32)
        h_f = zero
        c_f = zero
        h_b = zero
        c_b = zero
        whh1_f = whh1_ref[0]                              # [H, 4H], read once
        whh1_b = whh1_ref[1]
        for s in range(T):                                # fully unrolled (T static)
            tf, tb = s, T - 1 - s
            pre_f = xwf_ref[tf * B:(tf + 1) * B, :] + jnp.dot(
                h_f, whh1_f, preferred_element_type=f32)
            pre_b = xwb_ref[tb * B:(tb + 1) * B, :] + jnp.dot(
                h_b, whh1_b, preferred_element_type=f32)
            h_f, c_f = lstm_cell(pre_f, c_f)
            h_b, c_b = lstm_cell(pre_b, c_b)
            l1f_ref[tf * B:(tf + 1) * B, :] = h_f
            l1b_ref[tb * B:(tb + 1) * B, :] = h_b

        # ---- layer-2 input projection: one big matmul per direction over all steps.
        l1 = jnp.concatenate([l1f_ref[...], l1b_ref[...]], axis=1)   # [T*B, 2H]
        xwf_ref[...] = jnp.dot(l1, wih2_ref[0],
                               preferred_element_type=f32) + b2_ref[0:1, :]
        xwb_ref[...] = jnp.dot(l1, wih2_ref[1],
                               preferred_element_type=f32) + b2_ref[1:2, :]

        # ---- layer-2 recurrence: per-step outputs are dead; only final h is needed.
        h2f = zero
        c2f = zero
        h2b = zero
        c2b = zero
        whh2_f = whh2_ref[0]
        whh2_b = whh2_ref[1]
        for s in range(T):
            tf, tb = s, T - 1 - s
            pre_f = xwf_ref[tf * B:(tf + 1) * B, :] + jnp.dot(
                h2f, whh2_f, preferred_element_type=f32)
            pre_b = xwb_ref[tb * B:(tb + 1) * B, :] + jnp.dot(
                h2b, whh2_b, preferred_element_type=f32)
            h2f, c2f = lstm_cell(pre_f, c2f)
            h2b, c2b = lstm_cell(pre_b, c2b)

        # ---- fc head: VPU multiply + lane reduce (no N=1 matmul, no extra launch).
        y = (jnp.sum(h2f * fcw_ref[0:1, :], axis=-1, keepdims=True)
             + jnp.sum(h2b * fcw_ref[1:2, :], axis=-1, keepdims=True))
        out_ref[...] = y + fcb_ref[...]                   # [B, 1]

    return kernel


# ---------------------------------------------------------------------------
# Wrapper
# ---------------------------------------------------------------------------
def baseline_bilstm_forward(x, kp):
    """x: [B, T] or [B, T, 1] -> [B]  (matches the PyTorch module in eval mode)."""
    if x.ndim == 2:
        x = x[..., None]
    B, T, D = x.shape
    assert D == 1, "kernel is specialized to input_size == 1"
    G = kp["b1"].shape[-1]
    H = G // 4

    # time-major, flattened to [T*B, 1] (row index = t*B + b)
    x_tb = jnp.transpose(x[..., 0], (1, 0)).reshape(T * B, 1).astype(jnp.float32)

    kernel = _make_fused_kernel(T, B, H)
    vmem = pl.BlockSpec(memory_space=pltpu.MemorySpace.VMEM)
    y = pl.pallas_call(
        kernel,
        out_shape=jax.ShapeDtypeStruct((B, 1), jnp.float32),
        in_specs=[vmem] * 9,
        out_specs=vmem,
        scratch_shapes=[
            pltpu.VMEM((T * B, G), jnp.float32),   # fw input projection (reused by L2)
            pltpu.VMEM((T * B, G), jnp.float32),   # bw input projection (reused by L2)
            pltpu.VMEM((T * B, H), jnp.float32),   # layer-1 fw output sequence
            pltpu.VMEM((T * B, H), jnp.float32),   # layer-1 bw output sequence
        ],
    )(x_tb, kp["wih1"], kp["b1"], kp["whh1"], kp["wih2"], kp["b2"],
      kp["whh2"], kp["fcw"], kp["fcb"])
    return y[:, 0]


# ---------------------------------------------------------------------------
# Parameters: raw (PyTorch layout) + kernel-ready (gate-reordered) layout
# ---------------------------------------------------------------------------
def init_raw_params(key, input_size=1, hidden_size=32, num_layers=2):
    """PyTorch-style U(-1/sqrt(H), 1/sqrt(H)) init in the nn.LSTM / nn.Linear layout."""
    H = hidden_size
    k = 1.0 / float(H) ** 0.5
    params = {"lstm": []}
    for layer in range(num_layers):
        D = input_size if layer == 0 else 2 * H
        lp = {}
        for d in ("fw", "bw"):
            key, k1, k2, k3, k4 = jax.random.split(key, 5)
            lp[d] = {
                "w_ih": jax.random.uniform(k1, (4 * H, D), jnp.float32, -k, k),
                "w_hh": jax.random.uniform(k2, (4 * H, H), jnp.float32, -k, k),
                "b_ih": jax.random.uniform(k3, (4 * H,), jnp.float32, -k, k),
                "b_hh": jax.random.uniform(k4, (4 * H,), jnp.float32, -k, k),
            }
        params["lstm"].append(lp)
    key, k1, k2 = jax.random.split(key, 3)
    kf = 1.0 / float(2 * H) ** 0.5
    params["fc_w"] = jax.random.uniform(k1, (1, 2 * H), jnp.float32, -kf, kf)
    params["fc_b"] = jax.random.uniform(k2, (1,), jnp.float32, -kf, kf)
    return params


def _reorder_gates(w, axis=0):
    """PyTorch packs LSTM gates as (i, f, g, o); the kernel wants (i, f, o, g)."""
    i, f, g, o = jnp.split(w, 4, axis=axis)
    return jnp.concatenate([i, f, o, g], axis=axis)


def prepare_params(raw):
    """Repack raw PyTorch-layout weights into the fused kernel's layout."""
    assert len(raw["lstm"]) == 2, "kernel is specialized to num_layers == 2"
    l1, l2 = raw["lstm"]
    H = l1["fw"]["w_hh"].shape[1]
    assert l1["fw"]["w_ih"].shape[1] == 1, "kernel is specialized to input_size == 1"

    def pack_dir(lp):
        w_ih = _reorder_gates(lp["w_ih"].astype(jnp.float32), 0)            # [4H, D]
        w_hh = _reorder_gates(lp["w_hh"].astype(jnp.float32), 0)            # [4H, H]
        b = _reorder_gates((lp["b_ih"] + lp["b_hh"]).astype(jnp.float32), 0)  # [4H]
        return w_ih, w_hh, b

    wih1f, whh1f, b1f = pack_dir(l1["fw"])
    wih1b, whh1b, b1b = pack_dir(l1["bw"])
    wih2f, whh2f, b2f = pack_dir(l2["fw"])
    wih2b, whh2b, b2b = pack_dir(l2["bw"])

    return {
        "wih1": jnp.stack([wih1f[:, 0], wih1b[:, 0]]),                 # [2, 4H]
        "b1":   jnp.stack([b1f, b1b]),                                 # [2, 4H]
        "whh1": jnp.stack([whh1f.T, whh1b.T]),                         # [2, H, 4H]
        "wih2": jnp.stack([wih2f.T, wih2b.T]),                         # [2, 2H, 4H]
        "b2":   jnp.stack([b2f, b2b]),                                 # [2, 4H]
        "whh2": jnp.stack([whh2f.T, whh2b.T]),                         # [2, H, 4H]
        "fcw":  jnp.stack([raw["fc_w"][0, :H], raw["fc_w"][0, H:]]),   # [2, H]
        "fcb":  raw["fc_b"].reshape(1, 1),                             # [1, 1]
    }


# ---------------------------------------------------------------------------
# Pure-JAX reference (PyTorch semantics) for the correctness check
# ---------------------------------------------------------------------------
def _ref_lstm_layer(x_tbd, w_ih, w_hh, b, reverse):
    T, Bsz, _ = x_tbd.shape
    H = w_hh.shape[1]
    xs = x_tbd[::-1] if reverse else x_tbd

    def step(carry, x_t):
        h, c = carry
        gates = x_t @ w_ih.T + h @ w_hh.T + b
        i = jax.nn.sigmoid(gates[:, :H])
        f = jax.nn.sigmoid(gates[:, H:2 * H])
        g = jnp.tanh(gates[:, 2 * H:3 * H])
        o = jax.nn.sigmoid(gates[:, 3 * H:])
        c = f * c + i * g
        h = o * jnp.tanh(c)
        return (h, c), h

    (h, _), outs = lax.scan(step, (jnp.zeros((Bsz, H)), jnp.zeros((Bsz, H))), xs)
    if reverse:
        outs = outs[::-1]
    return outs, h


def reference_forward(x, raw):
    if x.ndim == 2:
        x = x[..., None]
    xin = jnp.transpose(x, (1, 0, 2)).astype(jnp.float32)
    h_fw = h_bw = None
    for lp in raw["lstm"]:
        of, h_fw = _ref_lstm_layer(xin, lp["fw"]["w_ih"], lp["fw"]["w_hh"],
                                   lp["fw"]["b_ih"] + lp["fw"]["b_hh"], False)
        ob, h_bw = _ref_lstm_layer(xin, lp["bw"]["w_ih"], lp["bw"]["w_hh"],
                                   lp["bw"]["b_ih"] + lp["bw"]["b_hh"], True)
        xin = jnp.concatenate([of, ob], axis=-1)
    hcat = jnp.concatenate([h_fw, h_bw], axis=-1)
    return (hcat @ raw["fc_w"].T + raw["fc_b"])[:, 0]


# ---------------------------------------------------------------------------
if __name__ == "__main__":
    key = jax.random.PRNGKey(0)
    kx, kparam = jax.random.split(key)

    B, T, H = 8, 8, 32
    x = jax.random.normal(kx, (B, T), jnp.float32)   # [B, T], like the PyTorch input

    raw = init_raw_params(kparam, input_size=1, hidden_size=H, num_layers=2)
    kp = prepare_params(raw)

    fwd = jax.jit(baseline_bilstm_forward)
    y = jax.block_until_ready(fwd(x, kp))

    y_ref = reference_forward(x, raw)
    assert y.shape == (B,), y.shape
    assert jnp.allclose(y, y_ref, atol=5e-4, rtol=1e-4), (y, y_ref)

    print("KERNEL_OK")
</pallas_src>

<mosaic_0001>
module attributes {stable_mosaic.version = 11 : i64} {
  func.func @kernel(%arg0: memref<64x1xf32, #tpu.memory_space<vmem>>, %arg1: memref<2x128xf32, #tpu.memory_space<vmem>>, %arg2: memref<2x128xf32, #tpu.memory_space<vmem>>, %arg3: memref<2x32x128xf32, #tpu.memory_space<vmem>>, %arg4: memref<2x64x128xf32, #tpu.memory_space<vmem>>, %arg5: memref<2x128xf32, #tpu.memory_space<vmem>>, %arg6: memref<2x32x128xf32, #tpu.memory_space<vmem>>, %arg7: memref<2x32xf32, #tpu.memory_space<vmem>>, %arg8: memref<1x1xf32, #tpu.memory_space<vmem>>, %arg9: memref<8x1xf32, #tpu.memory_space<vmem>>, %arg10: memref<64x128xf32, #tpu.memory_space<vmem>>, %arg11: memref<64x128xf32, #tpu.memory_space<vmem>>, %arg12: memref<64x32xf32, #tpu.memory_space<vmem>>, %arg13: memref<64x32xf32, #tpu.memory_space<vmem>>) attributes {dimension_semantics = [], scalar_prefetch = 0 : i64, scratch_operands = 4 : i64, tpu.core_type = #tpu.core_type<tc>} {
    %c0 = arith.constant 0 : index
    %c0_0 = arith.constant 0 : index
    %0 = vector.load %arg0[%c0, %c0_0] : memref<64x1xf32, #tpu.memory_space<vmem>>, vector<64x1xf32>
    %c0_1 = arith.constant 0 : index
    %c0_2 = arith.constant 0 : index
    %1 = vector.load %arg1[%c0_1, %c0_2] : memref<2x128xf32, #tpu.memory_space<vmem>>, vector<1x128xf32>
    %2 = vector.broadcast %0 : vector<64x1xf32> to vector<64x128xf32>
    %3 = vector.broadcast %1 : vector<1x128xf32> to vector<64x128xf32>
    %4 = arith.mulf %2, %3 : vector<64x128xf32>
    %c0_3 = arith.constant 0 : index
    %c0_4 = arith.constant 0 : index
    %5 = vector.load %arg2[%c0_3, %c0_4] : memref<2x128xf32, #tpu.memory_space<vmem>>, vector<1x128xf32>
    %6 = vector.broadcast %5 : vector<1x128xf32> to vector<64x128xf32>
    %7 = arith.addf %4, %6 : vector<64x128xf32>
    %c0_5 = arith.constant 0 : index
    %c0_6 = arith.constant 0 : index
    %8 = vector.load %arg10[%c0_5, %c0_6] : memref<64x128xf32, #tpu.memory_space<vmem>>, vector<64x128xf32>
    tpu.vector_store %arg10[%c0_5, %c0_6], %7 {strides = array<i32>} : memref<64x128xf32, #tpu.memory_space<vmem>>, vector<64x128xf32>,
    %c1 = arith.constant 1 : index
    %c0_7 = arith.constant 0 : index
    %9 = vector.load %arg1[%c1, %c0_7] : memref<2x128xf32, #tpu.memory_space<vmem>>, vector<1x128xf32>
    %10 = vector.broadcast %0 : vector<64x1xf32> to vector<64x128xf32>
    %11 = vector.broadcast %9 : vector<1x128xf32> to vector<64x128xf32>
    %12 = arith.mulf %10, %11 : vector<64x128xf32>
    %c1_8 = arith.constant 1 : index
    %c0_9 = arith.constant 0 : index
    %13 = vector.load %arg2[%c1_8, %c0_9] : memref<2x128xf32, #tpu.memory_space<vmem>>, vector<1x128xf32>
    %14 = vector.broadcast %13 : vector<1x128xf32> to vector<64x128xf32>
    %15 = arith.addf %12, %14 : vector<64x128xf32>
    %c0_10 = arith.constant 0 : index
    %c0_11 = arith.constant 0 : index
    %16 = vector.load %arg11[%c0_10, %c0_11] : memref<64x128xf32, #tpu.memory_space<vmem>>, vector<64x128xf32>
    tpu.vector_store %arg11[%c0_10, %c0_11], %15 {strides = array<i32>} : memref<64x128xf32, #tpu.memory_space<vmem>>, vector<64x128xf32>,
    %cst = arith.constant 0.000000e+00 : f32
    %17 = vector.broadcast %cst : f32 to vector<8x32xf32>
    %c0_12 = arith.constant 0 : index
    %c0_13 = arith.constant 0 : index
    %c0_14 = arith.constant 0 : index
    %18 = vector.load %arg3[%c0_12, %c0_13, %c0_14] : memref<2x32x128xf32, #tpu.memory_space<vmem>>, vector<1x32x128xf32>
    %19 = vector.shape_cast %18 : vector<1x32x128xf32> to vector<32x128xf32>
    %c1_15 = arith.constant 1 : index
    %c0_16 = arith.constant 0 : index
    %c0_17 = arith.constant 0 : index
    %20 = vector.load %arg3[%c1_15, %c0_16, %c0_17] : memref<2x32x128xf32, #tpu.memory_space<vmem>>, vector<1x32x128xf32>
    %21 = vector.shape_cast %20 : vector<1x32x128xf32> to vector<32x128xf32>
    %c0_18 = arith.constant 0 : index
    %c0_19 = arith.constant 0 : index
    %22 = vector.load %arg10[%c0_18, %c0_19] : memref<64x128xf32, #tpu.memory_space<vmem>>, vector<8x128xf32>
    %cst_20 = arith.constant dense<0.000000e+00> : vector<8x128xf32>
    %23 = tpu.matmul %17, %19, %cst_20 {dimension_numbers = #tpu.dot_dimension_numbers<[1], [0], [0], [1], [0, 0, 1, 1], [], []>} : vector<8x32xf32>, vector<32x128xf32>, vector<8x128xf32> -> vector<8x128xf32>
    %24 = arith.addf %22, %23 : vector<8x128xf32>
    %c56 = arith.constant 56 : index
    %c0_21 = arith.constant 0 : index
    %25 = vector.load %arg11[%c56, %c0_21] : memref<64x128xf32, #tpu.memory_space<vmem>>, vector<8x128xf32>
    %cst_22 = arith.constant dense<0.000000e+00> : vector<8x128xf32>
    %26 = tpu.matmul %17, %21, %cst_22 {dimension_numbers = #tpu.dot_dimension_numbers<[1], [0], [0], [1], [0, 0, 1, 1], [], []>} : vector<8x32xf32>, vector<32x128xf32>, vector<8x128xf32> -> vector<8x128xf32>
    %27 = arith.addf %25, %26 : vector<8x128xf32>
    %28 = vector.extract_strided_slice %24 {offsets = [0, 0], sizes = [8, 96], strides = [1, 1]} : vector<8x128xf32> to vector<8x96xf32>
    %29 = arith.negf %28 : vector<8x96xf32>
    %30 = math.exp %29 : vector<8x96xf32>
    %cst_23 = arith.constant 1.000000e+00 : f32
    %31 = vector.broadcast %cst_23 : f32 to vector<8x96xf32>
    %32 = arith.addf %31, %30 : vector<8x96xf32>
    %33 = arith.divf %31, %32 : vector<8x96xf32>
    %34 = vector.extract_strided_slice %24 {offsets = [0, 96], sizes = [8, 32], strides = [1, 1]} : vector<8x128xf32> to vector<8x32xf32>
    %35 = math.tanh %34 : vector<8x32xf32>
    %36 = vector.extract_strided_slice %33 {offsets = [0, 0], sizes = [8, 32], strides = [1, 1]} : vector<8x96xf32> to vector<8x32xf32>
    %37 = vector.extract_strided_slice %33 {offsets = [0, 32], sizes = [8, 32], strides = [1, 1]} : vector<8x96xf32> to vector<8x32xf32>
    %38 = vector.extract_strided_slice %33 {offsets = [0, 64], sizes = [8, 32], strides = [1, 1]} : vector<8x96xf32> to vector<8x32xf32>
    %39 = arith.mulf %37, %17 : vector<8x32xf32>
    %40 = arith.mulf %36, %35 : vector<8x32xf32>
    %41 = arith.addf %39, %40 : vector<8x32xf32>
    %42 = math.tanh %41 : vector<8x32xf32>
    %43 = arith.mulf %38, %42 : vector<8x32xf32>
    %44 = vector.extract_strided_slice %27 {offsets = [0, 0], sizes = [8, 96], strides = [1, 1]} : vector<8x128xf32> to vector<8x96xf32>
    %45 = arith.negf %44 : vector<8x96xf32>
    %46 = math.exp %45 : vector<8x96xf32>
    %cst_24 = arith.constant 1.000000e+00 : f32
    %47 = vector.broadcast %cst_24 : f32 to vector<8x96xf32>
    %48 = arith.addf %47, %46 : vector<8x96xf32>
    %49 = arith.divf %47, %48 : vector<8x96xf32>
    %50 = vector.extract_strided_slice %27 {offsets = [0, 96], sizes = [8, 32], strides = [1, 1]} : vector<8x128xf32> to vector<8x32xf32>
    %51 = math.tanh %50 : vector<8x32xf32>
    %52 = vector.extract_strided_slice %49 {offsets = [0, 0], sizes = [8, 32], strides = [1, 1]} : vector<8x96xf32> to vector<8x32xf32>
    %53 = vector.extract_strided_slice %49 {offsets = [0, 32], sizes = [8, 32], strides = [1, 1]} : vector<8x96xf32> to vector<8x32xf32>
    %54 = vector.extract_strided_slice %49 {offsets = [0, 64], sizes = [8, 32], strides = [1, 1]} : vector<8x96xf32> to vector<8x32xf32>
    %55 = arith.mulf %53, %17 : vector<8x32xf32>
    %56 = arith.mulf %52, %51 : vector<8x32xf32>
    %57 = arith.addf %55, %56 : vector<8x32xf32>
    %58 = math.tanh %57 : vector<8x32xf32>
    %59 = arith.mulf %54, %58 : vector<8x32xf32>
    %c0_25 = arith.constant 0 : index
    %c0_26 = arith.constant 0 : index
    %60 = vector.load %arg12[%c0_25, %c0_26] : memref<64x32xf32, #tpu.memory_space<vmem>>, vector<8x32xf32>
    tpu.vector_store %arg12[%c0_25, %c0_26], %43 {strides = array<i32>} : memref<64x32xf32, #tpu.memory_space<vmem>>, vector<8x32xf32>,
    %c56_27 = arith.constant 56 : index
    %c0_28 = arith.constant 0 : index
    %61 = vector.load %arg13[%c56_27, %c0_28] : memref<64x32xf32, #tpu.memory_space<vmem>>, vector<8x32xf32>
    tpu.vector_store %arg13[%c56_27, %c0_28], %59 {strides = array<i32>} : memref<64x32xf32, #tpu.memory_space<vmem>>, vector<8x32xf32>,
    %c8 = arith.constant 8 : index
    %c0_29 = arith.constant 0 : index
    %62 = vector.load %arg10[%c8, %c0_29] : memref<64x128xf32, #tpu.memory_space<vmem>>, vector<8x128xf32>
    %cst_30 = arith.constant dense<0.000000e+00> : vector<8x128xf32>
    %63 = tpu.matmul %43, %19, %cst_30 {dimension_numbers = #tpu.dot_dimension_numbers<[1], [0], [0], [1], [0, 0, 1, 1], [], []>} : vector<8x32xf32>, vector<32x128xf32>, vector<8x128xf32> -> vector<8x128xf32>
    %64 = arith.addf %62, %63 : vector<8x128xf32>
    %c48 = arith.constant 48 : index
    %c0_31 = arith.constant 0 : index
    %65 = vector.load %arg11[%c48, %c0_31] : memref<64x128xf32, #tpu.memory_space<vmem>>, vector<8x128xf32>
    %cst_32 = arith.constant dense<0.000000e+00> : vector<8x128xf32>
    %66 = tpu.matmul %59, %21, %cst_32 {dimension_numbers = #tpu.dot_dimension_numbers<[1], [0], [0], [1], [0, 0, 1, 1], [], []>} : vector<8x32xf32>, vector<32x128xf32>, vector<8x128xf32> -> vector<8x128xf32>
    %67 = arith.addf %65, %66 : vector<8x128xf32>
    %68 = vector.extract_strided_slice %64 {offsets = [0, 0], sizes = [8, 96], strides = [1, 1]} : vector<8x128xf32> to vector<8x96xf32>
    %69 = arith.negf %68 : vector<8x96xf32>
    %70 = math.exp %69 : vector<8x96xf32>
    %cst_33 = arith.constant 1.000000e+00 : f32
    %71 = vector.broadcast %cst_33 : f32 to vector<8x96xf32>
    %72 = arith.addf %71, %70 : vector<8x96xf32>
    %73 = arith.divf %71, %72 : vector<8x96xf32>
    %74 = vector.extract_strided_slice %64 {offsets = [0, 96], sizes = [8, 32], strides = [1, 1]} : vector<8x128xf32> to vector<8x32xf32>
    %75 = math.tanh %74 : vector<8x32xf32>
    %76 = vector.extract_strided_slice %73 {offsets = [0, 0], sizes = [8, 32], strides = [1, 1]} : vector<8x96xf32> to vector<8x32xf32>
    %77 = vector.extract_strided_slice %73 {offsets = [0, 32], sizes = [8, 32], strides = [1, 1]} : vector<8x96xf32> to vector<8x32xf32>
    %78 = vector.extract_strided_slice %73 {offsets = [0, 64], sizes = [8, 32], strides = [1, 1]} : vector<8x96xf32> to vector<8x32xf32>
    %79 = arith.mulf %77, %41 : vector<8x32xf32>
    %80 = arith.mulf %76, %75 : vector<8x32xf32>
    %81 = arith.addf %79, %80 : vector<8x32xf32>
    %82 = math.tanh %81 : vector<8x32xf32>
    %83 = arith.mulf %78, %82 : vector<8x32xf32>
    %84 = vector.extract_strided_slice %67 {offsets = [0, 0], sizes = [8, 96], strides = [1, 1]} : vector<8x128xf32> to vector<8x96xf32>
    %85 = arith.negf %84 : vector<8x96xf32>
    %86 = math.exp %85 : vector<8x96xf32>
    %cst_34 = arith.constant 1.000000e+00 : f32
    %87 = vector.broadcast %cst_34 : f32 to vector<8x96xf32>
    %88 = arith.addf %87, %86 : vector<8x96xf32>
    %89 = arith.divf %87, %88 : vector<8x96xf32>
    %90 = vector.extract_strided_slice %67 {offsets = [0, 96], sizes = [8, 32], strides = [1, 1]} : vector<8x128xf32> to vector<8x32xf32>
    %91 = math.tanh %90 : vector<8x32xf32>
    %92 = vector.extract_strided_slice %89 {offsets = [0, 0], sizes = [8, 32], strides = [1, 1]} : vector<8x96xf32> to vector<8x32xf32>
    %93 = vector.extract_strided_slice %89 {offsets = [0, 32], sizes = [8, 32], strides = [1, 1]} : vector<8x96xf32> to vector<8x32xf32>
    %94 = vector.extract_strided_slice %89 {offsets = [0, 64], sizes = [8, 32], strides = [1, 1]} : vector<8x96xf32> to vector<8x32xf32>
    %95 = arith.mulf %93, %57 : vector<8x32xf32>
    %96 = arith.mulf %92, %91 : vector<8x32xf32>
    %97 = arith.addf %95, %96 : vector<8x32xf32>
    %98 = math.tanh %97 : vector<8x32xf32>
    %99 = arith.mulf %94, %98 : vector<8x32xf32>
    %c8_35 = arith.constant 8 : index
    %c0_36 = arith.constant 0 : index
    %100 = vector.load %arg12[%c8_35, %c0_36] : memref<64x32xf32, #tpu.memory_space<vmem>>, vector<8x32xf32>
    tpu.vector_store %arg12[%c8_35, %c0_36], %83 {strides = array<i32>} : memref<64x32xf32, #tpu.memory_space<vmem>>, vector<8x32xf32>,
    %c48_37 = arith.constant 48 : index
    %c0_38 = arith.constant 0 : index
    %101 = vector.load %arg13[%c48_37, %c0_38] : memref<64x32xf32, #tpu.memory_space<vmem>>, vector<8x32xf32>
    tpu.vector_store %arg13[%c48_37, %c0_38], %99 {strides = array<i32>} : memref<64x32xf32, #tpu.memory_space<vmem>>, vector<8x32xf32>,
    %c16 = arith.constant 16 : index
    %c0_39 = arith.constant 0 : index
    %102 = vector.load %arg10[%c16, %c0_39] : memref<64x128xf32, #tpu.memory_space<vmem>>, vector<8x128xf32>
    %cst_40 = arith.constant dense<0.000000e+00> : vector<8x128xf32>
    %103 = tpu.matmul %83, %19, %cst_40 {dimension_numbers = #tpu.dot_dimension_numbers<[1], [0], [0], [1], [0, 0, 1, 1], [], []>} : vector<8x32xf32>, vector<32x128xf32>, vector<8x128xf32> -> vector<8x128xf32>
    %104 = arith.addf %102, %103 : vector<8x128xf32>
    %c40 = arith.constant 40 : index
    %c0_41 = arith.constant 0 : index
    %105 = vector.load %arg11[%c40, %c0_41] : memref<64x128xf32, #tpu.memory_space<vmem>>, vector<8x128xf32>
    %cst_42 = arith.constant dense<0.000000e+00> : vector<8x128xf32>
    %106 = tpu.matmul %99, %21, %cst_42 {dimension_numbers = #tpu.dot_dimension_numbers<[1], [0], [0], [1], [0, 0, 1, 1], [], []>} : vector<8x32xf32>, vector<32x128xf32>, vector<8x128xf32> -> vector<8x128xf32>
    %107 = arith.addf %105, %106 : vector<8x128xf32>
    %108 = vector.extract_strided_slice %104 {offsets = [0, 0], sizes = [8, 96], strides = [1, 1]} : vector<8x128xf32> to vector<8x96xf32>
    %109 = arith.negf %108 : vector<8x96xf32>
    %110 = math.exp %109 : vector<8x96xf32>
    %cst_43 = arith.constant 1.000000e+00 : f32
    %111 = vector.broadcast %cst_43 : f32 to vector<8x96xf32>
    %112 = arith.addf %111, %110 : vector<8x96xf32>
    %113 = arith.divf %111, %112 : vector<8x96xf32>
    %114 = vector.extract_strided_slice %104 {offsets = [0, 96], sizes = [8, 32], strides = [1, 1]} : vector<8x128xf32> to vector<8x32xf32>
    %115 = math.tanh %114 : vector<8x32xf32>
    %116 = vector.extract_strided_slice %113 {offsets = [0, 0], sizes = [8, 32], strides = [1, 1]} : vector<8x96xf32> to vector<8x32xf32>
    %117 = vector.extract_strided_slice %113 {offsets = [0, 32], sizes = [8, 32], strides = [1, 1]} : vector<8x96xf32> to vector<8x32xf32>
    %118 = vector.extract_strided_slice %113 {offsets = [0, 64], sizes = [8, 32], strides = [1, 1]} : vector<8x96xf32> to vector<8x32xf32>
    %119 = arith.mulf %117, %81 : vector<8x32xf32>
    %120 = arith.mulf %116, %115 : vector<8x32xf32>
    %121 = arith.addf %119, %120 : vector<8x32xf32>
    %122 = math.tanh %121 : vector<8x32xf32>
    %123 = arith.mulf %118, %122 : vector<8x32xf32>
    %124 = vector.extract_strided_slice %107 {offsets = [0, 0], sizes = [8, 96], strides = [1, 1]} : vector<8x128xf32> to vector<8x96xf32>
    %125 = arith.negf %124 : vector<8x96xf32>
    %126 = math.exp %125 : vector<8x96xf32>
    %cst_44 = arith.constant 1.000000e+00 : f32
    %127 = vector.broadcast %cst_44 : f32 to vector<8x96xf32>
    %128 = arith.addf %127, %126 : vector<8x96xf32>
    %129 = arith.divf %127, %128 : vector<8x96xf32>
    %130 = vector.extract_strided_slice %107 {offsets = [0, 96], sizes = [8, 32], strides = [1, 1]} : vector<8x128xf32> to vector<8x32xf32>
    %131 = math.tanh %130 : vector<8x32xf32>
    %132 = vector.extract_strided_slice %129 {offsets = [0, 0], sizes = [8, 32], strides = [1, 1]} : vector<8x96xf32> to vector<8x32xf32>
    %133 = vector.extract_strided_slice %129 {offsets = [0, 32], sizes = [8, 32], strides = [1, 1]} : vector<8x96xf32> to vector<8x32xf32>
    %134 = vector.extract_strided_slice %129 {offsets = [0, 64], sizes = [8, 32], strides = [1, 1]} : vector<8x96xf32> to vector<8x32xf32>
    %135 = arith.mulf %133, %97 : vector<8x32xf32>
    %136 = arith.mulf %132, %131 : vector<8x32xf32>
    %137 = arith.addf %135, %136 : vector<8x32xf32>
    %138 = math.tanh %137 : vector<8x32xf32>
    %139 = arith.mulf %134, %138 : vector<8x32xf32>
    %c16_45 = arith.constant 16 : index
    %c0_46 = arith.constant 0 : index
    %140 = vector.load %arg12[%c16_45, %c0_46] : memref<64x32xf32, #tpu.memory_space<vmem>>, vector<8x32xf32>
    tpu.vector_store %arg12[%c16_45, %c0_46], %123 {strides = array<i32>} : memref<64x32xf32, #tpu.memory_space<vmem>>, vector<8x32xf32>,
    %c40_47 = arith.constant 40 : index
    %c0_48 = arith.constant 0 : index
    %141 = vector.load %arg13[%c40_47, %c0_48] : memref<64x32xf32, #tpu.memory_space<vmem>>, vector<8x32xf32>
    tpu.vector_store %arg13[%c40_47, %c0_48], %139 {strides = array<i32>} : memref<64x32xf32, #tpu.memory_space<vmem>>, vector<8x32xf32>,
    %c24 = arith.constant 24 : index
    %c0_49 = arith.constant 0 : index
    %142 = vector.load %arg10[%c24, %c0_49] : memref<64x128xf32, #tpu.memory_space<vmem>>, vector<8x128xf32>
    %cst_50 = arith.constant dense<0.000000e+00> : vector<8x128xf32>
    %143 = tpu.matmul %123, %19, %cst_50 {dimension_numbers = #tpu.dot_dimension_numbers<[1], [0], [0], [1], [0, 0, 1, 1], [], []>} : vector<8x32xf32>, vector<32x128xf32>, vector<8x128xf32> -> vector<8x128xf32>
    %144 = arith.addf %142, %143 : vector<8x128xf32>
    %c32 = arith.constant 32 : index
    %c0_51 = arith.constant 0 : index
    %145 = vector.load %arg11[%c32, %c0_51] : memref<64x128xf32, #tpu.memory_space<vmem>>, vector<8x128xf32>
    %cst_52 = arith.constant dense<0.000000e+00> : vector<8x128xf32>
    %146 = tpu.matmul %139, %21, %cst_52 {dimension_numbers = #tpu.dot_dimension_numbers<[1], [0], [0], [1], [0, 0, 1, 1], [], []>} : vector<8x32xf32>, vector<32x128xf32>, vector<8x128xf32> -> vector<8x128xf32>
    %147 = arith.addf %145, %146 : vector<8x128xf32>
    %148 = vector.extract_strided_slice %144 {offsets = [0, 0], sizes = [8, 96], strides = [1, 1]} : vector<8x128xf32> to vector<8x96xf32>
    %149 = arith.negf %148 : vector<8x96xf32>
    %150 = math.exp %149 : vector<8x96xf32>
    %cst_53 = arith.constant 1.000000e+00 : f32
    %151 = vector.broadcast %cst_53 : f32 to vector<8x96xf32>
    %152 = arith.addf %151, %150 : vector<8x96xf32>
    %153 = arith.divf %151, %152 : vector<8x96xf32>
    %154 = vector.extract_strided_slice %144 {offsets = [0, 96], sizes = [8, 32], strides = [1, 1]} : vector<8x128xf32> to vector<8x32xf32>
    %155 = math.tanh %154 : vector<8x32xf32>
    %156 = vector.extract_strided_slice %153 {offsets = [0, 0], sizes = [8, 32], strides = [1, 1]} : vector<8x96xf32> to vector<8x32xf32>
    %157 = vector.extract_strided_slice %153 {offsets = [0, 32], sizes = [8, 32], strides = [1, 1]} : vector<8x96xf32> to vector<8x32xf32>
    %158 = vector.extract_strided_slice %153 {offsets = [0, 64], sizes = [8, 32], strides = [1, 1]} : vector<8x96xf32> to vector<8x32xf32>
    %159 = arith.mulf %157, %121 : vector<8x32xf32>
    %160 = arith.mulf %156, %155 : vector<8x32xf32>
    %161 = arith.addf %159, %160 : vector<8x32xf32>
    %162 = math.tanh %161 : vector<8x32xf32>
    %163 = arith.mulf %158, %162 : vector<8x32xf32>
    %164 = vector.extract_strided_slice %147 {offsets = [0, 0], sizes = [8, 96], strides = [1, 1]} : vector<8x128xf32> to vector<8x96xf32>
    %165 = arith.negf %164 : vector<8x96xf32>
    %166 = math.exp %165 : vector<8x96xf32>
    %cst_54 = arith.constant 1.000000e+00 : f32
    %167 = vector.broadcast %cst_54 : f32 to vector<8x96xf32>
    %168 = arith.addf %167, %166 : vector<8x96xf32>
    %169 = arith.divf %167, %168 : vector<8x96xf32>
    %170 = vector.extract_strided_slice %147 {offsets = [0, 96], sizes = [8, 32], strides = [1, 1]} : vector<8x128xf32> to vector<8x32xf32>
    %171 = math.tanh %170 : vector<8x32xf32>
    %172 = vector.extract_strided_slice %169 {offsets = [0, 0], sizes = [8, 32], strides = [1, 1]} : vector<8x96xf32> to vector<8x32xf32>
    %173 = vector.extract_strided_slice %169 {offsets = [0, 32], sizes = [8, 32], strides = [1, 1]} : vector<8x96xf32> to vector<8x32xf32>
    %174 = vector.extract_strided_slice %169 {offsets = [0, 64], sizes = [8, 32], strides = [1, 1]} : vector<8x96xf32> to vector<8x32xf32>
    %175 = arith.mulf %173, %137 : vector<8x32xf32>
    %176 = arith.mulf %172, %171 : vector<8x32xf32>
    %177 = arith.addf %175, %176 : vector<8x32xf32>
    %178 = math.tanh %177 : vector<8x32xf32>
    %179 = arith.mulf %174, %178 : vector<8x32xf32>
    %c24_55 = arith.constant 24 : index
    %c0_56 = arith.constant 0 : index
    %180 = vector.load %arg12[%c24_55, %c0_56] : memref<64x32xf32, #tpu.memory_space<vmem>>, vector<8x32xf32>
    tpu.vector_store %arg12[%c24_55, %c0_56], %163 {strides = array<i32>} : memref<64x32xf32, #tpu.memory_space<vmem>>, vector<8x32xf32>,
    %c32_57 = arith.constant 32 : index
    %c0_58 = arith.constant 0 : index
    %181 = vector.load %arg13[%c32_57, %c0_58] : memref<64x32xf32, #tpu.memory_space<vmem>>, vector<8x32xf32>
    tpu.vector_store %arg13[%c32_57, %c0_58], %179 {strides = array<i32>} : memref<64x32xf32, #tpu.memory_space<vmem>>, vector<8x32xf32>,
    %c32_59 = arith.constant 32 : index
    %c0_60 = arith.constant 0 : index
    %182 = vector.load %arg10[%c32_59, %c0_60] : memref<64x128xf32, #tpu.memory_space<vmem>>, vector<8x128xf32>
    %cst_61 = arith.constant dense<0.000000e+00> : vector<8x128xf32>
    %183 = tpu.matmul %163, %19, %cst_61 {dimension_numbers = #tpu.dot_dimension_numbers<[1], [0], [0], [1], [0, 0, 1, 1], [], []>} : vector<8x32xf32>, vector<32x128xf32>, vector<8x128xf32> -> vector<8x128xf32>
    %184 = arith.addf %182, %183 : vector<8x128xf32>
    %c24_62 = arith.constant 24 : index
    %c0_63 = arith.constant 0 : index
    %185 = vector.load %arg11[%c24_62, %c0_63] : memref<64x128xf32, #tpu.memory_space<vmem>>, vector<8x128xf32>
    %cst_64 = arith.constant dense<0.000000e+00> : vector<8x128xf32>
    %186 = tpu.matmul %179, %21, %cst_64 {dimension_numbers = #tpu.dot_dimension_numbers<[1], [0], [0], [1], [0, 0, 1, 1], [], []>} : vector<8x32xf32>, vector<32x128xf32>, vector<8x128xf32> -> vector<8x128xf32>
    %187 = arith.addf %185, %186 : vector<8x128xf32>
    %188 = vector.extract_strided_slice %184 {offsets = [0, 0], sizes = [8, 96], strides = [1, 1]} : vector<8x128xf32> to vector<8x96xf32>
    %189 = arith.negf %188 : vector<8x96xf32>
    %190 = math.exp %189 : vector<8x96xf32>
    %cst_65 = arith.constant 1.000000e+00 : f32
    %191 = vector.broadcast %cst_65 : f32 to vector<8x96xf32>
    %192 = arith.addf %191, %190 : vector<8x96xf32>
    %193 = arith.divf %191, %192 : vector<8x96xf32>
    %194 = vector.extract_strided_slice %184 {offsets = [0, 96], sizes = [8, 32], strides = [1, 1]} : vector<8x128xf32> to vector<8x32xf32>
    %195 = math.tanh %194 : vector<8x32xf32>
    %196 = vector.extract_strided_slice %193 {offsets = [0, 0], sizes = [8, 32], strides = [1, 1]} : vector<8x96xf32> to vector<8x32xf32>
    %197 = vector.extract_strided_slice %193 {offsets = [0, 32], sizes = [8, 32], strides = [1, 1]} : vector<8x96xf32> to vector<8x32xf32>
    %198 = vector.extract_strided_slice %193 {offsets = [0, 64], sizes = [8, 32], strides = [1, 1]} : vector<8x96xf32> to vector<8x32xf32>
    %199 = arith.mulf %197, %161 : vector<8x32xf32>
    %200 = arith.mulf %196, %195 : vector<8x32xf32>
    %201 = arith.addf %199, %200 : vector<8x32xf32>
    %202 = math.tanh %201 : vector<8x32xf32>
    %203 = arith.mulf %198, %202 : vector<8x32xf32>
    %204 = vector.extract_strided_slice %187 {offsets = [0, 0], sizes = [8, 96], strides = [1, 1]} : vector<8x128xf32> to vector<8x96xf32>
    %205 = arith.negf %204 : vector<8x96xf32>
    %206 = math.exp %205 : vector<8x96xf32>
    %cst_66 = arith.constant 1.000000e+00 : f32
    %207 = vector.broadcast %cst_66 : f32 to vector<8x96xf32>
    %208 = arith.addf %207, %206 : vector<8x96xf32>
    %209 = arith.divf %207, %208 : vector<8x96xf32>
    %210 = vector.extract_strided_slice %187 {offsets = [0, 96], sizes = [8, 32], strides = [1, 1]} : vector<8x128xf32> to vector<8x32xf32>
    %211 = math.tanh %210 : vector<8x32xf32>
    %212 = vector.extract_strided_slice %209 {offsets = [0, 0], sizes = [8, 32], strides = [1, 1]} : vector<8x96xf32> to vector<8x32xf32>
    %213 = vector.extract_strided_slice %209 {offsets = [0, 32], sizes = [8, 32], strides = [1, 1]} : vector<8x96xf32> to vector<8x32xf32>
    %214 = vector.extract_strided_slice %209 {offsets = [0, 64], sizes = [8, 32], strides = [1, 1]} : vector<8x96xf32> to vector<8x32xf32>
    %215 = arith.mulf %213, %177 : vector<8x32xf32>
    %216 = arith.mulf %212, %211 : vector<8x32xf32>
    %217 = arith.addf %215, %216 : vector<8x32xf32>
    %218 = math.tanh %217 : vector<8x32xf32>
    %219 = arith.mulf %214, %218 : vector<8x32xf32>
    %c32_67 = arith.constant 32 : index
    %c0_68 = arith.constant 0 : index
    %220 = vector.load %arg12[%c32_67, %c0_68] : memref<64x32xf32, #tpu.memory_space<vmem>>, vector<8x32xf32>
    tpu.vector_store %arg12[%c32_67, %c0_68], %203 {strides = array<i32>} : memref<64x32xf32, #tpu.memory_space<vmem>>, vector<8x32xf32>,
    %c24_69 = arith.constant 24 : index
    %c0_70 = arith.constant 0 : index
    %221 = vector.load %arg13[%c24_69, %c0_70] : memref<64x32xf32, #tpu.memory_space<vmem>>, vector<8x32xf32>
    tpu.vector_store %arg13[%c24_69, %c0_70], %219 {strides = array<i32>} : memref<64x32xf32, #tpu.memory_space<vmem>>, vector<8x32xf32>,
    %c40_71 = arith.constant 40 : index
    %c0_72 = arith.constant 0 : index
    %222 = vector.load %arg10[%c40_71, %c0_72] : memref<64x128xf32, #tpu.memory_space<vmem>>, vector<8x128xf32>
    %cst_73 = arith.constant dense<0.000000e+00> : vector<8x128xf32>
    %223 = tpu.matmul %203, %19, %cst_73 {dimension_numbers = #tpu.dot_dimension_numbers<[1], [0], [0], [1], [0, 0, 1, 1], [], []>} : vector<8x32xf32>, vector<32x128xf32>, vector<8x128xf32> -> vector<8x128xf32>
    %224 = arith.addf %222, %223 : vector<8x128xf32>
    %c16_74 = arith.constant 16 : index
    %c0_75 = arith.constant 0 : index
    %225 = vector.load %arg11[%c16_74, %c0_75] : memref<64x128xf32, #tpu.memory_space<vmem>>, vector<8x128xf32>
    %cst_76 = arith.constant dense<0.000000e+00> : vector<8x128xf32>
    %226 = tpu.matmul %219, %21, %cst_76 {dimension_numbers = #tpu.dot_dimension_numbers<[1], [0], [0], [1], [0, 0, 1, 1], [], []>} : vector<8x32xf32>, vector<32x128xf32>, vector<8x128xf32> -> vector<8x128xf32>
    %227 = arith.addf %225, %226 : vector<8x128xf32>
    %228 = vector.extract_strided_slice %224 {offsets = [0, 0], sizes = [8, 96], strides = [1, 1]} : vector<8x128xf32> to vector<8x96xf32>
    %229 = arith.negf %228 : vector<8x96xf32>
    %230 = math.exp %229 : vector<8x96xf32>
    %cst_77 = arith.constant 1.000000e+00 : f32
    %231 = vector.broadcast %cst_77 : f32 to vector<8x96xf32>
    %232 = arith.addf %231, %230 : vector<8x96xf32>
    %233 = arith.divf %231, %232 : vector<8x96xf32>
    %234 = vector.extract_strided_slice %224 {offsets = [0, 96], sizes = [8, 32], strides = [1, 1]} : vector<8x128xf32> to vector<8x32xf32>
    %235 = math.tanh %234 : vector<8x32xf32>
    %236 = vector.extract_strided_slice %233 {offsets = [0, 0], sizes = [8, 32], strides = [1, 1]} : vector<8x96xf32> to vector<8x32xf32>
    %237 = vector.extract_strided_slice %233 {offsets = [0, 32], sizes = [8, 32], strides = [1, 1]} : vector<8x96xf32> to vector<8x32xf32>
    %238 = vector.extract_strided_slice %233 {offsets = [0, 64], sizes = [8, 32], strides = [1, 1]} : vector<8x96xf32> to vector<8x32xf32>
    %239 = arith.mulf %237, %201 : vector<8x32xf32>
    %240 = arith.mulf %236, %235 : vector<8x32xf32>
    %241 = arith.addf %239, %240 : vector<8x32xf32>
    %242 = math.tanh %241 : vector<8x32xf32>
    %243 = arith.mulf %238, %242 : vector<8x32xf32>
    %244 = vector.extract_strided_slice %227 {offsets = [0, 0], sizes = [8, 96], strides = [1, 1]} : vector<8x128xf32> to vector<8x96xf32>
    %245 = arith.negf %244 : vector<8x96xf32>
    %246 = math.exp %245 : vector<8x96xf32>
    %cst_78 = arith.constant 1.000000e+00 : f32
    %247 = vector.broadcast %cst_78 : f32 to vector<8x96xf32>
    %248 = arith.addf %247, %246 : vector<8x96xf32>
    %249 = arith.divf %247, %248 : vector<8x96xf32>
    %250 = vector.extract_strided_slice %227 {offsets = [0, 96], sizes = [8, 32], strides = [1, 1]} : vector<8x128xf32> to vector<8x32xf32>
    %251 = math.tanh %250 : vector<8x32xf32>
    %252 = vector.extract_strided_slice %249 {offsets = [0, 0], sizes = [8, 32], strides = [1, 1]} : vector<8x96xf32> to vector<8x32xf32>
    %253 = vector.extract_strided_slice %249 {offsets = [0, 32], sizes = [8, 32], strides = [1, 1]} : vector<8x96xf32> to vector<8x32xf32>
    %254 = vector.extract_strided_slice %249 {offsets = [0, 64], sizes = [8, 32], strides = [1, 1]} : vector<8x96xf32> to vector<8x32xf32>
    %255 = arith.mulf %253, %217 : vector<8x32xf32>
    %256 = arith.mulf %252, %251 : vector<8x32xf32>
    %257 = arith.addf %255, %256 : vector<8x32xf32>
    %258 = math.tanh %257 : vector<8x32xf32>
    %259 = arith.mulf %254, %258 : vector<8x32xf32>
    %c40_79 = arith.constant 40 : index
    %c0_80 = arith.constant 0 : index
    %260 = vector.load %arg12[%c40_79, %c0_80] : memref<64x32xf32, #tpu.memory_space<vmem>>, vector<8x32xf32>
    tpu.vector_store %arg12[%c40_79, %c0_80], %243 {strides = array<i32>} : memref<64x32xf32, #tpu.memory_space<vmem>>, vector<8x32xf32>,
    %c16_81 = arith.constant 16 : index
    %c0_82 = arith.constant 0 : index
    %261 = vector.load %arg13[%c16_81, %c0_82] : memref<64x32xf32, #tpu.memory_space<vmem>>, vector<8x32xf32>
    tpu.vector_store %arg13[%c16_81, %c0_82], %259 {strides = array<i32>} : memref<64x32xf32, #tpu.memory_space<vmem>>, vector<8x32xf32>,
    %c48_83 = arith.constant 48 : index
    %c0_84 = arith.constant 0 : index
    %262 = vector.load %arg10[%c48_83, %c0_84] : memref<64x128xf32, #tpu.memory_space<vmem>>, vector<8x128xf32>
    %cst_85 = arith.constant dense<0.000000e+00> : vector<8x128xf32>
    %263 = tpu.matmul %243, %19, %cst_85 {dimension_numbers = #tpu.dot_dimension_numbers<[1], [0], [0], [1], [0, 0, 1, 1], [], []>} : vector<8x32xf32>, vector<32x128xf32>, vector<8x128xf32> -> vector<8x128xf32>
    %264 = arith.addf %262, %263 : vector<8x128xf32>
    %c8_86 = arith.constant 8 : index
    %c0_87 = arith.constant 0 : index
    %265 = vector.load %arg11[%c8_86, %c0_87] : memref<64x128xf32, #tpu.memory_space<vmem>>, vector<8x128xf32>
    %cst_88 = arith.constant dense<0.000000e+00> : vector<8x128xf32>
    %266 = tpu.matmul %259, %21, %cst_88 {dimension_numbers = #tpu.dot_dimension_numbers<[1], [0], [0], [1], [0, 0, 1, 1], [], []>} : vector<8x32xf32>, vector<32x128xf32>, vector<8x128xf32> -> vector<8x128xf32>
    %267 = arith.addf %265, %266 : vector<8x128xf32>
    %268 = vector.extract_strided_slice %264 {offsets = [0, 0], sizes = [8, 96], strides = [1, 1]} : vector<8x128xf32> to vector<8x96xf32>
    %269 = arith.negf %268 : vector<8x96xf32>
    %270 = math.exp %269 : vector<8x96xf32>
    %cst_89 = arith.constant 1.000000e+00 : f32
    %271 = vector.broadcast %cst_89 : f32 to vector<8x96xf32>
    %272 = arith.addf %271, %270 : vector<8x96xf32>
    %273 = arith.divf %271, %272 : vector<8x96xf32>
    %274 = vector.extract_strided_slice %264 {offsets = [0, 96], sizes = [8, 32], strides = [1, 1]} : vector<8x128xf32> to vector<8x32xf32>
    %275 = math.tanh %274 : vector<8x32xf32>
    %276 = vector.extract_strided_slice %273 {offsets = [0, 0], sizes = [8, 32], strides = [1, 1]} : vector<8x96xf32> to vector<8x32xf32>
    %277 = vector.extract_strided_slice %273 {offsets = [0, 32], sizes = [8, 32], strides = [1, 1]} : vector<8x96xf32> to vector<8x32xf32>
    %278 = vector.extract_strided_slice %273 {offsets = [0, 64], sizes = [8, 32], strides = [1, 1]} : vector<8x96xf32> to vector<8x32xf32>
    %279 = arith.mulf %277, %241 : vector<8x32xf32>
    %280 = arith.mulf %276, %275 : vector<8x32xf32>
    %281 = arith.addf %279, %280 : vector<8x32xf32>
    %282 = math.tanh %281 : vector<8x32xf32>
    %283 = arith.mulf %278, %282 : vector<8x32xf32>
    %284 = vector.extract_strided_slice %267 {offsets = [0, 0], sizes = [8, 96], strides = [1, 1]} : vector<8x128xf32> to vector<8x96xf32>
    %285 = arith.negf %284 : vector<8x96xf32>
    %286 = math.exp %285 : vector<8x96xf32>
    %cst_90 = arith.constant 1.000000e+00 : f32
    %287 = vector.broadcast %cst_90 : f32 to vector<8x96xf32>
    %288 = arith.addf %287, %286 : vector<8x96xf32>
    %289 = arith.divf %287, %288 : vector<8x96xf32>
    %290 = vector.extract_strided_slice %267 {offsets = [0, 96], sizes = [8, 32], strides = [1, 1]} : vector<8x128xf32> to vector<8x32xf32>
    %291 = math.tanh %290 : vector<8x32xf32>
    %292 = vector.extract_strided_slice %289 {offsets = [0, 0], sizes = [8, 32], strides = [1, 1]} : vector<8x96xf32> to vector<8x32xf32>
    %293 = vector.extract_strided_slice %289 {offsets = [0, 32], sizes = [8, 32], strides = [1, 1]} : vector<8x96xf32> to vector<8x32xf32>
    %294 = vector.extract_strided_slice %289 {offsets = [0, 64], sizes = [8, 32], strides = [1, 1]} : vector<8x96xf32> to vector<8x32xf32>
    %295 = arith.mulf %293, %257 : vector<8x32xf32>
    %296 = arith.mulf %292, %291 : vector<8x32xf32>
    %297 = arith.addf %295, %296 : vector<8x32xf32>
    %298 = math.tanh %297 : vector<8x32xf32>
    %299 = arith.mulf %294, %298 : vector<8x32xf32>
    %c48_91 = arith.constant 48 : index
    %c0_92 = arith.constant 0 : index
    %300 = vector.load %arg12[%c48_91, %c0_92] : memref<64x32xf32, #tpu.memory_space<vmem>>, vector<8x32xf32>
    tpu.vector_store %arg12[%c48_91, %c0_92], %283 {strides = array<i32>} : memref<64x32xf32, #tpu.memory_space<vmem>>, vector<8x32xf32>,
    %c8_93 = arith.constant 8 : index
    %c0_94 = arith.constant 0 : index
    %301 = vector.load %arg13[%c8_93, %c0_94] : memref<64x32xf32, #tpu.memory_space<vmem>>, vector<8x32xf32>
    tpu.vector_store %arg13[%c8_93, %c0_94], %299 {strides = array<i32>} : memref<64x32xf32, #tpu.memory_space<vmem>>, vector<8x32xf32>,
    %c56_95 = arith.constant 56 : index
    %c0_96 = arith.constant 0 : index
    %302 = vector.load %arg10[%c56_95, %c0_96] : memref<64x128xf32, #tpu.memory_space<vmem>>, vector<8x128xf32>
    %cst_97 = arith.constant dense<0.000000e+00> : vector<8x128xf32>
    %303 = tpu.matmul %283, %19, %cst_97 {dimension_numbers = #tpu.dot_dimension_numbers<[1], [0], [0], [1], [0, 0, 1, 1], [], []>} : vector<8x32xf32>, vector<32x128xf32>, vector<8x128xf32> -> vector<8x128xf32>
    %304 = arith.addf %302, %303 : vector<8x128xf32>
    %c0_98 = arith.constant 0 : index
    %c0_99 = arith.constant 0 : index
    %305 = vector.load %arg11[%c0_98, %c0_99] : memref<64x128xf32, #tpu.memory_space<vmem>>, vector<8x128xf32>
    %cst_100 = arith.constant dense<0.000000e+00> : vector<8x128xf32>
    %306 = tpu.matmul %299, %21, %cst_100 {dimension_numbers = #tpu.dot_dimension_numbers<[1], [0], [0], [1], [0, 0, 1, 1], [], []>} : vector<8x32xf32>, vector<32x128xf32>, vector<8x128xf32> -> vector<8x128xf32>
    %307 = arith.addf %305, %306 : vector<8x128xf32>
    %308 = vector.extract_strided_slice %304 {offsets = [0, 0], sizes = [8, 96], strides = [1, 1]} : vector<8x128xf32> to vector<8x96xf32>
    %309 = arith.negf %308 : vector<8x96xf32>
    %310 = math.exp %309 : vector<8x96xf32>
    %cst_101 = arith.constant 1.000000e+00 : f32
    %311 = vector.broadcast %cst_101 : f32 to vector<8x96xf32>
    %312 = arith.addf %311, %310 : vector<8x96xf32>
    %313 = arith.divf %311, %312 : vector<8x96xf32>
    %314 = vector.extract_strided_slice %304 {offsets = [0, 96], sizes = [8, 32], strides = [1, 1]} : vector<8x128xf32> to vector<8x32xf32>
    %315 = math.tanh %314 : vector<8x32xf32>
    %316 = vector.extract_strided_slice %313 {offsets = [0, 0], sizes = [8, 32], strides = [1, 1]} : vector<8x96xf32> to vector<8x32xf32>
    %317 = vector.extract_strided_slice %313 {offsets = [0, 32], sizes = [8, 32], strides = [1, 1]} : vector<8x96xf32> to vector<8x32xf32>
    %318 = vector.extract_strided_slice %313 {offsets = [0, 64], sizes = [8, 32], strides = [1, 1]} : vector<8x96xf32> to vector<8x32xf32>
    %319 = arith.mulf %317, %281 : vector<8x32xf32>
    %320 = arith.mulf %316, %315 : vector<8x32xf32>
    %321 = arith.addf %319, %320 : vector<8x32xf32>
    %322 = math.tanh %321 : vector<8x32xf32>
    %323 = arith.mulf %318, %322 : vector<8x32xf32>
    %324 = vector.extract_strided_slice %307 {offsets = [0, 0], sizes = [8, 96], strides = [1, 1]} : vector<8x128xf32> to vector<8x96xf32>
    %325 = arith.negf %324 : vector<8x96xf32>
    %326 = math.exp %325 : vector<8x96xf32>
    %cst_102 = arith.constant 1.000000e+00 : f32
    %327 = vector.broadcast %cst_102 : f32 to vector<8x96xf32>
    %328 = arith.addf %327, %326 : vector<8x96xf32>
    %329 = arith.divf %327, %328 : vector<8x96xf32>
    %330 = vector.extract_strided_slice %307 {offsets = [0, 96], sizes = [8, 32], strides = [1, 1]} : vector<8x128xf32> to vector<8x32xf32>
    %331 = math.tanh %330 : vector<8x32xf32>
    %332 = vector.extract_strided_slice %329 {offsets = [0, 0], sizes = [8, 32], strides = [1, 1]} : vector<8x96xf32> to vector<8x32xf32>
    %333 = vector.extract_strided_slice %329 {offsets = [0, 32], sizes = [8, 32], strides = [1, 1]} : vector<8x96xf32> to vector<8x32xf32>
    %334 = vector.extract_strided_slice %329 {offsets = [0, 64], sizes = [8, 32], strides = [1, 1]} : vector<8x96xf32> to vector<8x32xf32>
    %335 = arith.mulf %333, %297 : vector<8x32xf32>
    %336 = arith.mulf %332, %331 : vector<8x32xf32>
    %337 = arith.addf %335, %336 : vector<8x32xf32>
    %338 = math.tanh %337 : vector<8x32xf32>
    %339 = arith.mulf %334, %338 : vector<8x32xf32>
    %c56_103 = arith.constant 56 : index
    %c0_104 = arith.constant 0 : index
    %340 = vector.load %arg12[%c56_103, %c0_104] : memref<64x32xf32, #tpu.memory_space<vmem>>, vector<8x32xf32>
    tpu.vector_store %arg12[%c56_103, %c0_104], %323 {strides = array<i32>} : memref<64x32xf32, #tpu.memory_space<vmem>>, vector<8x32xf32>,
    %c0_105 = arith.constant 0 : index
    %c0_106 = arith.constant 0 : index
    %341 = vector.load %arg13[%c0_105, %c0_106] : memref<64x32xf32, #tpu.memory_space<vmem>>, vector<8x32xf32>
    tpu.vector_store %arg13[%c0_105, %c0_106], %339 {strides = array<i32>} : memref<64x32xf32, #tpu.memory_space<vmem>>, vector<8x32xf32>,
    %c0_107 = arith.constant 0 : index
    %c0_108 = arith.constant 0 : index
    %342 = vector.load %arg12[%c0_107, %c0_108] : memref<64x32xf32, #tpu.memory_space<vmem>>, vector<64x32xf32>
    %c0_109 = arith.constant 0 : index
    %c0_110 = arith.constant 0 : index
    %343 = vector.load %arg13[%c0_109, %c0_110] : memref<64x32xf32, #tpu.memory_space<vmem>>, vector<64x32xf32>
    %344 = tpu.concatenate %342, %343 in 1 : vector<64x32xf32>, vector<64x32xf32> -> vector<64x64xf32>
    %c0_111 = arith.constant 0 : index
    %c0_112 = arith.constant 0 : index
    %c0_113 = arith.constant 0 : index
    %345 = vector.load %arg4[%c0_111, %c0_112, %c0_113] : memref<2x64x128xf32, #tpu.memory_space<vmem>>, vector<1x64x128xf32>
    %346 = vector.shape_cast %345 : vector<1x64x128xf32> to vector<64x128xf32>
    %cst_114 = arith.constant dense<0.000000e+00> : vector<64x128xf32>
    %347 = tpu.matmul %344, %346, %cst_114 {dimension_numbers = #tpu.dot_dimension_numbers<[1], [0], [0], [1], [0, 0, 1, 1], [], []>} : vector<64x64xf32>, vector<64x128xf32>, vector<64x128xf32> -> vector<64x128xf32>
    %c0_115 = arith.constant 0 : index
    %c0_116 = arith.constant 0 : index
    %348 = vector.load %arg5[%c0_115, %c0_116] : memref<2x128xf32, #tpu.memory_space<vmem>>, vector<1x128xf32>
    %349 = vector.broadcast %348 : vector<1x128xf32> to vector<64x128xf32>
    %350 = arith.addf %347, %349 : vector<64x128xf32>
    %c0_117 = arith.constant 0 : index
    %c0_118 = arith.constant 0 : index
    %351 = vector.load %arg10[%c0_117, %c0_118] : memref<64x128xf32, #tpu.memory_space<vmem>>, vector<64x128xf32>
    tpu.vector_store %arg10[%c0_117, %c0_118], %350 {strides = array<i32>} : memref<64x128xf32, #tpu.memory_space<vmem>>, vector<64x128xf32>,
    %c1_119 = arith.constant 1 : index
    %c0_120 = arith.constant 0 : index
    %c0_121 = arith.constant 0 : index
    %352 = vector.load %arg4[%c1_119, %c0_120, %c0_121] : memref<2x64x128xf32, #tpu.memory_space<vmem>>, vector<1x64x128xf32>
    %353 = vector.shape_cast %352 : vector<1x64x128xf32> to vector<64x128xf32>
    %cst_122 = arith.constant dense<0.000000e+00> : vector<64x128xf32>
    %354 = tpu.matmul %344, %353, %cst_122 {dimension_numbers = #tpu.dot_dimension_numbers<[1], [0], [0], [1], [0, 0, 1, 1], [], []>} : vector<64x64xf32>, vector<64x128xf32>, vector<64x128xf32> -> vector<64x128xf32>
    %c1_123 = arith.constant 1 : index
    %c0_124 = arith.constant 0 : index
    %355 = vector.load %arg5[%c1_123, %c0_124] : memref<2x128xf32, #tpu.memory_space<vmem>>, vector<1x128xf32>
    %356 = vector.broadcast %355 : vector<1x128xf32> to vector<64x128xf32>
    %357 = arith.addf %354, %356 : vector<64x128xf32>
    %c0_125 = arith.constant 0 : index
    %c0_126 = arith.constant 0 : index
    %358 = vector.load %arg11[%c0_125, %c0_126] : memref<64x128xf32, #tpu.memory_space<vmem>>, vector<64x128xf32>
    tpu.vector_store %arg11[%c0_125, %c0_126], %357 {strides = array<i32>} : memref<64x128xf32, #tpu.memory_space<vmem>>, vector<64x128xf32>,
    %c0_127 = arith.constant 0 : index
    %c0_128 = arith.constant 0 : index
    %c0_129 = arith.constant 0 : index
    %359 = vector.load %arg6[%c0_127, %c0_128, %c0_129] : memref<2x32x128xf32, #tpu.memory_space<vmem>>, vector<1x32x128xf32>
    %360 = vector.shape_cast %359 : vector<1x32x128xf32> to vector<32x128xf32>
    %c1_130 = arith.constant 1 : index
    %c0_131 = arith.constant 0 : index
    %c0_132 = arith.constant 0 : index
    %361 = vector.load %arg6[%c1_130, %c0_131, %c0_132] : memref<2x32x128xf32, #tpu.memory_space<vmem>>, vector<1x32x128xf32>
    %362 = vector.shape_cast %361 : vector<1x32x128xf32> to vector<32x128xf32>
    %c0_133 = arith.constant 0 : index
    %c0_134 = arith.constant 0 : index
    %363 = vector.load %arg10[%c0_133, %c0_134] : memref<64x128xf32, #tpu.memory_space<vmem>>, vector<8x128xf32>
    %cst_135 = arith.constant dense<0.000000e+00> : vector<8x128xf32>
    %364 = tpu.matmul %17, %360, %cst_135 {dimension_numbers = #tpu.dot_dimension_numbers<[1], [0], [0], [1], [0, 0, 1, 1], [], []>} : vector<8x32xf32>, vector<32x128xf32>, vector<8x128xf32> -> vector<8x128xf32>
    %365 = arith.addf %363, %364 : vector<8x128xf32>
    %c56_136 = arith.constant 56 : index
    %c0_137 = arith.constant 0 : index
    %366 = vector.load %arg11[%c56_136, %c0_137] : memref<64x128xf32, #tpu.memory_space<vmem>>, vector<8x128xf32>
    %cst_138 = arith.constant dense<0.000000e+00> : vector<8x128xf32>
    %367 = tpu.matmul %17, %362, %cst_138 {dimension_numbers = #tpu.dot_dimension_numbers<[1], [0], [0], [1], [0, 0, 1, 1], [], []>} : vector<8x32xf32>, vector<32x128xf32>, vector<8x128xf32> -> vector<8x128xf32>
    %368 = arith.addf %366, %367 : vector<8x128xf32>
    %369 = vector.extract_strided_slice %365 {offsets = [0, 0], sizes = [8, 96], strides = [1, 1]} : vector<8x128xf32> to vector<8x96xf32>
    %370 = arith.negf %369 : vector<8x96xf32>
    %371 = math.exp %370 : vector<8x96xf32>
    %cst_139 = arith.constant 1.000000e+00 : f32
    %372 = vector.broadcast %cst_139 : f32 to vector<8x96xf32>
    %373 = arith.addf %372, %371 : vector<8x96xf32>
    %374 = arith.divf %372, %373 : vector<8x96xf32>
    %375 = vector.extract_strided_slice %365 {offsets = [0, 96], sizes = [8, 32], strides = [1, 1]} : vector<8x128xf32> to vector<8x32xf32>
    %376 = math.tanh %375 : vector<8x32xf32>
    %377 = vector.extract_strided_slice %374 {offsets = [0, 0], sizes = [8, 32], strides = [1, 1]} : vector<8x96xf32> to vector<8x32xf32>
    %378 = vector.extract_strided_slice %374 {offsets = [0, 32], sizes = [8, 32], strides = [1, 1]} : vector<8x96xf32> to vector<8x32xf32>
    %379 = vector.extract_strided_slice %374 {offsets = [0, 64], sizes = [8, 32], strides = [1, 1]} : vector<8x96xf32> to vector<8x32xf32>
    %380 = arith.mulf %378, %17 : vector<8x32xf32>
    %381 = arith.mulf %377, %376 : vector<8x32xf32>
    %382 = arith.addf %380, %381 : vector<8x32xf32>
    %383 = math.tanh %382 : vector<8x32xf32>
    %384 = arith.mulf %379, %383 : vector<8x32xf32>
    %385 = vector.extract_strided_slice %368 {offsets = [0, 0], sizes = [8, 96], strides = [1, 1]} : vector<8x128xf32> to vector<8x96xf32>
    %386 = arith.negf %385 : vector<8x96xf32>
    %387 = math.exp %386 : vector<8x96xf32>
    %cst_140 = arith.constant 1.000000e+00 : f32
    %388 = vector.broadcast %cst_140 : f32 to vector<8x96xf32>
    %389 = arith.addf %388, %387 : vector<8x96xf32>
    %390 = arith.divf %388, %389 : vector<8x96xf32>
    %391 = vector.extract_strided_slice %368 {offsets = [0, 96], sizes = [8, 32], strides = [1, 1]} : vector<8x128xf32> to vector<8x32xf32>
    %392 = math.tanh %391 : vector<8x32xf32>
    %393 = vector.extract_strided_slice %390 {offsets = [0, 0], sizes = [8, 32], strides = [1, 1]} : vector<8x96xf32> to vector<8x32xf32>
    %394 = vector.extract_strided_slice %390 {offsets = [0, 32], sizes = [8, 32], strides = [1, 1]} : vector<8x96xf32> to vector<8x32xf32>
    %395 = vector.extract_strided_slice %390 {offsets = [0, 64], sizes = [8, 32], strides = [1, 1]} : vector<8x96xf32> to vector<8x32xf32>
    %396 = arith.mulf %394, %17 : vector<8x32xf32>
    %397 = arith.mulf %393, %392 : vector<8x32xf32>
    %398 = arith.addf %396, %397 : vector<8x32xf32>
    %399 = math.tanh %398 : vector<8x32xf32>
    %400 = arith.mulf %395, %399 : vector<8x32xf32>
    %c8_141 = arith.constant 8 : index
    %c0_142 = arith.constant 0 : index
    %401 = vector.load %arg10[%c8_141, %c0_142] : memref<64x128xf32, #tpu.memory_space<vmem>>, vector<8x128xf32>
    %cst_143 = arith.constant dense<0.000000e+00> : vector<8x128xf32>
    %402 = tpu.matmul %384, %360, %cst_143 {dimension_numbers = #tpu.dot_dimension_numbers<[1], [0], [0], [1], [0, 0, 1, 1], [], []>} : vector<8x32xf32>, vector<32x128xf32>, vector<8x128xf32> -> vector<8x128xf32>
    %403 = arith.addf %401, %402 : vector<8x128xf32>
    %c48_144 = arith.constant 48 : index
    %c0_145 = arith.constant 0 : index
    %404 = vector.load %arg11[%c48_144, %c0_145] : memref<64x128xf32, #tpu.memory_space<vmem>>, vector<8x128xf32>
    %cst_146 = arith.constant dense<0.000000e+00> : vector<8x128xf32>
    %405 = tpu.matmul %400, %362, %cst_146 {dimension_numbers = #tpu.dot_dimension_numbers<[1], [0], [0], [1], [0, 0, 1, 1], [], []>} : vector<8x32xf32>, vector<32x128xf32>, vector<8x128xf32> -> vector<8x128xf32>
    %406 = arith.addf %404, %405 : vector<8x128xf32>
    %407 = vector.extract_strided_slice %403 {offsets = [0, 0], sizes = [8, 96], strides = [1, 1]} : vector<8x128xf32> to vector<8x96xf32>
    %408 = arith.negf %407 : vector<8x96xf32>
    %409 = math.exp %408 : vector<8x96xf32>
    %cst_147 = arith.constant 1.000000e+00 : f32
    %410 = vector.broadcast %cst_147 : f32 to vector<8x96xf32>
    %411 = arith.addf %410, %409 : vector<8x96xf32>
    %412 = arith.divf %410, %411 : vector<8x96xf32>
    %413 = vector.extract_strided_slice %403 {offsets = [0, 96], sizes = [8, 32], strides = [1, 1]} : vector<8x128xf32> to vector<8x32xf32>
    %414 = math.tanh %413 : vector<8x32xf32>
    %415 = vector.extract_strided_slice %412 {offsets = [0, 0], sizes = [8, 32], strides = [1, 1]} : vector<8x96xf32> to vector<8x32xf32>
    %416 = vector.extract_strided_slice %412 {offsets = [0, 32], sizes = [8, 32], strides = [1, 1]} : vector<8x96xf32> to vector<8x32xf32>
    %417 = vector.extract_strided_slice %412 {offsets = [0, 64], sizes = [8, 32], strides = [1, 1]} : vector<8x96xf32> to vector<8x32xf32>
    %418 = arith.mulf %416, %382 : vector<8x32xf32>
    %419 = arith.mulf %415, %414 : vector<8x32xf32>
    %420 = arith.addf %418, %419 : vector<8x32xf32>
    %421 = math.tanh %420 : vector<8x32xf32>
    %422 = arith.mulf %417, %421 : vector<8x32xf32>
    %423 = vector.extract_strided_slice %406 {offsets = [0, 0], sizes = [8, 96], strides = [1, 1]} : vector<8x128xf32> to vector<8x96xf32>
    %424 = arith.negf %423 : vector<8x96xf32>
    %425 = math.exp %424 : vector<8x96xf32>
    %cst_148 = arith.constant 1.000000e+00 : f32
    %426 = vector.broadcast %cst_148 : f32 to vector<8x96xf32>
    %427 = arith.addf %426, %425 : vector<8x96xf32>
    %428 = arith.divf %426, %427 : vector<8x96xf32>
    %429 = vector.extract_strided_slice %406 {offsets = [0, 96], sizes = [8, 32], strides = [1, 1]} : vector<8x128xf32> to vector<8x32xf32>
    %430 = math.tanh %429 : vector<8x32xf32>
    %431 = vector.extract_strided_slice %428 {offsets = [0, 0], sizes = [8, 32], strides = [1, 1]} : vector<8x96xf32> to vector<8x32xf32>
    %432 = vector.extract_strided_slice %428 {offsets = [0, 32], sizes = [8, 32], strides = [1, 1]} : vector<8x96xf32> to vector<8x32xf32>
    %433 = vector.extract_strided_slice %428 {offsets = [0, 64], sizes = [8, 32], strides = [1, 1]} : vector<8x96xf32> to vector<8x32xf32>
    %434 = arith.mulf %432, %398 : vector<8x32xf32>
    %435 = arith.mulf %431, %430 : vector<8x32xf32>
    %436 = arith.addf %434, %435 : vector<8x32xf32>
    %437 = math.tanh %436 : vector<8x32xf32>
    %438 = arith.mulf %433, %437 : vector<8x32xf32>
    %c16_149 = arith.constant 16 : index
    %c0_150 = arith.constant 0 : index
    %439 = vector.load %arg10[%c16_149, %c0_150] : memref<64x128xf32, #tpu.memory_space<vmem>>, vector<8x128xf32>
    %cst_151 = arith.constant dense<0.000000e+00> : vector<8x128xf32>
    %440 = tpu.matmul %422, %360, %cst_151 {dimension_numbers = #tpu.dot_dimension_numbers<[1], [0], [0], [1], [0, 0, 1, 1], [], []>} : vector<8x32xf32>, vector<32x128xf32>, vector<8x128xf32> -> vector<8x128xf32>
    %441 = arith.addf %439, %440 : vector<8x128xf32>
    %c40_152 = arith.constant 40 : index
    %c0_153 = arith.constant 0 : index
    %442 = vector.load %arg11[%c40_152, %c0_153] : memref<64x128xf32, #tpu.memory_space<vmem>>, vector<8x128xf32>
    %cst_154 = arith.constant dense<0.000000e+00> : vector<8x128xf32>
    %443 = tpu.matmul %438, %362, %cst_154 {dimension_numbers = #tpu.dot_dimension_numbers<[1], [0], [0], [1], [0, 0, 1, 1], [], []>} : vector<8x32xf32>, vector<32x128xf32>, vector<8x128xf32> -> vector<8x128xf32>
    %444 = arith.addf %442, %443 : vector<8x128xf32>
    %445 = vector.extract_strided_slice %441 {offsets = [0, 0], sizes = [8, 96], strides = [1, 1]} : vector<8x128xf32> to vector<8x96xf32>
    %446 = arith.negf %445 : vector<8x96xf32>
    %447 = math.exp %446 : vector<8x96xf32>
    %cst_155 = arith.constant 1.000000e+00 : f32
    %448 = vector.broadcast %cst_155 : f32 to vector<8x96xf32>
    %449 = arith.addf %448, %447 : vector<8x96xf32>
    %450 = arith.divf %448, %449 : vector<8x96xf32>
    %451 = vector.extract_strided_slice %441 {offsets = [0, 96], sizes = [8, 32], strides = [1, 1]} : vector<8x128xf32> to vector<8x32xf32>
    %452 = math.tanh %451 : vector<8x32xf32>
    %453 = vector.extract_strided_slice %450 {offsets = [0, 0], sizes = [8, 32], strides = [1, 1]} : vector<8x96xf32> to vector<8x32xf32>
    %454 = vector.extract_strided_slice %450 {offsets = [0, 32], sizes = [8, 32], strides = [1, 1]} : vector<8x96xf32> to vector<8x32xf32>
    %455 = vector.extract_strided_slice %450 {offsets = [0, 64], sizes = [8, 32], strides = [1, 1]} : vector<8x96xf32> to vector<8x32xf32>
    %456 = arith.mulf %454, %420 : vector<8x32xf32>
    %457 = arith.mulf %453, %452 : vector<8x32xf32>
    %458 = arith.addf %456, %457 : vector<8x32xf32>
    %459 = math.tanh %458 : vector<8x32xf32>
    %460 = arith.mulf %455, %459 : vector<8x32xf32>
    %461 = vector.extract_strided_slice %444 {offsets = [0, 0], sizes = [8, 96], strides = [1, 1]} : vector<8x128xf32> to vector<8x96xf32>
    %462 = arith.negf %461 : vector<8x96xf32>
    %463 = math.exp %462 : vector<8x96xf32>
    %cst_156 = arith.constant 1.000000e+00 : f32
    %464 = vector.broadcast %cst_156 : f32 to vector<8x96xf32>
    %465 = arith.addf %464, %463 : vector<8x96xf32>
    %466 = arith.divf %464, %465 : vector<8x96xf32>
    %467 = vector.extract_strided_slice %444 {offsets = [0, 96], sizes = [8, 32], strides = [1, 1]} : vector<8x128xf32> to vector<8x32xf32>
    %468 = math.tanh %467 : vector<8x32xf32>
    %469 = vector.extract_strided_slice %466 {offsets = [0, 0], sizes = [8, 32], strides = [1, 1]} : vector<8x96xf32> to vector<8x32xf32>
    %470 = vector.extract_strided_slice %466 {offsets = [0, 32], sizes = [8, 32], strides = [1, 1]} : vector<8x96xf32> to vector<8x32xf32>
    %471 = vector.extract_strided_slice %466 {offsets = [0, 64], sizes = [8, 32], strides = [1, 1]} : vector<8x96xf32> to vector<8x32xf32>
    %472 = arith.mulf %470, %436 : vector<8x32xf32>
    %473 = arith.mulf %469, %468 : vector<8x32xf32>
    %474 = arith.addf %472, %473 : vector<8x32xf32>
    %475 = math.tanh %474 : vector<8x32xf32>
    %476 = arith.mulf %471, %475 : vector<8x32xf32>
    %c24_157 = arith.constant 24 : index
    %c0_158 = arith.constant 0 : index
    %477 = vector.load %arg10[%c24_157, %c0_158] : memref<64x128xf32, #tpu.memory_space<vmem>>, vector<8x128xf32>
    %cst_159 = arith.constant dense<0.000000e+00> : vector<8x128xf32>
    %478 = tpu.matmul %460, %360, %cst_159 {dimension_numbers = #tpu.dot_dimension_numbers<[1], [0], [0], [1], [0, 0, 1, 1], [], []>} : vector<8x32xf32>, vector<32x128xf32>, vector<8x128xf32> -> vector<8x128xf32>
    %479 = arith.addf %477, %478 : vector<8x128xf32>
    %c32_160 = arith.constant 32 : index
    %c0_161 = arith.constant 0 : index
    %480 = vector.load %arg11[%c32_160, %c0_161] : memref<64x128xf32, #tpu.memory_space<vmem>>, vector<8x128xf32>
    %cst_162 = arith.constant dense<0.000000e+00> : vector<8x128xf32>
    %481 = tpu.matmul %476, %362, %cst_162 {dimension_numbers = #tpu.dot_dimension_numbers<[1], [0], [0], [1], [0, 0, 1, 1], [], []>} : vector<8x32xf32>, vector<32x128xf32>, vector<8x128xf32> -> vector<8x128xf32>
    %482 = arith.addf %480, %481 : vector<8x128xf32>
    %483 = vector.extract_strided_slice %479 {offsets = [0, 0], sizes = [8, 96], strides = [1, 1]} : vector<8x128xf32> to vector<8x96xf32>
    %484 = arith.negf %483 : vector<8x96xf32>
    %485 = math.exp %484 : vector<8x96xf32>
    %cst_163 = arith.constant 1.000000e+00 : f32
    %486 = vector.broadcast %cst_163 : f32 to vector<8x96xf32>
    %487 = arith.addf %486, %485 : vector<8x96xf32>
    %488 = arith.divf %486, %487 : vector<8x96xf32>
    %489 = vector.extract_strided_slice %479 {offsets = [0, 96], sizes = [8, 32], strides = [1, 1]} : vector<8x128xf32> to vector<8x32xf32>
    %490 = math.tanh %489 : vector<8x32xf32>
    %491 = vector.extract_strided_slice %488 {offsets = [0, 0], sizes = [8, 32], strides = [1, 1]} : vector<8x96xf32> to vector<8x32xf32>
    %492 = vector.extract_strided_slice %488 {offsets = [0, 32], sizes = [8, 32], strides = [1, 1]} : vector<8x96xf32> to vector<8x32xf32>
    %493 = vector.extract_strided_slice %488 {offsets = [0, 64], sizes = [8, 32], strides = [1, 1]} : vector<8x96xf32> to vector<8x32xf32>
    %494 = arith.mulf %492, %458 : vector<8x32xf32>
    %495 = arith.mulf %491, %490 : vector<8x32xf32>
    %496 = arith.addf %494, %495 : vector<8x32xf32>
    %497 = math.tanh %496 : vector<8x32xf32>
    %498 = arith.mulf %493, %497 : vector<8x32xf32>
    %499 = vector.extract_strided_slice %482 {offsets = [0, 0], sizes = [8, 96], strides = [1, 1]} : vector<8x128xf32> to vector<8x96xf32>
    %500 = arith.negf %499 : vector<8x96xf32>
    %501 = math.exp %500 : vector<8x96xf32>
    %cst_164 = arith.constant 1.000000e+00 : f32
    %502 = vector.broadcast %cst_164 : f32 to vector<8x96xf32>
    %503 = arith.addf %502, %501 : vector<8x96xf32>
    %504 = arith.divf %502, %503 : vector<8x96xf32>
    %505 = vector.extract_strided_slice %482 {offsets = [0, 96], sizes = [8, 32], strides = [1, 1]} : vector<8x128xf32> to vector<8x32xf32>
    %506 = math.tanh %505 : vector<8x32xf32>
    %507 = vector.extract_strided_slice %504 {offsets = [0, 0], sizes = [8, 32], strides = [1, 1]} : vector<8x96xf32> to vector<8x32xf32>
    %508 = vector.extract_strided_slice %504 {offsets = [0, 32], sizes = [8, 32], strides = [1, 1]} : vector<8x96xf32> to vector<8x32xf32>
    %509 = vector.extract_strided_slice %504 {offsets = [0, 64], sizes = [8, 32], strides = [1, 1]} : vector<8x96xf32> to vector<8x32xf32>
    %510 = arith.mulf %508, %474 : vector<8x32xf32>
    %511 = arith.mulf %507, %506 : vector<8x32xf32>
    %512 = arith.addf %510, %511 : vector<8x32xf32>
    %513 = math.tanh %512 : vector<8x32xf32>
    %514 = arith.mulf %509, %513 : vector<8x32xf32>
    %c32_165 = arith.constant 32 : index
    %c0_166 = arith.constant 0 : index
    %515 = vector.load %arg10[%c32_165, %c0_166] : memref<64x128xf32, #tpu.memory_space<vmem>>, vector<8x128xf32>
    %cst_167 = arith.constant dense<0.000000e+00> : vector<8x128xf32>
    %516 = tpu.matmul %498, %360, %cst_167 {dimension_numbers = #tpu.dot_dimension_numbers<[1], [0], [0], [1], [0, 0, 1, 1], [], []>} : vector<8x32xf32>, vector<32x128xf32>, vector<8x128xf32> -> vector<8x128xf32>
    %517 = arith.addf %515, %516 : vector<8x128xf32>
    %c24_168 = arith.constant 24 : index
    %c0_169 = arith.constant 0 : index
    %518 = vector.load %arg11[%c24_168, %c0_169] : memref<64x128xf32, #tpu.memory_space<vmem>>, vector<8x128xf32>
    %cst_170 = arith.constant dense<0.000000e+00> : vector<8x128xf32>
    %519 = tpu.matmul %514, %362, %cst_170 {dimension_numbers = #tpu.dot_dimension_numbers<[1], [0], [0], [1], [0, 0, 1, 1], [], []>} : vector<8x32xf32>, vector<32x128xf32>, vector<8x128xf32> -> vector<8x128xf32>
    %520 = arith.addf %518, %519 : vector<8x128xf32>
    %521 = vector.extract_strided_slice %517 {offsets = [0, 0], sizes = [8, 96], strides = [1, 1]} : vector<8x128xf32> to vector<8x96xf32>
    %522 = arith.negf %521 : vector<8x96xf32>
    %523 = math.exp %522 : vector<8x96xf32>
    %cst_171 = arith.constant 1.000000e+00 : f32
    %524 = vector.broadcast %cst_171 : f32 to vector<8x96xf32>
    %525 = arith.addf %524, %523 : vector<8x96xf32>
    %526 = arith.divf %524, %525 : vector<8x96xf32>
    %527 = vector.extract_strided_slice %517 {offsets = [0, 96], sizes = [8, 32], strides = [1, 1]} : vector<8x128xf32> to vector<8x32xf32>
    %528 = math.tanh %527 : vector<8x32xf32>
    %529 = vector.extract_strided_slice %526 {offsets = [0, 0], sizes = [8, 32], strides = [1, 1]} : vector<8x96xf32> to vector<8x32xf32>
    %530 = vector.extract_strided_slice %526 {offsets = [0, 32], sizes = [8, 32], strides = [1, 1]} : vector<8x96xf32> to vector<8x32xf32>
    %531 = vector.extract_strided_slice %526 {offsets = [0, 64], sizes = [8, 32], strides = [1, 1]} : vector<8x96xf32> to vector<8x32xf32>
    %532 = arith.mulf %530, %496 : vector<8x32xf32>
    %533 = arith.mulf %529, %528 : vector<8x32xf32>
    %534 = arith.addf %532, %533 : vector<8x32xf32>
    %535 = math.tanh %534 : vector<8x32xf32>
    %536 = arith.mulf %531, %535 : vector<8x32xf32>
    %537 = vector.extract_strided_slice %520 {offsets = [0, 0], sizes = [8, 96], strides = [1, 1]} : vector<8x128xf32> to vector<8x96xf32>
    %538 = arith.negf %537 : vector<8x96xf32>
    %539 = math.exp %538 : vector<8x96xf32>
    %cst_172 = arith.constant 1.000000e+00 : f32
    %540 = vector.broadcast %cst_172 : f32 to vector<8x96xf32>
    %541 = arith.addf %540, %539 : vector<8x96xf32>
    %542 = arith.divf %540, %541 : vector<8x96xf32>
    %543 = vector.extract_strided_slice %520 {offsets = [0, 96], sizes = [8, 32], strides = [1, 1]} : vector<8x128xf32> to vector<8x32xf32>
    %544 = math.tanh %543 : vector<8x32xf32>
    %545 = vector.extract_strided_slice %542 {offsets = [0, 0], sizes = [8, 32], strides = [1, 1]} : vector<8x96xf32> to vector<8x32xf32>
    %546 = vector.extract_strided_slice %542 {offsets = [0, 32], sizes = [8, 32], strides = [1, 1]} : vector<8x96xf32> to vector<8x32xf32>
    %547 = vector.extract_strided_slice %542 {offsets = [0, 64], sizes = [8, 32], strides = [1, 1]} : vector<8x96xf32> to vector<8x32xf32>
    %548 = arith.mulf %546, %512 : vector<8x32xf32>
    %549 = arith.mulf %545, %544 : vector<8x32xf32>
    %550 = arith.addf %548, %549 : vector<8x32xf32>
    %551 = math.tanh %550 : vector<8x32xf32>
    %552 = arith.mulf %547, %551 : vector<8x32xf32>
    %c40_173 = arith.constant 40 : index
    %c0_174 = arith.constant 0 : index
    %553 = vector.load %arg10[%c40_173, %c0_174] : memref<64x128xf32, #tpu.memory_space<vmem>>, vector<8x128xf32>
    %cst_175 = arith.constant dense<0.000000e+00> : vector<8x128xf32>
    %554 = tpu.matmul %536, %360, %cst_175 {dimension_numbers = #tpu.dot_dimension_numbers<[1], [0], [0], [1], [0, 0, 1, 1], [], []>} : vector<8x32xf32>, vector<32x128xf32>, vector<8x128xf32> -> vector<8x128xf32>
    %555 = arith.addf %553, %554 : vector<8x128xf32>
    %c16_176 = arith.constant 16 : index
    %c0_177 = arith.constant 0 : index
    %556 = vector.load %arg11[%c16_176, %c0_177] : memref<64x128xf32, #tpu.memory_space<vmem>>, vector<8x128xf32>
    %cst_178 = arith.constant dense<0.000000e+00> : vector<8x128xf32>
    %557 = tpu.matmul %552, %362, %cst_178 {dimension_numbers = #tpu.dot_dimension_numbers<[1], [0], [0], [1], [0, 0, 1, 1], [], []>} : vector<8x32xf32>, vector<32x128xf32>, vector<8x128xf32> -> vector<8x128xf32>
    %558 = arith.addf %556, %557 : vector<8x128xf32>
    %559 = vector.extract_strided_slice %555 {offsets = [0, 0], sizes = [8, 96], strides = [1, 1]} : vector<8x128xf32> to vector<8x96xf32>
    %560 = arith.negf %559 : vector<8x96xf32>
    %561 = math.exp %560 : vector<8x96xf32>
    %cst_179 = arith.constant 1.000000e+00 : f32
    %562 = vector.broadcast %cst_179 : f32 to vector<8x96xf32>
    %563 = arith.addf %562, %561 : vector<8x96xf32>
    %564 = arith.divf %562, %563 : vector<8x96xf32>
    %565 = vector.extract_strided_slice %555 {offsets = [0, 96], sizes = [8, 32], strides = [1, 1]} : vector<8x128xf32> to vector<8x32xf32>
    %566 = math.tanh %565 : vector<8x32xf32>
    %567 = vector.extract_strided_slice %564 {offsets = [0, 0], sizes = [8, 32], strides = [1, 1]} : vector<8x96xf32> to vector<8x32xf32>
    %568 = vector.extract_strided_slice %564 {offsets = [0, 32], sizes = [8, 32], strides = [1, 1]} : vector<8x96xf32> to vector<8x32xf32>
    %569 = vector.extract_strided_slice %564 {offsets = [0, 64], sizes = [8, 32], strides = [1, 1]} : vector<8x96xf32> to vector<8x32xf32>
    %570 = arith.mulf %568, %534 : vector<8x32xf32>
    %571 = arith.mulf %567, %566 : vector<8x32xf32>
    %572 = arith.addf %570, %571 : vector<8x32xf32>
    %573 = math.tanh %572 : vector<8x32xf32>
    %574 = arith.mulf %569, %573 : vector<8x32xf32>
    %575 = vector.extract_strided_slice %558 {offsets = [0, 0], sizes = [8, 96], strides = [1, 1]} : vector<8x128xf32> to vector<8x96xf32>
    %576 = arith.negf %575 : vector<8x96xf32>
    %577 = math.exp %576 : vector<8x96xf32>
    %cst_180 = arith.constant 1.000000e+00 : f32
    %578 = vector.broadcast %cst_180 : f32 to vector<8x96xf32>
    %579 = arith.addf %578, %577 : vector<8x96xf32>
    %580 = arith.divf %578, %579 : vector<8x96xf32>
    %581 = vector.extract_strided_slice %558 {offsets = [0, 96], sizes = [8, 32], strides = [1, 1]} : vector<8x128xf32> to vector<8x32xf32>
    %582 = math.tanh %581 : vector<8x32xf32>
    %583 = vector.extract_strided_slice %580 {offsets = [0, 0], sizes = [8, 32], strides = [1, 1]} : vector<8x96xf32> to vector<8x32xf32>
    %584 = vector.extract_strided_slice %580 {offsets = [0, 32], sizes = [8, 32], strides = [1, 1]} : vector<8x96xf32> to vector<8x32xf32>
    %585 = vector.extract_strided_slice %580 {offsets = [0, 64], sizes = [8, 32], strides = [1, 1]} : vector<8x96xf32> to vector<8x32xf32>
    %586 = arith.mulf %584, %550 : vector<8x32xf32>
    %587 = arith.mulf %583, %582 : vector<8x32xf32>
    %588 = arith.addf %586, %587 : vector<8x32xf32>
    %589 = math.tanh %588 : vector<8x32xf32>
    %590 = arith.mulf %585, %589 : vector<8x32xf32>
    %c48_181 = arith.constant 48 : index
    %c0_182 = arith.constant 0 : index
    %591 = vector.load %arg10[%c48_181, %c0_182] : memref<64x128xf32, #tpu.memory_space<vmem>>, vector<8x128xf32>
    %cst_183 = arith.constant dense<0.000000e+00> : vector<8x128xf32>
    %592 = tpu.matmul %574, %360, %cst_183 {dimension_numbers = #tpu.dot_dimension_numbers<[1], [0], [0], [1], [0, 0, 1, 1], [], []>} : vector<8x32xf32>, vector<32x128xf32>, vector<8x128xf32> -> vector<8x128xf32>
    %593 = arith.addf %591, %592 : vector<8x128xf32>
    %c8_184 = arith.constant 8 : index
    %c0_185 = arith.constant 0 : index
    %594 = vector.load %arg11[%c8_184, %c0_185] : memref<64x128xf32, #tpu.memory_space<vmem>>, vector<8x128xf32>
    %cst_186 = arith.constant dense<0.000000e+00> : vector<8x128xf32>
    %595 = tpu.matmul %590, %362, %cst_186 {dimension_numbers = #tpu.dot_dimension_numbers<[1], [0], [0], [1], [0, 0, 1, 1], [], []>} : vector<8x32xf32>, vector<32x128xf32>, vector<8x128xf32> -> vector<8x128xf32>
    %596 = arith.addf %594, %595 : vector<8x128xf32>
    %597 = vector.extract_strided_slice %593 {offsets = [0, 0], sizes = [8, 96], strides = [1, 1]} : vector<8x128xf32> to vector<8x96xf32>
    %598 = arith.negf %597 : vector<8x96xf32>
    %599 = math.exp %598 : vector<8x96xf32>
    %cst_187 = arith.constant 1.000000e+00 : f32
    %600 = vector.broadcast %cst_187 : f32 to vector<8x96xf32>
    %601 = arith.addf %600, %599 : vector<8x96xf32>
    %602 = arith.divf %600, %601 : vector<8x96xf32>
    %603 = vector.extract_strided_slice %593 {offsets = [0, 96], sizes = [8, 32], strides = [1, 1]} : vector<8x128xf32> to vector<8x32xf32>
    %604 = math.tanh %603 : vector<8x32xf32>
    %605 = vector.extract_strided_slice %602 {offsets = [0, 0], sizes = [8, 32], strides = [1, 1]} : vector<8x96xf32> to vector<8x32xf32>
    %606 = vector.extract_strided_slice %602 {offsets = [0, 32], sizes = [8, 32], strides = [1, 1]} : vector<8x96xf32> to vector<8x32xf32>
    %607 = vector.extract_strided_slice %602 {offsets = [0, 64], sizes = [8, 32], strides = [1, 1]} : vector<8x96xf32> to vector<8x32xf32>
    %608 = arith.mulf %606, %572 : vector<8x32xf32>
    %609 = arith.mulf %605, %604 : vector<8x32xf32>
    %610 = arith.addf %608, %609 : vector<8x32xf32>
    %611 = math.tanh %610 : vector<8x32xf32>
    %612 = arith.mulf %607, %611 : vector<8x32xf32>
    %613 = vector.extract_strided_slice %596 {offsets = [0, 0], sizes = [8, 96], strides = [1, 1]} : vector<8x128xf32> to vector<8x96xf32>
    %614 = arith.negf %613 : vector<8x96xf32>
    %615 = math.exp %614 : vector<8x96xf32>
    %cst_188 = arith.constant 1.000000e+00 : f32
    %616 = vector.broadcast %cst_188 : f32 to vector<8x96xf32>
    %617 = arith.addf %616, %615 : vector<8x96xf32>
    %618 = arith.divf %616, %617 : vector<8x96xf32>
    %619 = vector.extract_strided_slice %596 {offsets = [0, 96], sizes = [8, 32], strides = [1, 1]} : vector<8x128xf32> to vector<8x32xf32>
    %620 = math.tanh %619 : vector<8x32xf32>
    %621 = vector.extract_strided_slice %618 {offsets = [0, 0], sizes = [8, 32], strides = [1, 1]} : vector<8x96xf32> to vector<8x32xf32>
    %622 = vector.extract_strided_slice %618 {offsets = [0, 32], sizes = [8, 32], strides = [1, 1]} : vector<8x96xf32> to vector<8x32xf32>
    %623 = vector.extract_strided_slice %618 {offsets = [0, 64], sizes = [8, 32], strides = [1, 1]} : vector<8x96xf32> to vector<8x32xf32>
    %624 = arith.mulf %622, %588 : vector<8x32xf32>
    %625 = arith.mulf %621, %620 : vector<8x32xf32>
    %626 = arith.addf %624, %625 : vector<8x32xf32>
    %627 = math.tanh %626 : vector<8x32xf32>
    %628 = arith.mulf %623, %627 : vector<8x32xf32>
    %c56_189 = arith.constant 56 : index
    %c0_190 = arith.constant 0 : index
    %629 = vector.load %arg10[%c56_189, %c0_190] : memref<64x128xf32, #tpu.memory_space<vmem>>, vector<8x128xf32>
    %cst_191 = arith.constant dense<0.000000e+00> : vector<8x128xf32>
    %630 = tpu.matmul %612, %360, %cst_191 {dimension_numbers = #tpu.dot_dimension_numbers<[1], [0], [0], [1], [0, 0, 1, 1], [], []>} : vector<8x32xf32>, vector<32x128xf32>, vector<8x128xf32> -> vector<8x128xf32>
    %631 = arith.addf %629, %630 : vector<8x128xf32>
    %c0_192 = arith.constant 0 : index
    %c0_193 = arith.constant 0 : index
    %632 = vector.load %arg11[%c0_192, %c0_193] : memref<64x128xf32, #tpu.memory_space<vmem>>, vector<8x128xf32>
    %cst_194 = arith.constant dense<0.000000e+00> : vector<8x128xf32>
    %633 = tpu.matmul %628, %362, %cst_194 {dimension_numbers = #tpu.dot_dimension_numbers<[1], [0], [0], [1], [0, 0, 1, 1], [], []>} : vector<8x32xf32>, vector<32x128xf32>, vector<8x128xf32> -> vector<8x128xf32>
    %634 = arith.addf %632, %633 : vector<8x128xf32>
    %635 = vector.extract_strided_slice %631 {offsets = [0, 0], sizes = [8, 96], strides = [1, 1]} : vector<8x128xf32> to vector<8x96xf32>
    %636 = arith.negf %635 : vector<8x96xf32>
    %637 = math.exp %636 : vector<8x96xf32>
    %cst_195 = arith.constant 1.000000e+00 : f32
    %638 = vector.broadcast %cst_195 : f32 to vector<8x96xf32>
    %639 = arith.addf %638, %637 : vector<8x96xf32>
    %640 = arith.divf %638, %639 : vector<8x96xf32>
    %641 = vector.extract_strided_slice %631 {offsets = [0, 96], sizes = [8, 32], strides = [1, 1]} : vector<8x128xf32> to vector<8x32xf32>
    %642 = math.tanh %641 : vector<8x32xf32>
    %643 = vector.extract_strided_slice %640 {offsets = [0, 0], sizes = [8, 32], strides = [1, 1]} : vector<8x96xf32> to vector<8x32xf32>
    %644 = vector.extract_strided_slice %640 {offsets = [0, 32], sizes = [8, 32], strides = [1, 1]} : vector<8x96xf32> to vector<8x32xf32>
    %645 = vector.extract_strided_slice %640 {offsets = [0, 64], sizes = [8, 32], strides = [1, 1]} : vector<8x96xf32> to vector<8x32xf32>
    %646 = arith.mulf %644, %610 : vector<8x32xf32>
    %647 = arith.mulf %643, %642 : vector<8x32xf32>
    %648 = arith.addf %646, %647 : vector<8x32xf32>
    %649 = math.tanh %648 : vector<8x32xf32>
    %650 = arith.mulf %645, %649 : vector<8x32xf32>
    %651 = vector.extract_strided_slice %634 {offsets = [0, 0], sizes = [8, 96], strides = [1, 1]} : vector<8x128xf32> to vector<8x96xf32>
    %652 = arith.negf %651 : vector<8x96xf32>
    %653 = math.exp %652 : vector<8x96xf32>
    %cst_196 = arith.constant 1.000000e+00 : f32
    %654 = vector.broadcast %cst_196 : f32 to vector<8x96xf32>
    %655 = arith.addf %654, %653 : vector<8x96xf32>
    %656 = arith.divf %654, %655 : vector<8x96xf32>
    %657 = vector.extract_strided_slice %634 {offsets = [0, 96], sizes = [8, 32], strides = [1, 1]} : vector<8x128xf32> to vector<8x32xf32>
    %658 = math.tanh %657 : vector<8x32xf32>
    %659 = vector.extract_strided_slice %656 {offsets = [0, 0], sizes = [8, 32], strides = [1, 1]} : vector<8x96xf32> to vector<8x32xf32>
    %660 = vector.extract_strided_slice %656 {offsets = [0, 32], sizes = [8, 32], strides = [1, 1]} : vector<8x96xf32> to vector<8x32xf32>
    %661 = vector.extract_strided_slice %656 {offsets = [0, 64], sizes = [8, 32], strides = [1, 1]} : vector<8x96xf32> to vector<8x32xf32>
    %662 = arith.mulf %660, %626 : vector<8x32xf32>
    %663 = arith.mulf %659, %658 : vector<8x32xf32>
    %664 = arith.addf %662, %663 : vector<8x32xf32>
    %665 = math.tanh %664 : vector<8x32xf32>
    %666 = arith.mulf %661, %665 : vector<8x32xf32>
    %c0_197 = arith.constant 0 : index
    %c0_198 = arith.constant 0 : index
    %667 = vector.load %arg7[%c0_197, %c0_198] : memref<2x32xf32, #tpu.memory_space<vmem>>, vector<1x32xf32>
    %668 = vector.broadcast %667 : vector<1x32xf32> to vector<8x32xf32>
    %669 = arith.mulf %650, %668 : vector<8x32xf32>
    %cst_199 = arith.constant dense<0.000000e+00> : vector<8xf32>
    %670 = vector.multi_reduction <add>, %669, %cst_199 [1] : vector<8x32xf32> to vector<8xf32>
    %671 = vector.shape_cast %670 : vector<8xf32> to vector<8x1xf32>
    %c1_200 = arith.constant 1 : index
    %c0_201 = arith.constant 0 : index
    %672 = vector.load %arg7[%c1_200, %c0_201] : memref<2x32xf32, #tpu.memory_space<vmem>>, vector<1x32xf32>
    %673 = vector.broadcast %672 : vector<1x32xf32> to vector<8x32xf32>
    %674 = arith.mulf %666, %673 : vector<8x32xf32>
    %cst_202 = arith.constant dense<0.000000e+00> : vector<8xf32>
    %675 = vector.multi_reduction <add>, %674, %cst_202 [1] : vector<8x32xf32> to vector<8xf32>
    %676 = vector.shape_cast %675 : vector<8xf32> to vector<8x1xf32>
    %677 = arith.addf %671, %676 : vector<8x1xf32>
    %c0_203 = arith.constant 0 : index
    %c0_204 = arith.constant 0 : index
    %678 = vector.load %arg8[%c0_203, %c0_204] : memref<1x1xf32, #tpu.memory_space<vmem>>, vector<1x1xf32>
    %679 = vector.broadcast %678 : vector<1x1xf32> to vector<8x1xf32>
    %680 = arith.addf %677, %679 : vector<8x1xf32>
    %c0_205 = arith.constant 0 : index
    %c0_206 = arith.constant 0 : index
    %681 = vector.load %arg9[%c0_205, %c0_206] : memref<8x1xf32, #tpu.memory_space<vmem>>, vector<8x1xf32>
    tpu.vector_store %arg9[%c0_205, %c0_206], %680 {strides = array<i32>} : memref<8x1xf32, #tpu.memory_space<vmem>>, vector<8x1xf32>,
    return
  }
}

</mosaic_0001>

<llo_original>
// kernel: baseline_bilstm_forward.1
$region0: #{baseline_bilstm_forward.1}
  #allocation0 [shape = 'u32[]', space=smem, size = 0x4, offset = 0x4, fixed_abs, tag = 'smem constant byte address 0x4 - core index']
  #allocation1 [shape = 'u32[144,128]{1,0:T(1,128)}', space=vmem, size = 0x12000, scoped, tag = 'internal scratch']
  #allocation2 [shape = 'f32[64,128]{1,0:T(8,128)}', space=vmem, size = 0x8000, scoped, tag = 'scratch operand']
  #allocation3 [shape = 'f32[64,128]{1,0:T(8,128)}', space=vmem, size = 0x8000, scoped, tag = 'scratch operand']
  #allocation4 [shape = 'f32[64,32]{1,0:T(8,128)}', space=vmem, size = 0x8000, scoped, tag = 'scratch operand']
  #allocation5 [shape = 'f32[64,32]{1,0:T(8,128)}', space=vmem, size = 0x8000, scoped, tag = 'scratch operand']
  #allocation6 [shape = 'f32[1,1]{1,0:T(1,128)S(1)}', space=vmem, size = 0x200, scoped, tag = 'scoped memory for baseline_bilstm_forward.1']
  %s0 = inlined_call_operand.vmem [shape: f32[64,1], index: 0, kind: input, shape index: {}]
  %s1 = inlined_call_operand.vmem [shape: f32[2,128], index: 1, kind: input, shape index: {}]
  %s2 = inlined_call_operand.vmem [shape: f32[2,128], index: 2, kind: input, shape index: {}]
  %s3 = inlined_call_operand.vmem [shape: f32[2,32,128], index: 3, kind: input, shape index: {}]
  %s4 = inlined_call_operand.hbm [shape: f32[2,64,128], index: 4, kind: input, shape index: {}]
  %s5 = inlined_call_operand.vmem [shape: f32[2,128], index: 5, kind: input, shape index: {}]
  %s6 = inlined_call_operand.hbm [shape: f32[2,32,128], index: 6, kind: input, shape index: {}]
  %s7 = inlined_call_operand.vmem [shape: f32[2,32], index: 7, kind: input, shape index: {}]
  %s8 = inlined_call_operand.<no memory space> [shape: f32[1,1], index: 8, kind: input, shape index: {}]
  %s9 = inlined_call_operand.vmem [shape: f32[8,1], index: 9, kind: output, shape index: {}]
  %s10 = sld [smem:[#allocation0]]
  $region54: #{baseline_bilstm_forward.1} parent=0
    _
  %s12 = ssub.s32 1, %s10
  %s13 = scalar_select 0, %s12, %s10
  %v14 = vstv %s8
  %15 = vst [vmem:[#allocation6] sm:$0x1] %v14
  $region1: #{baseline_bilstm_forward.1} parent=0
    #allocation7 [shape = 'u8[65536]{0}', space=vmem, size = 0x10000, scoped, tag = 'input window, operand 4, single buffered']
    #allocation8 [shape = 's32[1]{0}', space=sflag, size = 0x4, scoped, tag = 'scoped memory for baseline_bilstm_forward.1']
    #allocation9 [shape = 'u8[32768]{0}', space=vmem, size = 0x8000, scoped, tag = 'input window, operand 6, single buffered']
    #allocation10 [shape = 's32[1]{0}', space=sflag, size = 0x4, scoped, tag = 'scoped memory for baseline_bilstm_forward.1']
    %16 = vsyncpa [#allocation8], 0
    %17 = vsyncpa [#allocation10], 0
    // Predicated region
    $region2: #{baseline_bilstm_forward.1} parent=1 // pred_check
      _
    $region3: #{baseline_bilstm_forward.1} parent=1 // pred_check_branch
      %19 = sbr.rel (0) target = $region5
    $region4: #{baseline_bilstm_forward.1} parent=1 // pred_region
      _
    $region5: #{baseline_bilstm_forward.1} parent=1 // pred_fallthru
      _
    // Predicated region
    $region6: #{baseline_bilstm_forward.1} parent=1 // pred_check
      _
    $region7: #{baseline_bilstm_forward.1} parent=1 // pred_check_branch
      %21 = sbr.rel (0) target = $region9
    $region8: #{baseline_bilstm_forward.1} parent=1 // pred_region
      _
    $region9: #{baseline_bilstm_forward.1} parent=1 // pred_fallthru
      _
    // Predicated region
    $region10: #{baseline_bilstm_forward.1} parent=1 // pred_check
      _
    $region11: #{baseline_bilstm_forward.1} parent=1 // pred_check_branch
      %23 = sbr.rel (0) target = $region13
    $region12: #{baseline_bilstm_forward.1} parent=1 // pred_region
      _
    $region13: #{baseline_bilstm_forward.1} parent=1 // pred_fallthru
      _
    // Predicated region
    $region14: #{baseline_bilstm_forward.1} parent=1 // pred_check
      _
    $region15: #{baseline_bilstm_forward.1} parent=1 // pred_check_branch
      %25 = sbr.rel (0) target = $region17
    $region16: #{baseline_bilstm_forward.1} parent=1 // pred_region
      _
    $region17: #{baseline_bilstm_forward.1} parent=1 // pred_fallthru
      _
    // Predicated region
    $region18: #{baseline_bilstm_forward.1} parent=1 // pred_check
      _
    $region19: #{baseline_bilstm_forward.1} parent=1 // pred_check_branch
      %27 = sbr.rel (0) target = $region21
    $region20: #{baseline_bilstm_forward.1} parent=1 // pred_region
      %s29 = ssub.s32 2048, 2048
      %30 = vsyncadd [#allocation8], %s29
      %s31 = sshll.u32 [#allocation7], 4
      %s32 = int_to_ptr.vmem [resolvable:$true] %s31
      %37 = dma.hbm_to_vmem [thread:$0]  %s4, 2048, %s32, [#allocation8], 128, 128, 8
    $region21: #{baseline_bilstm_forward.1} parent=1 // pred_fallthru
      _
    // Predicated region
    $region22: #{baseline_bilstm_forward.1} parent=1 // pred_check
      _
    $region23: #{baseline_bilstm_forward.1} parent=1 // pred_check_branch
      %39 = sbr.rel (0) target = $region25
    $region24: #{baseline_bilstm_forward.1} parent=1 // pred_region
      _
    $region25: #{baseline_bilstm_forward.1} parent=1 // pred_fallthru
      _
    // Predicated region
    $region26: #{baseline_bilstm_forward.1} parent=1 // pred_check
      _
    $region27: #{baseline_bilstm_forward.1} parent=1 // pred_check_branch
      %41 = sbr.rel (0) target = $region29
    $region28: #{baseline_bilstm_forward.1} parent=1 // pred_region
      %s43 = ssub.s32 1024, 1024
      %44 = vsyncadd [#allocation10], %s43
      %s45 = sshll.u32 [#allocation9], 4
      %s46 = int_to_ptr.vmem [resolvable:$true] %s45
      %51 = dma.hbm_to_vmem [thread:$0]  %s6, 1024, %s46, [#allocation10], 128, 128, 8
    $region29: #{baseline_bilstm_forward.1} parent=1 // pred_fallthru
      _
    // Predicated region
    $region30: #{baseline_bilstm_forward.1} parent=1 // pred_check
      _
    $region31: #{baseline_bilstm_forward.1} parent=1 // pred_check_branch
      %53 = sbr.rel (0) target = $region33
    $region32: #{baseline_bilstm_forward.1} parent=1 // pred_region
      _
    $region33: #{baseline_bilstm_forward.1} parent=1 // pred_fallthru
      _
    // Predicated region
    $region34: #{baseline_bilstm_forward.1} parent=1 // pred_check
      _
    $region35: #{baseline_bilstm_forward.1} parent=1 // pred_check_branch
      %55 = sbr.rel (0) target = $region37
    $region36: #{baseline_bilstm_forward.1} parent=1 // pred_region
      _
    $region37: #{baseline_bilstm_forward.1} parent=1 // pred_fallthru
      _
    // Predicated region
    $region38: #{baseline_bilstm_forward.1} parent=1 // pred_check
      _
    $region39: #{baseline_bilstm_forward.1} parent=1 // pred_check_branch
      %57 = sbr.rel (0) target = $region41
    $region40: #{baseline_bilstm_forward.1} parent=1 // pred_region
      %58 = dma.done [#allocation8], 2048
    $region41: #{baseline_bilstm_forward.1} parent=1 // pred_fallthru
      _
    // Predicated region
    $region42: #{baseline_bilstm_forward.1} parent=1 // pred_check
      _
    $region43: #{baseline_bilstm_forward.1} parent=1 // pred_check_branch
      %60 = sbr.rel (0) target = $region45
    $region44: #{baseline_bilstm_forward.1} parent=1 // pred_region
      %61 = dma.done [#allocation10], 1024
    $region45: #{baseline_bilstm_forward.1} parent=1 // pred_fallthru
      _
    %v62 = vld [vmem:[%s0] sm:$0xff]
    %v63 = vld [vmem:[%s0 + $0x8] sm:$0xff]
    %v64 = vld [vmem:[%s0 + $0x10] sm:$0xff]
    %v65 = vld [vmem:[%s0 + $0x18] sm:$0xff]
    %v66 = vld [vmem:[%s0 + $0x20] sm:$0xff]
    %v67 = vld [vmem:[%s0 + $0x28] sm:$0xff]
    %v68 = vld [vmem:[%s0 + $0x30] sm:$0xff]
    %v69 = vld [vmem:[%s0 + $0x38] sm:$0xff]
    %v70 = vld [vmem:[%s1] sm:$0x1]
    %72 = vset.pattern.permute.xlu0 0
    %73 = vperm.xlu0 %72, %v62
    %v74 = vpop.permute.xlu0 %73
    %77 = vset.pattern.permute.xlu0 0
    %78 = vperm.xlu0 %77, %v63
    %v79 = vpop.permute.xlu0 %78
    %82 = vset.pattern.permute.xlu0 0
    %83 = vperm.xlu0 %82, %v64
    %v84 = vpop.permute.xlu0 %83
    %87 = vset.pattern.permute.xlu0 0
    %88 = vperm.xlu0 %87, %v65
    %v89 = vpop.permute.xlu0 %88
    %92 = vset.pattern.permute.xlu0 0
    %93 = vperm.xlu0 %92, %v66
    %v94 = vpop.permute.xlu0 %93
    %97 = vset.pattern.permute.xlu0 0
    %98 = vperm.xlu0 %97, %v67
    %v99 = vpop.permute.xlu0 %98
    %102 = vset.pattern.permute.xlu0 0
    %103 = vperm.xlu0 %102, %v68
    %v104 = vpop.permute.xlu0 %103
    %107 = vset.pattern.permute.xlu0 0
    %108 = vperm.xlu0 %107, %v69
    %v109 = vpop.permute.xlu0 %108
    %v111 = vlaneseq
    %v112 = vshrl.u32 %v111, 7
    %v113 = vsub.s32 0, %v112
    %v114 = vrot.slane %v70, %v113
    %v115 = vmul.f32 %v74, %v114
    %v116 = vmul.f32 %v79, %v114
    %v117 = vmul.f32 %v84, %v114
    %v118 = vmul.f32 %v89, %v114
    %v119 = vmul.f32 %v94, %v114
    %v120 = vmul.f32 %v99, %v114
    %v121 = vmul.f32 %v104, %v114
    %v122 = vmul.f32 %v109, %v114
    %v123 = vld [vmem:[%s2] sm:$0x1]
    %v124 = vlaneseq
    %v125 = vshrl.u32 %v124, 7
    %v126 = vsub.s32 0, %v125
    %v127 = vrot.slane %v123, %v126
    %v128 = vadd.f32 %v115, %v127
    %v129 = vadd.f32 %v116, %v127
    %v130 = vadd.f32 %v117, %v127
    %v131 = vadd.f32 %v118, %v127
    %v132 = vadd.f32 %v119, %v127
    %v133 = vadd.f32 %v120, %v127
    %v134 = vadd.f32 %v121, %v127
    %v135 = vadd.f32 %v122, %v127
    %136 = vst [vmem:[#allocation2] sm:$0xff] %v128
    %137 = vst [vmem:[#allocation2 + $0x8] sm:$0xff] %v129
    %138 = vst [vmem:[#allocation2 + $0x10] sm:$0xff] %v130
    %139 = vst [vmem:[#allocation2 + $0x18] sm:$0xff] %v131
    %140 = vst [vmem:[#allocation2 + $0x20] sm:$0xff] %v132
    %141 = vst [vmem:[#allocation2 + $0x28] sm:$0xff] %v133
    %142 = vst [vmem:[#allocation2 + $0x30] sm:$0xff] %v134
    %143 = vst [vmem:[#allocation2 + $0x38] sm:$0xff] %v135
    %v144 = vld [vmem:[%s1 + $0x1] sm:$0x1]
    %v145 = vlaneseq
    %v146 = vshrl.u32 %v145, 7
    %v147 = vsub.s32 0, %v146
    %v148 = vrot.slane %v144, %v147
    %v149 = vmul.f32 %v74, %v148
    %v150 = vmul.f32 %v79, %v148
    %v151 = vmul.f32 %v84, %v148
    %v152 = vmul.f32 %v89, %v148
    %v153 = vmul.f32 %v94, %v148
    %v154 = vmul.f32 %v99, %v148
    %v155 = vmul.f32 %v104, %v148
    %v156 = vmul.f32 %v109, %v148
    %v157 = vld [vmem:[%s2 + $0x1] sm:$0x1]
    %v158 = vlaneseq
    %v159 = vshrl.u32 %v158, 7
    %v160 = vsub.s32 0, %v159
    %v161 = vrot.slane %v157, %v160
    %v162 = vadd.f32 %v149, %v161
    %v163 = vadd.f32 %v150, %v161
    %v164 = vadd.f32 %v151, %v161
    %v165 = vadd.f32 %v152, %v161
    %v166 = vadd.f32 %v153, %v161
    %v167 = vadd.f32 %v154, %v161
    %v168 = vadd.f32 %v155, %v161
    %v169 = vadd.f32 %v156, %v161
    %170 = vst [vmem:[#allocation3] sm:$0xff] %v162
    %171 = vst [vmem:[#allocation3 + $0x8] sm:$0xff] %v163
    %172 = vst [vmem:[#allocation3 + $0x10] sm:$0xff] %v164
    %173 = vst [vmem:[#allocation3 + $0x18] sm:$0xff] %v165
    %174 = vst [vmem:[#allocation3 + $0x20] sm:$0xff] %v166
    %175 = vst [vmem:[#allocation3 + $0x28] sm:$0xff] %v167
    %176 = vst [vmem:[#allocation3 + $0x30] sm:$0xff] %v168
    %177 = vst [vmem:[#allocation3 + $0x38] sm:$0xff] %v169
    %v178 = vld [vmem:[%s3] sm:$0xff]
    %v179 = vld [vmem:[%s3 + $0x8] sm:$0xff]
    %v180 = vld [vmem:[%s3 + $0x10] sm:$0xff]
    %v181 = vld [vmem:[%s3 + $0x18] sm:$0xff]
    %s182 = scalar_lea.vmem %s3, 32
    %v183 = vld [vmem:[%s182] sm:$0xff]
    %v184 = vld [vmem:[%s182 + $0x8] sm:$0xff]
    %v185 = vld [vmem:[%s182 + $0x10] sm:$0xff]
    %v186 = vld [vmem:[%s182 + $0x18] sm:$0xff]
    %v187 = vld [vmem:[#allocation2] sm:$0xff]
    %vm188 = vcmask 261120
    %v190 = vsel %vm188, 0.0, 0
    %192 = vmatprep.subr.mxu0 0.0
    %193 = vmatpush1.msra.mxu0 %v178
    %194 = vmatprep.subr.mxu0 0.0
    %195 = vmatpush1.msra.mxu0 %v179
    %196 = vmatprep.subr.mxu0 0.0
    %197 = vmatpush1.msra.mxu0 %v180
    %198 = vmatprep.subr.mxu0 0.0
    %199 = vmatpush1.msra.mxu0 %v181
    %200 = vmatprep.subr.mxu0 0.0
    %201 = vmatpush1.msra.mxu0 0.0
    %202 = vmatprep.subr.mxu0 0.0
    %203 = vmatpush1.msra.mxu0 0.0
    %204 = vmatprep.subr.mxu0 0.0
    %205 = vmatpush1.msra.mxu0 0.0
    %206 = vmatprep.subr.mxu0 0.0
    %207 = vmatpush1.msra.mxu0 0.0
    %208 = vmatprep.subr.mxu0 0.0
    %209 = vmatpush1.msra.mxu0 0.0
    %210 = vmatprep.subr.mxu0 0.0
    %211 = vmatpush1.msra.mxu0 0.0
    %212 = vmatprep.subr.mxu0 0.0
    %213 = vmatpush1.msra.mxu0 0.0
    %214 = vmatprep.subr.mxu0 0.0
    %215 = vmatpush1.msra.mxu0 0.0
    %216 = vmatprep.subr.mxu0 0.0
    %217 = vmatpush1.msra.mxu0 0.0
    %218 = vmatprep.subr.mxu0 0.0
    %219 = vmatpush1.msra.mxu0 0.0
    %220 = vmatprep.subr.mxu0 0.0
    %221 = vmatpush1.msra.mxu0 0.0
    %222 = vmatprep.subr.mxu0 0.0
    %223 = vmatpush1.msra.mxu0 0.0
    %224 = vmatprep.subr.mxu0 0.0
    %225 = vmatpush1.msra.mxu0 0.0
    %226 = vmatprep.subr.mxu0 0.0
    %227 = vmatpush1.msra.mxu0 0.0
    %228 = vmatprep.subr.mxu0 0.0
    %229 = vmatpush1.msra.mxu0 0.0
    %230 = vmatprep.subr.mxu0 0.0
    %231 = vmatpush1.msra.mxu0 0.0
    %232 = vmatprep.subr.mxu0 0.0
    %233 = vmatpush1.msra.mxu0 0.0
    %234 = vmatprep.subr.mxu0 0.0
    %235 = vmatpush1.msra.mxu0 0.0
    %236 = vmatprep.subr.mxu0 0.0
    %237 = vmatpush1.msra.mxu0 0.0
    %238 = vmatprep.subr.mxu0 0.0
    %239 = vmatpush1.msra.mxu0 0.0
    %240 = vmatprep.subr.mxu0 0.0
    %241 = vmatpush1.msra.mxu0 0.0
    %242 = vmatprep.subr.mxu0 0.0
    %243 = vmatpush1.msra.mxu0 0.0
    %244 = vmatprep.subr.mxu0 0.0
    %245 = vmatpush1.msra.mxu0 0.0
    %246 = vmatprep.subr.mxu0 0.0
    %247 = vmatpush1.msra.mxu0 0.0
    %248 = vmatprep.subr.mxu0 0.0
    %249 = vmatpush1.msra.mxu0 0.0
    %250 = vmatprep.subr.mxu0 0.0
    %251 = vmatpush1.msra.mxu0 0.0
    %252 = vmatprep.subr.mxu0 0.0
    %253 = vmatpush1.msra.mxu0 0.0
    %254 = vmatprep.subr.mxu0 0.0
    %255 = vmatpush1.msra.mxu0 0.0
    %256 = vmatprep.mubr.f32.mxu0 0.0
    %257 = vmatmul.mubr.f32.gmra.mrb[0].mxu0 %v190
    %v258 = vpop.f32.mrb[0].mxu0
    %v259 = vadd.f32 0.0, %v258
    %v260 = vpop.f32.mrb[0].mxu0
    %261 = vdwg.mxu0
    %v262 = vadd.f32 %v187, %v259
    %v263 = vld [vmem:[#allocation3 + $0x38] sm:$0xff]
    %264 = vmatprep.subr.mxu0 0.0
    %265 = vmatpush1.msra.mxu0 %v183
    %266 = vmatprep.subr.mxu0 0.0
    %267 = vmatpush1.msra.mxu0 %v184
    %268 = vmatprep.subr.mxu0 0.0
    %269 = vmatpush1.msra.mxu0 %v185
    %270 = vmatprep.subr.mxu0 0.0
    %271 = vmatpush1.msra.mxu0 %v186
    %272 = vmatprep.subr.mxu0 0.0
    %273 = vmatpush1.msra.mxu0 0.0
    %274 = vmatprep.subr.mxu0 0.0
    %275 = vmatpush1.msra.mxu0 0.0
    %276 = vmatprep.subr.mxu0 0.0
    %277 = vmatpush1.msra.mxu0 0.0
    %278 = vmatprep.subr.mxu0 0.0
    %279 = vmatpush1.msra.mxu0 0.0
    %280 = vmatprep.subr.mxu0 0.0
    %281 = vmatpush1.msra.mxu0 0.0
    %282 = vmatprep.subr.mxu0 0.0
    %283 = vmatpush1.msra.mxu0 0.0
    %284 = vmatprep.subr.mxu0 0.0
    %285 = vmatpush1.msra.mxu0 0.0
    %286 = vmatprep.subr.mxu0 0.0
    %287 = vmatpush1.msra.mxu0 0.0
    %288 = vmatprep.subr.mxu0 0.0
    %289 = vmatpush1.msra.mxu0 0.0
    %290 = vmatprep.subr.mxu0 0.0
    %291 = vmatpush1.msra.mxu0 0.0
    %292 = vmatprep.subr.mxu0 0.0
    %293 = vmatpush1.msra.mxu0 0.0
    %294 = vmatprep.subr.mxu0 0.0
    %295 = vmatpush1.msra.mxu0 0.0
    %296 = vmatprep.subr.mxu0 0.0
    %297 = vmatpush1.msra.mxu0 0.0
    %298 = vmatprep.subr.mxu0 0.0
    %299 = vmatpush1.msra.mxu0 0.0
    %300 = vmatprep.subr.mxu0 0.0
    %301 = vmatpush1.msra.mxu0 0.0
    %302 = vmatprep.subr.mxu0 0.0
    %303 = vmatpush1.msra.mxu0 0.0
    %304 = vmatprep.subr.mxu0 0.0
    %305 = vmatpush1.msra.mxu0 0.0
    %306 = vmatprep.subr.mxu0 0.0
    %307 = vmatpush1.msra.mxu0 0.0
    %308 = vmatprep.subr.mxu0 0.0
    %309 = vmatpush1.msra.mxu0 0.0
    %310 = vmatprep.subr.mxu0 0.0
    %311 = vmatpush1.msra.mxu0 0.0
    %312 = vmatprep.subr.mxu0 0.0
    %313 = vmatpush1.msra.mxu0 0.0
    %314 = vmatprep.subr.mxu0 0.0
    %315 = vmatpush1.msra.mxu0 0.0
    %316 = vmatprep.subr.mxu0 0.0
    %317 = vmatpush1.msra.mxu0 0.0
    %318 = vmatprep.subr.mxu0 0.0
    %319 = vmatpush1.msra.mxu0 0.0
    %320 = vmatprep.subr.mxu0 0.0
    %321 = vmatpush1.msra.mxu0 0.0
    %322 = vmatprep.subr.mxu0 0.0
    %323 = vmatpush1.msra.mxu0 0.0
    %324 = vmatprep.subr.mxu0 0.0
    %325 = vmatpush1.msra.mxu0 0.0
    %326 = vmatprep.subr.mxu0 0.0
    %327 = vmatpush1.msra.mxu0 0.0
    %328 = vmatprep.mubr.f32.mxu0 0.0
    %329 = vmatmul.mubr.f32.gmra.mrb[0].mxu0 %v190
    %v330 = vpop.f32.mrb[0].mxu0
    %v331 = vadd.f32 0.0, %v330
    %v332 = vpop.f32.mrb[0].mxu0
    %333 = vdwg.mxu0
    %v334 = vadd.f32 %v263, %v331
    %v335 = vxor.u32 %v262, 2147483648
    %v336 = vmul.f32 %v335, 1.442695
    %v337 = vpow.pop %v336
    %v338 = vadd.f32 %v337, 1.0
    %v339 = vrcp.pop %v338
    %v340 = vmul.f32 1.0, %v339
    %v341 = vtanh.pop %v262
    %v342 = vmul.f32 %v340, 0.0
    %344 = vrot.lane.b32.xlu0 %v341, 32
    %v345 = vpop.permute.xlu0 %344
    %v347 = vmul.f32 %v340, %v345
    %349 = vrot.lane.b32.xlu0 %v347, 32
    %v350 = vpop.permute.xlu0 %349
    %v352 = vadd.f32 %v342, %v350
    %v353 = vtanh.pop %v352
    %355 = vrot.lane.b32.xlu0 %v353, 32
    %v356 = vpop.permute.xlu0 %355
    %v358 = vmul.f32 %v340, %v356
    %v359 = vxor.u32 %v334, 2147483648
    %v360 = vmul.f32 %v359, 1.442695
    %v361 = vpow.pop %v360
    %v362 = vadd.f32 %v361, 1.0
    %v363 = vrcp.pop %v362
    %v364 = vmul.f32 1.0, %v363
    %v365 = vtanh.pop %v334
    %v366 = vmul.f32 %v364, 0.0
    %368 = vrot.lane.b32.xlu0 %v365, 32
    %v369 = vpop.permute.xlu0 %368
    %v371 = vmul.f32 %v364, %v369
    %373 = vrot.lane.b32.xlu0 %v371, 32
    %v374 = vpop.permute.xlu0 %373
    %v376 = vadd.f32 %v366, %v374
    %v377 = vtanh.pop %v376
    %379 = vrot.lane.b32.xlu0 %v377, 32
    %v380 = vpop.permute.xlu0 %379
    %v382 = vmul.f32 %v364, %v380
    %384 = vrot.lane.b32.xlu0 %v358, 64
    %v385 = vpop.permute.xlu0 %384
    %387 = vst.msk [vmem:[#allocation4] sm:$0xff] %vm188, %v385
    %389 = vrot.lane.b32.xlu0 %v382, 64
    %v390 = vpop.permute.xlu0 %389
    %392 = vst.msk [vmem:[#allocation5 + $0x38] sm:$0xff] %vm188, %v390
    %v393 = vld [vmem:[#allocation2 + $0x8] sm:$0xff]
    %v394 = vsel %vm188, %v385, 0
    %396 = vmatprep.subr.mxu0 0.0
    %397 = vmatpush1.msra.mxu0 %v178
    %398 = vmatprep.subr.mxu0 0.0
    %399 = vmatpush1.msra.mxu0 %v179
    %400 = vmatprep.subr.mxu0 0.0
    %401 = vmatpush1.msra.mxu0 %v180
    %402 = vmatprep.subr.mxu0 0.0
    %403 = vmatpush1.msra.mxu0 %v181
    %404 = vmatprep.subr.mxu0 0.0
    %405 = vmatpush1.msra.mxu0 0.0
    %406 = vmatprep.subr.mxu0 0.0
    %407 = vmatpush1.msra.mxu0 0.0
    %408 = vmatprep.subr.mxu0 0.0
    %409 = vmatpush1.msra.mxu0 0.0
    %410 = vmatprep.subr.mxu0 0.0
    %411 = vmatpush1.msra.mxu0 0.0
    %412 = vmatprep.subr.mxu0 0.0
    %413 = vmatpush1.msra.mxu0 0.0
    %414 = vmatprep.subr.mxu0 0.0
    %415 = vmatpush1.msra.mxu0 0.0
    %416 = vmatprep.subr.mxu0 0.0
    %417 = vmatpush1.msra.mxu0 0.0
    %418 = vmatprep.subr.mxu0 0.0
    %419 = vmatpush1.msra.mxu0 0.0
    %420 = vmatprep.subr.mxu0 0.0
    %421 = vmatpush1.msra.mxu0 0.0
    %422 = vmatprep.subr.mxu0 0.0
    %423 = vmatpush1.msra.mxu0 0.0
    %424 = vmatprep.subr.mxu0 0.0
    %425 = vmatpush1.msra.mxu0 0.0
    %426 = vmatprep.subr.mxu0 0.0
    %427 = vmatpush1.msra.mxu0 0.0
    %428 = vmatprep.subr.mxu0 0.0
    %429 = vmatpush1.msra.mxu0 0.0
    %430 = vmatprep.subr.mxu0 0.0
    %431 = vmatpush1.msra.mxu0 0.0
    %432 = vmatprep.subr.mxu0 0.0
    %433 = vmatpush1.msra.mxu0 0.0
    %434 = vmatprep.subr.mxu0 0.0
    %435 = vmatpush1.msra.mxu0 0.0
    %436 = vmatprep.subr.mxu0 0.0
    %437 = vmatpush1.msra.mxu0 0.0
    %438 = vmatprep.subr.mxu0 0.0
    %439 = vmatpush1.msra.mxu0 0.0
    %440 = vmatprep.subr.mxu0 0.0
    %441 = vmatpush1.msra.mxu0 0.0
    %442 = vmatprep.subr.mxu0 0.0
    %443 = vmatpush1.msra.mxu0 0.0
    %444 = vmatprep.subr.mxu0 0.0
    %445 = vmatpush1.msra.mxu0 0.0
    %446 = vmatprep.subr.mxu0 0.0
    %447 = vmatpush1.msra.mxu0 0.0
    %448 = vmatprep.subr.mxu0 0.0
    %449 = vmatpush1.msra.mxu0 0.0
    %450 = vmatprep.subr.mxu0 0.0
    %451 = vmatpush1.msra.mxu0 0.0
    %452 = vmatprep.subr.mxu0 0.0
    %453 = vmatpush1.msra.mxu0 0.0
    %454 = vmatprep.subr.mxu0 0.0
    %455 = vmatpush1.msra.mxu0 0.0
    %456 = vmatprep.subr.mxu0 0.0
    %457 = vmatpush1.msra.mxu0 0.0
    %458 = vmatprep.subr.mxu0 0.0
    %459 = vmatpush1.msra.mxu0 0.0
    %460 = vmatprep.mubr.f32.mxu0 0.0
    %461 = vmatmul.mubr.f32.gmra.mrb[0].mxu0 %v394
    %v462 = vpop.f32.mrb[0].mxu0
    %v463 = vadd.f32 0.0, %v462
    %v464 = vpop.f32.mrb[0].mxu0
    %465 = vdwg.mxu0
    %v466 = vadd.f32 %v393, %v463
    %v467 = vld [vmem:[#allocation3 + $0x30] sm:$0xff]
    %v468 = vsel %vm188, %v390, 0
    %470 = vmatprep.subr.mxu0 0.0
    %471 = vmatpush1.msra.mxu0 %v183
    %472 = vmatprep.subr.mxu0 0.0
    %473 = vmatpush1.msra.mxu0 %v184
    %474 = vmatprep.subr.mxu0 0.0
    %475 = vmatpush1.msra.mxu0 %v185
    %476 = vmatprep.subr.mxu0 0.0
    %477 = vmatpush1.msra.mxu0 %v186
    %478 = vmatprep.subr.mxu0 0.0
    %479 = vmatpush1.msra.mxu0 0.0
    %480 = vmatprep.subr.mxu0 0.0
    %481 = vmatpush1.msra.mxu0 0.0
    %482 = vmatprep.subr.mxu0 0.0
    %483 = vmatpush1.msra.mxu0 0.0
    %484 = vmatprep.subr.mxu0 0.0
    %485 = vmatpush1.msra.mxu0 0.0
    %486 = vmatprep.subr.mxu0 0.0
    %487 = vmatpush1.msra.mxu0 0.0
    %488 = vmatprep.subr.mxu0 0.0
    %489 = vmatpush1.msra.mxu0 0.0
    %490 = vmatprep.subr.mxu0 0.0
    %491 = vmatpush1.msra.mxu0 0.0
    %492 = vmatprep.subr.mxu0 0.0
    %493 = vmatpush1.msra.mxu0 0.0
    %494 = vmatprep.subr.mxu0 0.0
    %495 = vmatpush1.msra.mxu0 0.0
    %496 = vmatprep.subr.mxu0 0.0
    %497 = vmatpush1.msra.mxu0 0.0
    %498 = vmatprep.subr.mxu0 0.0
    %499 = vmatpush1.msra.mxu0 0.0
    %500 = vmatprep.subr.mxu0 0.0
    %501 = vmatpush1.msra.mxu0 0.0
    %502 = vmatprep.subr.mxu0 0.0
    %503 = vmatpush1.msra.mxu0 0.0
    %504 = vmatprep.subr.mxu0 0.0
    %505 = vmatpush1.msra.mxu0 0.0
    %506 = vmatprep.subr.mxu0 0.0
    %507 = vmatpush1.msra.mxu0 0.0
    %508 = vmatprep.subr.mxu0 0.0
    %509 = vmatpush1.msra.mxu0 0.0
    %510 = vmatprep.subr.mxu0 0.0
    %511 = vmatpush1.msra.mxu0 0.0
    %512 = vmatprep.subr.mxu0 0.0
    %513 = vmatpush1.msra.mxu0 0.0
    %514 = vmatprep.subr.mxu0 0.0
    %515 = vmatpush1.msra.mxu0 0.0
    %516 = vmatprep.subr.mxu0 0.0
    %517 = vmatpush1.msra.mxu0 0.0
    %518 = vmatprep.subr.mxu0 0.0
    %519 = vmatpush1.msra.mxu0 0.0
    %520 = vmatprep.subr.mxu0 0.0
    %521 = vmatpush1.msra.mxu0 0.0
    %522 = vmatprep.subr.mxu0 0.0
    %523 = vmatpush1.msra.mxu0 0.0
    %524 = vmatprep.subr.mxu0 0.0
    %525 = vmatpush1.msra.mxu0 0.0
    %526 = vmatprep.subr.mxu0 0.0
    %527 = vmatpush1.msra.mxu0 0.0
    %528 = vmatprep.subr.mxu0 0.0
    %529 = vmatpush1.msra.mxu0 0.0
    %530 = vmatprep.subr.mxu0 0.0
    %531 = vmatpush1.msra.mxu0 0.0
    %532 = vmatprep.subr.mxu0 0.0
    %533 = vmatpush1.msra.mxu0 0.0
    %534 = vmatprep.mubr.f32.mxu0 0.0
    %535 = vmatmul.mubr.f32.gmra.mrb[0].mxu0 %v468
    %v536 = vpop.f32.mrb[0].mxu0
    %v537 = vadd.f32 0.0, %v536
    %v538 = vpop.f32.mrb[0].mxu0
    %539 = vdwg.mxu0
    %v540 = vadd.f32 %v467, %v537
    %v541 = vxor.u32 %v466, 2147483648
    %v542 = vmul.f32 %v541, 1.442695
    %v543 = vpow.pop %v542
    %v544 = vadd.f32 %v543, 1.0
    %v545 = vrcp.pop %v544
    %v546 = vmul.f32 1.0, %v545
    %v547 = vtanh.pop %v466
    %v548 = vmul.f32 %v546, %v352
    %550 = vrot.lane.b32.xlu0 %v547, 32
    %v551 = vpop.permute.xlu0 %550
    %v553 = vmul.f32 %v546, %v551
    %555 = vrot.lane.b32.xlu0 %v553, 32
    %v556 = vpop.permute.xlu0 %555
    %v558 = vadd.f32 %v548, %v556
    %v559 = vtanh.pop %v558
    %561 = vrot.lane.b32.xlu0 %v559, 32
    %v562 = vpop.permute.xlu0 %561
    %v564 = vmul.f32 %v546, %v562
    %v565 = vxor.u32 %v540, 2147483648
    %v566 = vmul.f32 %v565, 1.442695
    %v567 = vpow.pop %v566
    %v568 = vadd.f32 %v567, 1.0
    %v569 = vrcp.pop %v568
    %v570 = vmul.f32 1.0, %v569
    %v571 = vtanh.pop %v540
    %v572 = vmul.f32 %v570, %v376
    %574 = vrot.lane.b32.xlu0 %v571, 32
    %v575 = vpop.permute.xlu0 %574
    %v577 = vmul.f32 %v570, %v575
    %579 = vrot.lane.b32.xlu0 %v577, 32
    %v580 = vpop.permute.xlu0 %579
    %v582 = vadd.f32 %v572, %v580
    %v583 = vtanh.pop %v582
    %585 = vrot.lane.b32.xlu0 %v583, 32
    %v586 = vpop.permute.xlu0 %585
    %v588 = vmul.f32 %v570, %v586
    %590 = vrot.lane.b32.xlu0 %v564, 64
    %v591 = vpop.permute.xlu0 %590
    %593 = vst.msk [vmem:[#allocation4 + $0x8] sm:$0xff] %vm188, %v591
    %595 = vrot.lane.b32.xlu0 %v588, 64
    %v596 = vpop.permute.xlu0 %595
    %598 = vst.msk [vmem:[#allocation5 + $0x30] sm:$0xff] %vm188, %v596
    %v599 = vld [vmem:[#allocation2 + $0x10] sm:$0xff]
    %v600 = vsel %vm188, %v591, 0
    %602 = vmatprep.subr.mxu0 0.0
    %603 = vmatpush1.msra.mxu0 %v178
    %604 = vmatprep.subr.mxu0 0.0
    %605 = vmatpush1.msra.mxu0 %v179
    %606 = vmatprep.subr.mxu0 0.0
    %607 = vmatpush1.msra.mxu0 %v180
    %608 = vmatprep.subr.mxu0 0.0
    %609 = vmatpush1.msra.mxu0 %v181
    %610 = vmatprep.subr.mxu0 0.0
    %611 = vmatpush1.msra.mxu0 0.0
    %612 = vmatprep.subr.mxu0 0.0
    %613 = vmatpush1.msra.mxu0 0.0
    %614 = vmatprep.subr.mxu0 0.0
    %615 = vmatpush1.msra.mxu0 0.0
    %616 = vmatprep.subr.mxu0 0.0
    %617 = vmatpush1.msra.mxu0 0.0
    %618 = vmatprep.subr.mxu0 0.0
    %619 = vmatpush1.msra.mxu0 0.0
    %620 = vmatprep.subr.mxu0 0.0
    %621 = vmatpush1.msra.mxu0 0.0
    %622 = vmatprep.subr.mxu0 0.0
    %623 = vmatpush1.msra.mxu0 0.0
    %624 = vmatprep.subr.mxu0 0.0
    %625 = vmatpush1.msra.mxu0 0.0
    %626 = vmatprep.subr.mxu0 0.0
    %627 = vmatpush1.msra.mxu0 0.0
    %628 = vmatprep.subr.mxu0 0.0
    %629 = vmatpush1.msra.mxu0 0.0
    %630 = vmatprep.subr.mxu0 0.0
    %631 = vmatpush1.msra.mxu0 0.0
    %632 = vmatprep.subr.mxu0 0.0
    %633 = vmatpush1.msra.mxu0 0.0
    %634 = vmatprep.subr.mxu0 0.0
    %635 = vmatpush1.msra.mxu0 0.0
    %636 = vmatprep.subr.mxu0 0.0
    %637 = vmatpush1.msra.mxu0 0.0
    %638 = vmatprep.subr.mxu0 0.0
    %639 = vmatpush1.msra.mxu0 0.0
    %640 = vmatprep.subr.mxu0 0.0
    %641 = vmatpush1.msra.mxu0 0.0
    %642 = vmatprep.subr.mxu0 0.0
    %643 = vmatpush1.msra.mxu0 0.0
    %644 = vmatprep.subr.mxu0 0.0
    %645 = vmatpush1.msra.mxu0 0.0
    %646 = vmatprep.subr.mxu0 0.0
    %647 = vmatpush1.msra.mxu0 0.0
    %648 = vmatprep.subr.mxu0 0.0
    %649 = vmatpush1.msra.mxu0 0.0
    %650 = vmatprep.subr.mxu0 0.0
    %651 = vmatpush1.msra.mxu0 0.0
    %652 = vmatprep.subr.mxu0 0.0
    %653 = vmatpush1.msra.mxu0 0.0
    %654 = vmatprep.subr.mxu0 0.0
    %655 = vmatpush1.msra.mxu0 0.0
    %656 = vmatprep.subr.mxu0 0.0
    %657 = vmatpush1.msra.mxu0 0.0
    %658 = vmatprep.subr.mxu0 0.0
    %659 = vmatpush1.msra.mxu0 0.0
    %660 = vmatprep.subr.mxu0 0.0
    %661 = vmatpush1.msra.mxu0 0.0
    %662 = vmatprep.subr.mxu0 0.0
    %663 = vmatpush1.msra.mxu0 0.0
    %664 = vmatprep.subr.mxu0 0.0
    %665 = vmatpush1.msra.mxu0 0.0
    %666 = vmatprep.mubr.f32.mxu0 0.0
    %667 = vmatmul.mubr.f32.gmra.mrb[0].mxu0 %v600
    %v668 = vpop.f32.mrb[0].mxu0
    %v669 = vadd.f32 0.0, %v668
    %v670 = vpop.f32.mrb[0].mxu0
    %671 = vdwg.mxu0
    %v672 = vadd.f32 %v599, %v669
    %v673 = vld [vmem:[#allocation3 + $0x28] sm:$0xff]
    %v674 = vsel %vm188, %v596, 0
    %676 = vmatprep.subr.mxu0 0.0
    %677 = vmatpush1.msra.mxu0 %v183
    %678 = vmatprep.subr.mxu0 0.0
    %679 = vmatpush1.msra.mxu0 %v184
    %680 = vmatprep.subr.mxu0 0.0
    %681 = vmatpush1.msra.mxu0 %v185
    %682 = vmatprep.subr.mxu0 0.0
    %683 = vmatpush1.msra.mxu0 %v186
    %684 = vmatprep.subr.mxu0 0.0
    %685 = vmatpush1.msra.mxu0 0.0
    %686 = vmatprep.subr.mxu0 0.0
    %687 = vmatpush1.msra.mxu0 0.0
    %688 = vmatprep.subr.mxu0 0.0
    %689 = vmatpush1.msra.mxu0 0.0
    %690 = vmatprep.subr.mxu0 0.0
    %691 = vmatpush1.msra.mxu0 0.0
    %692 = vmatprep.subr.mxu0 0.0
    %693 = vmatpush1.msra.mxu0 0.0
    %694 = vmatprep.subr.mxu0 0.0
    %695 = vmatpush1.msra.mxu0 0.0
    %696 = vmatprep.subr.mxu0 0.0
    %697 = vmatpush1.msra.mxu0 0.0
    %698 = vmatprep.subr.mxu0 0.0
    %699 = vmatpush1.msra.mxu0 0.0
    %700 = vmatprep.subr.mxu0 0.0
    %701 = vmatpush1.msra.mxu0 0.0
    %702 = vmatprep.subr.mxu0 0.0
    %703 = vmatpush1.msra.mxu0 0.0
    %704 = vmatprep.subr.mxu0 0.0
    %705 = vmatpush1.msra.mxu0 0.0
    %706 = vmatprep.subr.mxu0 0.0
    %707 = vmatpush1.msra.mxu0 0.0
    %708 = vmatprep.subr.mxu0 0.0
    %709 = vmatpush1.msra.mxu0 0.0
    %710 = vmatprep.subr.mxu0 0.0
    %711 = vmatpush1.msra.mxu0 0.0
    %712 = vmatprep.subr.mxu0 0.0
    %713 = vmatpush1.msra.mxu0 0.0
    %714 = vmatprep.subr.mxu0 0.0
    %715 = vmatpush1.msra.mxu0 0.0
    %716 = vmatprep.subr.mxu0 0.0
    %717 = vmatpush1.msra.mxu0 0.0
    %718 = vmatprep.subr.mxu0 0.0
    %719 = vmatpush1.msra.mxu0 0.0
    %720 = vmatprep.subr.mxu0 0.0
    %721 = vmatpush1.msra.mxu0 0.0
    %722 = vmatprep.subr.mxu0 0.0
    %723 = vmatpush1.msra.mxu0 0.0
    %724 = vmatprep.subr.mxu0 0.0
    %725 = vmatpush1.msra.mxu0 0.0
    %726 = vmatprep.subr.mxu0 0.0
    %727 = vmatpush1.msra.mxu0 0.0
    %728 = vmatprep.subr.mxu0 0.0
    %729 = vmatpush1.msra.mxu0 0.0
    %730 = vmatprep.subr.mxu0 0.0
    %731 = vmatpush1.msra.mxu0 0.0
    %732 = vmatprep.subr.mxu0 0.0
    %733 = vmatpush1.msra.mxu0 0.0
    %734 = vmatprep.subr.mxu0 0.0
    %735 = vmatpush1.msra.mxu0 0.0
    %736 = vmatprep.subr.mxu0 0.0
    %737 = vmatpush1.msra.mxu0 0.0
    %738 = vmatprep.subr.mxu0 0.0
    %739 = vmatpush1.msra.mxu0 0.0
    %740 = vmatprep.mubr.f32.mxu0 0.0
    %741 = vmatmul.mubr.f32.gmra.mrb[0].mxu0 %v674
    %v742 = vpop.f32.mrb[0].mxu0
    %v743 = vadd.f32 0.0, %v742
    %v744 = vpop.f32.mrb[0].mxu0
    %745 = vdwg.mxu0
    %v746 = vadd.f32 %v673, %v743
    %v747 = vxor.u32 %v672, 2147483648
    %v748 = vmul.f32 %v747, 1.442695
    %v749 = vpow.pop %v748
    %v750 = vadd.f32 %v749, 1.0
    %v751 = vrcp.pop %v750
    %v752 = vmul.f32 1.0, %v751
    %v753 = vtanh.pop %v672
    %v754 = vmul.f32 %v752, %v558
    %756 = vrot.lane.b32.xlu0 %v753, 32
    %v757 = vpop.permute.xlu0 %756
    %v759 = vmul.f32 %v752, %v757
    %761 = vrot.lane.b32.xlu0 %v759, 32
    %v762 = vpop.permute.xlu0 %761
    %v764 = vadd.f32 %v754, %v762
    %v765 = vtanh.pop %v764
    %767 = vrot.lane.b32.xlu0 %v765, 32
    %v768 = vpop.permute.xlu0 %767
    %v770 = vmul.f32 %v752, %v768
    %v771 = vxor.u32 %v746, 2147483648
    %v772 = vmul.f32 %v771, 1.442695
    %v773 = vpow.pop %v772
    %v774 = vadd.f32 %v773, 1.0
    %v775 = vrcp.pop %v774
    %v776 = vmul.f32 1.0, %v775
    %v777 = vtanh.pop %v746
    %v778 = vmul.f32 %v776, %v582
    %780 = vrot.lane.b32.xlu0 %v777, 32
    %v781 = vpop.permute.xlu0 %780
    %v783 = vmul.f32 %v776, %v781
    %785 = vrot.lane.b32.xlu0 %v783, 32
    %v786 = vpop.permute.xlu0 %785
    %v788 = vadd.f32 %v778, %v786
    %v789 = vtanh.pop %v788
    %791 = vrot.lane.b32.xlu0 %v789, 32
    %v792 = vpop.permute.xlu0 %791
    %v794 = vmul.f32 %v776, %v792
    %796 = vrot.lane.b32.xlu0 %v770, 64
    %v797 = vpop.permute.xlu0 %796
    %799 = vst.msk [vmem:[#allocation4 + $0x10] sm:$0xff] %vm188, %v797
    %801 = vrot.lane.b32.xlu0 %v794, 64
    %v802 = vpop.permute.xlu0 %801
    %804 = vst.msk [vmem:[#allocation5 + $0x28] sm:$0xff] %vm188, %v802
    %v805 = vld [vmem:[#allocation2 + $0x18] sm:$0xff]
    %v806 = vsel %vm188, %v797, 0
    %808 = vmatprep.subr.mxu0 0.0
    %809 = vmatpush1.msra.mxu0 %v178
    %810 = vmatprep.subr.mxu0 0.0
    %811 = vmatpush1.msra.mxu0 %v179
    %812 = vmatprep.subr.mxu0 0.0
    %813 = vmatpush1.msra.mxu0 %v180
    %814 = vmatprep.subr.mxu0 0.0
    %815 = vmatpush1.msra.mxu0 %v181
    %816 = vmatprep.subr.mxu0 0.0
    %817 = vmatpush1.msra.mxu0 0.0
    %818 = vmatprep.subr.mxu0 0.0
    %819 = vmatpush1.msra.mxu0 0.0
    %820 = vmatprep.subr.mxu0 0.0
    %821 = vmatpush1.msra.mxu0 0.0
    %822 = vmatprep.subr.mxu0 0.0
    %823 = vmatpush1.msra.mxu0 0.0
    %824 = vmatprep.subr.mxu0 0.0
    %825 = vmatpush1.msra.mxu0 0.0
    %826 = vmatprep.subr.mxu0 0.0
    %827 = vmatpush1.msra.mxu0 0.0
    %828 = vmatprep.subr.mxu0 0.0
    %829 = vmatpush1.msra.mxu0 0.0
    %830 = vmatprep.subr.mxu0 0.0
    %831 = vmatpush1.msra.mxu0 0.0
    %832 = vmatprep.subr.mxu0 0.0
    %833 = vmatpush1.msra.mxu0 0.0
    %834 = vmatprep.subr.mxu0 0.0
    %835 = vmatpush1.msra.mxu0 0.0
    %836 = vmatprep.subr.mxu0 0.0
    %837 = vmatpush1.msra.mxu0 0.0
    %838 = vmatprep.subr.mxu0 0.0
    %839 = vmatpush1.msra.mxu0 0.0
    %840 = vmatprep.subr.mxu0 0.0
    %841 = vmatpush1.msra.mxu0 0.0
    %842 = vmatprep.subr.mxu0 0.0
    %843 = vmatpush1.msra.mxu0 0.0
    %844 = vmatprep.subr.mxu0 0.0
    %845 = vmatpush1.msra.mxu0 0.0
    %846 = vmatprep.subr.mxu0 0.0
    %847 = vmatpush1.msra.mxu0 0.0
    %848 = vmatprep.subr.mxu0 0.0
    %849 = vmatpush1.msra.mxu0 0.0
    %850 = vmatprep.subr.mxu0 0.0
    %851 = vmatpush1.msra.mxu0 0.0
    %852 = vmatprep.subr.mxu0 0.0
    %853 = vmatpush1.msra.mxu0 0.0
    %854 = vmatprep.subr.mxu0 0.0
    %855 = vmatpush1.msra.mxu0 0.0
    %856 = vmatprep.subr.mxu0 0.0
    %857 = vmatpush1.msra.mxu0 0.0
    %858 = vmatprep.subr.mxu0 0.0
    %859 = vmatpush1.msra.mxu0 0.0
    %860 = vmatprep.subr.mxu0 0.0
    %861 = vmatpush1.msra.mxu0 0.0
    %862 = vmatprep.subr.mxu0 0.0
    %863 = vmatpush1.msra.mxu0 0.0
    %864 = vmatprep.subr.mxu0 0.0
    %865 = vmatpush1.msra.mxu0 0.0
    %866 = vmatprep.subr.mxu0 0.0
    %867 = vmatpush1.msra.mxu0 0.0
    %868 = vmatprep.subr.mxu0 0.0
    %869 = vmatpush1.msra.mxu0 0.0
    %870 = vmatprep.subr.mxu0 0.0
    %871 = vmatpush1.msra.mxu0 0.0
    %872 = vmatprep.mubr.f32.mxu0 0.0
    %873 = vmatmul.mubr.f32.gmra.mrb[0].mxu0 %v806
    %v874 = vpop.f32.mrb[0].mxu0
    %v875 = vadd.f32 0.0, %v874
    %v876 = vpop.f32.mrb[0].mxu0
    %877 = vdwg.mxu0
    %v878 = vadd.f32 %v805, %v875
    %v879 = vld [vmem:[#allocation3 + $0x20] sm:$0xff]
    %v880 = vsel %vm188, %v802, 0
    %882 = vmatprep.subr.mxu0 0.0
    %883 = vmatpush1.msra.mxu0 %v183
    %884 = vmatprep.subr.mxu0 0.0
    %885 = vmatpush1.msra.mxu0 %v184
    %886 = vmatprep.subr.mxu0 0.0
    %887 = vmatpush1.msra.mxu0 %v185
    %888 = vmatprep.subr.mxu0 0.0
    %889 = vmatpush1.msra.mxu0 %v186
    %890 = vmatprep.subr.mxu0 0.0
    %891 = vmatpush1.msra.mxu0 0.0
    %892 = vmatprep.subr.mxu0 0.0
    %893 = vmatpush1.msra.mxu0 0.0
    %894 = vmatprep.subr.mxu0 0.0
    %895 = vmatpush1.msra.mxu0 0.0
    %896 = vmatprep.subr.mxu0 0.0
    %897 = vmatpush1.msra.mxu0 0.0
    %898 = vmatprep.subr.mxu0 0.0
    %899 = vmatpush1.msra.mxu0 0.0
    %900 = vmatprep.subr.mxu0 0.0
    %901 = vmatpush1.msra.mxu0 0.0
    %902 = vmatprep.subr.mxu0 0.0
    %903 = vmatpush1.msra.mxu0 0.0
    %904 = vmatprep.subr.mxu0 0.0
    %905 = vmatpush1.msra.mxu0 0.0
    %906 = vmatprep.subr.mxu0 0.0
    %907 = vmatpush1.msra.mxu0 0.0
    %908 = vmatprep.subr.mxu0 0.0
    %909 = vmatpush1.msra.mxu0 0.0
    %910 = vmatprep.subr.mxu0 0.0
    %911 = vmatpush1.msra.mxu0 0.0
    %912 = vmatprep.subr.mxu0 0.0
    %913 = vmatpush1.msra.mxu0 0.0
    %914 = vmatprep.subr.mxu0 0.0
    %915 = vmatpush1.msra.mxu0 0.0
    %916 = vmatprep.subr.mxu0 0.0
    %917 = vmatpush1.msra.mxu0 0.0
    %918 = vmatprep.subr.mxu0 0.0
    %919 = vmatpush1.msra.mxu0 0.0
    %920 = vmatprep.subr.mxu0 0.0
    %921 = vmatpush1.msra.mxu0 0.0
    %922 = vmatprep.subr.mxu0 0.0
    %923 = vmatpush1.msra.mxu0 0.0
    %924 = vmatprep.subr.mxu0 0.0
    %925 = vmatpush1.msra.mxu0 0.0
    %926 = vmatprep.subr.mxu0 0.0
    %927 = vmatpush1.msra.mxu0 0.0
    %928 = vmatprep.subr.mxu0 0.0
    %929 = vmatpush1.msra.mxu0 0.0
    %930 = vmatprep.subr.mxu0 0.0
    %931 = vmatpush1.msra.mxu0 0.0
    %932 = vmatprep.subr.mxu0 0.0
    %933 = vmatpush1.msra.mxu0 0.0
    %934 = vmatprep.subr.mxu0 0.0
    %935 = vmatpush1.msra.mxu0 0.0
    %936 = vmatprep.subr.mxu0 0.0
    %937 = vmatpush1.msra.mxu0 0.0
    %938 = vmatprep.subr.mxu0 0.0
    %939 = vmatpush1.msra.mxu0 0.0
    %940 = vmatprep.subr.mxu0 0.0
    %941 = vmatpush1.msra.mxu0 0.0
    %942 = vmatprep.subr.mxu0 0.0
    %943 = vmatpush1.msra.mxu0 0.0
    %944 = vmatprep.subr.mxu0 0.0
    %945 = vmatpush1.msra.mxu0 0.0
    %946 = vmatprep.mubr.f32.mxu0 0.0
    %947 = vmatmul.mubr.f32.gmra.mrb[0].mxu0 %v880
    %v948 = vpop.f32.mrb[0].mxu0
    %v949 = vadd.f32 0.0, %v948
    %v950 = vpop.f32.mrb[0].mxu0
    %951 = vdwg.mxu0
    %v952 = vadd.f32 %v879, %v949
    %v953 = vxor.u32 %v878, 2147483648
    %v954 = vmul.f32 %v953, 1.442695
    %v955 = vpow.pop %v954
    %v956 = vadd.f32 %v955, 1.0
    %v957 = vrcp.pop %v956
    %v958 = vmul.f32 1.0, %v957
    %v959 = vtanh.pop %v878
    %v960 = vmul.f32 %v958, %v764
    %962 = vrot.lane.b32.xlu0 %v959, 32
    %v963 = vpop.permute.xlu0 %962
    %v965 = vmul.f32 %v958, %v963
    %967 = vrot.lane.b32.xlu0 %v965, 32
    %v968 = vpop.permute.xlu0 %967
    %v970 = vadd.f32 %v960, %v968
    %v971 = vtanh.pop %v970
    %973 = vrot.lane.b32.xlu0 %v971, 32
    %v974 = vpop.permute.xlu0 %973
    %v976 = vmul.f32 %v958, %v974
    %v977 = vxor.u32 %v952, 2147483648
    %v978 = vmul.f32 %v977, 1.442695
    %v979 = vpow.pop %v978
    %v980 = vadd.f32 %v979, 1.0
    %v981 = vrcp.pop %v980
    %v982 = vmul.f32 1.0, %v981
    %v983 = vtanh.pop %v952
    %v984 = vmul.f32 %v982, %v788
    %986 = vrot.lane.b32.xlu0 %v983, 32
    %v987 = vpop.permute.xlu0 %986
    %v989 = vmul.f32 %v982, %v987
    %991 = vrot.lane.b32.xlu0 %v989, 32
    %v992 = vpop.permute.xlu0 %991
    %v994 = vadd.f32 %v984, %v992
    %v995 = vtanh.pop %v994
    %997 = vrot.lane.b32.xlu0 %v995, 32
    %v998 = vpop.permute.xlu0 %997
    %v1000 = vmul.f32 %v982, %v998
    %1002 = vrot.lane.b32.xlu0 %v976, 64
    %v1003 = vpop.permute.xlu0 %1002
    %1005 = vst.msk [vmem:[#allocation4 + $0x18] sm:$0xff] %vm188, %v1003
    %1007 = vrot.lane.b32.xlu0 %v1000, 64
    %v1008 = vpop.permute.xlu0 %1007
    %1010 = vst.msk [vmem:[#allocation5 + $0x20] sm:$0xff] %vm188, %v1008
    %v1011 = vld [vmem:[#allocation2 + $0x20] sm:$0xff]
    %v1012 = vsel %vm188, %v1003, 0
    %1014 = vmatprep.subr.mxu0 0.0
    %1015 = vmatpush1.msra.mxu0 %v178
    %1016 = vmatprep.subr.mxu0 0.0
    %1017 = vmatpush1.msra.mxu0 %v179
    %1018 = vmatprep.subr.mxu0 0.0
    %1019 = vmatpush1.msra.mxu0 %v180
    %1020 = vmatprep.subr.mxu0 0.0
    %1021 = vmatpush1.msra.mxu0 %v181
    %1022 = vmatprep.subr.mxu0 0.0
    %1023 = vmatpush1.msra.mxu0 0.0
    %1024 = vmatprep.subr.mxu0 0.0
    %1025 = vmatpush1.msra.mxu0 0.0
    %1026 = vmatprep.subr.mxu0 0.0
    %1027 = vmatpush1.msra.mxu0 0.0
    %1028 = vmatprep.subr.mxu0 0.0
    %1029 = vmatpush1.msra.mxu0 0.0
    %1030 = vmatprep.subr.mxu0 0.0
    %1031 = vmatpush1.msra.mxu0 0.0
    %1032 = vmatprep.subr.mxu0 0.0
    %1033 = vmatpush1.msra.mxu0 0.0
    %1034 = vmatprep.subr.mxu0 0.0
    %1035 = vmatpush1.msra.mxu0 0.0
    %1036 = vmatprep.subr.mxu0 0.0
    %1037 = vmatpush1.msra.mxu0 0.0
    %1038 = vmatprep.subr.mxu0 0.0
    %1039 = vmatpush1.msra.mxu0 0.0
    %1040 = vmatprep.subr.mxu0 0.0
    %1041 = vmatpush1.msra.mxu0 0.0
    %1042 = vmatprep.subr.mxu0 0.0
    %1043 = vmatpush1.msra.mxu0 0.0
    %1044 = vmatprep.subr.mxu0 0.0
    %1045 = vmatpush1.msra.mxu0 0.0
    %1046 = vmatprep.subr.mxu0 0.0
    %1047 = vmatpush1.msra.mxu0 0.0
    %1048 = vmatprep.subr.mxu0 0.0
    %1049 = vmatpush1.msra.mxu0 0.0
    %1050 = vmatprep.subr.mxu0 0.0
    %1051 = vmatpush1.msra.mxu0 0.0
    %1052 = vmatprep.subr.mxu0 0.0
    %1053 = vmatpush1.msra.mxu0 0.0
    %1054 = vmatprep.subr.mxu0 0.0
    %1055 = vmatpush1.msra.mxu0 0.0
    %1056 = vmatprep.subr.mxu0 0.0
    %1057 = vmatpush1.msra.mxu0 0.0
    %1058 = vmatprep.subr.mxu0 0.0
    %1059 = vmatpush1.msra.mxu0 0.0
    %1060 = vmatprep.subr.mxu0 0.0
    %1061 = vmatpush1.msra.mxu0 0.0
    %1062 = vmatprep.subr.mxu0 0.0
    %1063 = vmatpush1.msra.mxu0 0.0
    %1064 = vmatprep.subr.mxu0 0.0
    %1065 = vmatpush1.msra.mxu0 0.0
    %1066 = vmatprep.subr.mxu0 0.0
    %1067 = vmatpush1.msra.mxu0 0.0
    %1068 = vmatprep.subr.mxu0 0.0
    %1069 = vmatpush1.msra.mxu0 0.0
    %1070 = vmatprep.subr.mxu0 0.0
    %1071 = vmatpush1.msra.mxu0 0.0
    %1072 = vmatprep.subr.mxu0 0.0
    %1073 = vmatpush1.msra.mxu0 0.0
    %1074 = vmatprep.subr.mxu0 0.0
    %1075 = vmatpush1.msra.mxu0 0.0
    %1076 = vmatprep.subr.mxu0 0.0
    %1077 = vmatpush1.msra.mxu0 0.0
    %1078 = vmatprep.mubr.f32.mxu0 0.0
    %1079 = vmatmul.mubr.f32.gmra.mrb[0].mxu0 %v1012
    %v1080 = vpop.f32.mrb[0].mxu0
    %v1081 = vadd.f32 0.0, %v1080
    %v1082 = vpop.f32.mrb[0].mxu0
    %1083 = vdwg.mxu0
    %v1084 = vadd.f32 %v1011, %v1081
    %v1085 = vld [vmem:[#allocation3 + $0x18] sm:$0xff]
    %v1086 = vsel %vm188, %v1008, 0
    %1088 = vmatprep.subr.mxu0 0.0
    %1089 = vmatpush1.msra.mxu0 %v183
    %1090 = vmatprep.subr.mxu0 0.0
    %1091 = vmatpush1.msra.mxu0 %v184
    %1092 = vmatprep.subr.mxu0 0.0
    %1093 = vmatpush1.msra.mxu0 %v185
    %1094 = vmatprep.subr.mxu0 0.0
    %1095 = vmatpush1.msra.mxu0 %v186
    %1096 = vmatprep.subr.mxu0 0.0
    %1097 = vmatpush1.msra.mxu0 0.0
    %1098 = vmatprep.subr.mxu0 0.0
    %1099 = vmatpush1.msra.mxu0 0.0
    %1100 = vmatprep.subr.mxu0 0.0
    %1101 = vmatpush1.msra.mxu0 0.0
    %1102 = vmatprep.subr.mxu0 0.0
    %1103 = vmatpush1.msra.mxu0 0.0
    %1104 = vmatprep.subr.mxu0 0.0
    %1105 = vmatpush1.msra.mxu0 0.0
    %1106 = vmatprep.subr.mxu0 0.0
    %1107 = vmatpush1.msra.mxu0 0.0
    %1108 = vmatprep.subr.mxu0 0.0
    %1109 = vmatpush1.msra.mxu0 0.0
    %1110 = vmatprep.subr.mxu0 0.0
    %1111 = vmatpush1.msra.mxu0 0.0
    %1112 = vmatprep.subr.mxu0 0.0
    %1113 = vmatpush1.msra.mxu0 0.0
    %1114 = vmatprep.subr.mxu0 0.0
    %1115 = vmatpush1.msra.mxu0 0.0
    %1116 = vmatprep.subr.mxu0 0.0
    %1117 = vmatpush1.msra.mxu0 0.0
    %1118 = vmatprep.subr.mxu0 0.0
    %1119 = vmatpush1.msra.mxu0 0.0
    %1120 = vmatprep.subr.mxu0 0.0
    %1121 = vmatpush1.msra.mxu0 0.0
    %1122 = vmatprep.subr.mxu0 0.0
    %1123 = vmatpush1.msra.mxu0 0.0
    %1124 = vmatprep.subr.mxu0 0.0
    %1125 = vmatpush1.msra.mxu0 0.0
    %1126 = vmatprep.subr.mxu0 0.0
    %1127 = vmatpush1.msra.mxu0 0.0
    %1128 = vmatprep.subr.mxu0 0.0
    %1129 = vmatpush1.msra.mxu0 0.0
    %1130 = vmatprep.subr.mxu0 0.0
    %1131 = vmatpush1.msra.mxu0 0.0
    %1132 = vmatprep.subr.mxu0 0.0
    %1133 = vmatpush1.msra.mxu0 0.0
    %1134 = vmatprep.subr.mxu0 0.0
    %1135 = vmatpush1.msra.mxu0 0.0
    %1136 = vmatprep.subr.mxu0 0.0
    %1137 = vmatpush1.msra.mxu0 0.0
    %1138 = vmatprep.subr.mxu0 0.0
    %1139 = vmatpush1.msra.mxu0 0.0
    %1140 = vmatprep.subr.mxu0 0.0
    %1141 = vmatpush1.msra.mxu0 0.0
    %1142 = vmatprep.subr.mxu0 0.0
    %1143 = vmatpush1.msra.mxu0 0.0
    %1144 = vmatprep.subr.mxu0 0.0
    %1145 = vmatpush1.msra.mxu0 0.0
    %1146 = vmatprep.subr.mxu0 0.0
    %1147 = vmatpush1.msra.mxu0 0.0
    %1148 = vmatprep.subr.mxu0 0.0
    %1149 = vmatpush1.msra.mxu0 0.0
    %1150 = vmatprep.subr.mxu0 0.0
    %1151 = vmatpush1.msra.mxu0 0.0
    %1152 = vmatprep.mubr.f32.mxu0 0.0
    %1153 = vmatmul.mubr.f32.gmra.mrb[0].mxu0 %v1086
    %v1154 = vpop.f32.mrb[0].mxu0
    %v1155 = vadd.f32 0.0, %v1154
    %v1156 = vpop.f32.mrb[0].mxu0
    %1157 = vdwg.mxu0
    %v1158 = vadd.f32 %v1085, %v1155
    %v1159 = vxor.u32 %v1084, 2147483648
    %v1160 = vmul.f32 %v1159, 1.442695
    %v1161 = vpow.pop %v1160
    %v1162 = vadd.f32 %v1161, 1.0
    %v1163 = vrcp.pop %v1162
    %v1164 = vmul.f32 1.0, %v1163
    %v1165 = vtanh.pop %v1084
    %v1166 = vmul.f32 %v1164, %v970
    %1168 = vrot.lane.b32.xlu0 %v1165, 32
    %v1169 = vpop.permute.xlu0 %1168
    %v1171 = vmul.f32 %v1164, %v1169
    %1173 = vrot.lane.b32.xlu0 %v1171, 32
    %v1174 = vpop.permute.xlu0 %1173
    %v1176 = vadd.f32 %v1166, %v1174
    %v1177 = vtanh.pop %v1176
    %1179 = vrot.lane.b32.xlu0 %v1177, 32
    %v1180 = vpop.permute.xlu0 %1179
    %v1182 = vmul.f32 %v1164, %v1180
    %v1183 = vxor.u32 %v1158, 2147483648
    %v1184 = vmul.f32 %v1183, 1.442695
    %v1185 = vpow.pop %v1184
    %v1186 = vadd.f32 %v1185, 1.0
    %v1187 = vrcp.pop %v1186
    %v1188 = vmul.f32 1.0, %v1187
    %v1189 = vtanh.pop %v1158
    %v1190 = vmul.f32 %v1188, %v994
    %1192 = vrot.lane.b32.xlu0 %v1189, 32
    %v1193 = vpop.permute.xlu0 %1192
    %v1195 = vmul.f32 %v1188, %v1193
    %1197 = vrot.lane.b32.xlu0 %v1195, 32
    %v1198 = vpop.permute.xlu0 %1197
    %v1200 = vadd.f32 %v1190, %v1198
    %v1201 = vtanh.pop %v1200
    %1203 = vrot.lane.b32.xlu0 %v1201, 32
    %v1204 = vpop.permute.xlu0 %1203
    %v1206 = vmul.f32 %v1188, %v1204
    %1208 = vrot.lane.b32.xlu0 %v1182, 64
    %v1209 = vpop.permute.xlu0 %1208
    %1211 = vst.msk [vmem:[#allocation4 + $0x20] sm:$0xff] %vm188, %v1209
    %1213 = vrot.lane.b32.xlu0 %v1206, 64
    %v1214 = vpop.permute.xlu0 %1213
    %1216 = vst.msk [vmem:[#allocation5 + $0x18] sm:$0xff] %vm188, %v1214
    %v1217 = vld [vmem:[#allocation2 + $0x28] sm:$0xff]
    %v1218 = vsel %vm188, %v1209, 0
    %1220 = vmatprep.subr.mxu0 0.0
    %1221 = vmatpush1.msra.mxu0 %v178
    %1222 = vmatprep.subr.mxu0 0.0
    %1223 = vmatpush1.msra.mxu0 %v179
    %1224 = vmatprep.subr.mxu0 0.0
    %1225 = vmatpush1.msra.mxu0 %v180
    %1226 = vmatprep.subr.mxu0 0.0
    %1227 = vmatpush1.msra.mxu0 %v181
    %1228 = vmatprep.subr.mxu0 0.0
    %1229 = vmatpush1.msra.mxu0 0.0
    %1230 = vmatprep.subr.mxu0 0.0
    %1231 = vmatpush1.msra.mxu0 0.0
    %1232 = vmatprep.subr.mxu0 0.0
    %1233 = vmatpush1.msra.mxu0 0.0
    %1234 = vmatprep.subr.mxu0 0.0
    %1235 = vmatpush1.msra.mxu0 0.0
    %1236 = vmatprep.subr.mxu0 0.0
    %1237 = vmatpush1.msra.mxu0 0.0
    %1238 = vmatprep.subr.mxu0 0.0
    %1239 = vmatpush1.msra.mxu0 0.0
    %1240 = vmatprep.subr.mxu0 0.0
    %1241 = vmatpush1.msra.mxu0 0.0
    %1242 = vmatprep.subr.mxu0 0.0
    %1243 = vmatpush1.msra.mxu0 0.0
    %1244 = vmatprep.subr.mxu0 0.0
    %1245 = vmatpush1.msra.mxu0 0.0
    %1246 = vmatprep.subr.mxu0 0.0
    %1247 = vmatpush1.msra.mxu0 0.0
    %1248 = vmatprep.subr.mxu0 0.0
    %1249 = vmatpush1.msra.mxu0 0.0
    %1250 = vmatprep.subr.mxu0 0.0
    %1251 = vmatpush1.msra.mxu0 0.0
    %1252 = vmatprep.subr.mxu0 0.0
    %1253 = vmatpush1.msra.mxu0 0.0
    %1254 = vmatprep.subr.mxu0 0.0
    %1255 = vmatpush1.msra.mxu0 0.0
    %1256 = vmatprep.subr.mxu0 0.0
    %1257 = vmatpush1.msra.mxu0 0.0
    %1258 = vmatprep.subr.mxu0 0.0
    %1259 = vmatpush1.msra.mxu0 0.0
    %1260 = vmatprep.subr.mxu0 0.0
    %1261 = vmatpush1.msra.mxu0 0.0
    %1262 = vmatprep.subr.mxu0 0.0
    %1263 = vmatpush1.msra.mxu0 0.0
    %1264 = vmatprep.subr.mxu0 0.0
    %1265 = vmatpush1.msra.mxu0 0.0
    %1266 = vmatprep.subr.mxu0 0.0
    %1267 = vmatpush1.msra.mxu0 0.0
    %1268 = vmatprep.subr.mxu0 0.0
    %1269 = vmatpush1.msra.mxu0 0.0
    %1270 = vmatprep.subr.mxu0 0.0
    %1271 = vmatpush1.msra.mxu0 0.0
    %1272 = vmatprep.subr.mxu0 0.0
    %1273 = vmatpush1.msra.mxu0 0.0
    %1274 = vmatprep.subr.mxu0 0.0
    %1275 = vmatpush1.msra.mxu0 0.0
    %1276 = vmatprep.subr.mxu0 0.0
    %1277 = vmatpush1.msra.mxu0 0.0
    %1278 = vmatprep.subr.mxu0 0.0
    %1279 = vmatpush1.msra.mxu0 0.0
    %1280 = vmatprep.subr.mxu0 0.0
    %1281 = vmatpush1.msra.mxu0 0.0
    %1282 = vmatprep.subr.mxu0 0.0
    %1283 = vmatpush1.msra.mxu0 0.0
    %1284 = vmatprep.mubr.f32.mxu0 0.0
    %1285 = vmatmul.mubr.f32.gmra.mrb[0].mxu0 %v1218
    %v1286 = vpop.f32.mrb[0].mxu0
    %v1287 = vadd.f32 0.0, %v1286
    %v1288 = vpop.f32.mrb[0].mxu0
    %1289 = vdwg.mxu0
    %v1290 = vadd.f32 %v1217, %v1287
    %v1291 = vld [vmem:[#allocation3 + $0x10] sm:$0xff]
    %v1292 = vsel %vm188, %v1214, 0
    %1294 = vmatprep.subr.mxu0 0.0
    %1295 = vmatpush1.msra.mxu0 %v183
    %1296 = vmatprep.subr.mxu0 0.0
    %1297 = vmatpush1.msra.mxu0 %v184
    %1298 = vmatprep.subr.mxu0 0.0
    %1299 = vmatpush1.msra.mxu0 %v185
    %1300 = vmatprep.subr.mxu0 0.0
    %1301 = vmatpush1.msra.mxu0 %v186
    %1302 = vmatprep.subr.mxu0 0.0
    %1303 = vmatpush1.msra.mxu0 0.0
    %1304 = vmatprep.subr.mxu0 0.0
    %1305 = vmatpush1.msra.mxu0 0.0
    %1306 = vmatprep.subr.mxu0 0.0
    %1307 = vmatpush1.msra.mxu0 0.0
    %1308 = vmatprep.subr.mxu0 0.0
    %1309 = vmatpush1.msra.mxu0 0.0
    %1310 = vmatprep.subr.mxu0 0.0
    %1311 = vmatpush1.msra.mxu0 0.0
    %1312 = vmatprep.subr.mxu0 0.0
    %1313 = vmatpush1.msra.mxu0 0.0
    %1314 = vmatprep.subr.mxu0 0.0
    %1315 = vmatpush1.msra.mxu0 0.0
    %1316 = vmatprep.subr.mxu0 0.0
    %1317 = vmatpush1.msra.mxu0 0.0
    %1318 = vmatprep.subr.mxu0 0.0
    %1319 = vmatpush1.msra.mxu0 0.0
    %1320 = vmatprep.subr.mxu0 0.0
    %1321 = vmatpush1.msra.mxu0 0.0
    %1322 = vmatprep.subr.mxu0 0.0
    %1323 = vmatpush1.msra.mxu0 0.0
    %1324 = vmatprep.subr.mxu0 0.0
    %1325 = vmatpush1.msra.mxu0 0.0
    %1326 = vmatprep.subr.mxu0 0.0
    %1327 = vmatpush1.msra.mxu0 0.0
    %1328 = vmatprep.subr.mxu0 0.0
    %1329 = vmatpush1.msra.mxu0 0.0
    %1330 = vmatprep.subr.mxu0 0.0
    %1331 = vmatpush1.msra.mxu0 0.0
    %1332 = vmatprep.subr.mxu0 0.0
    %1333 = vmatpush1.msra.mxu0 0.0
    %1334 = vmatprep.subr.mxu0 0.0
    %1335 = vmatpush1.msra.mxu0 0.0
    %1336 = vmatprep.subr.mxu0 0.0
    %1337 = vmatpush1.msra.mxu0 0.0
    %1338 = vmatprep.subr.mxu0 0.0
    %1339 = vmatpush1.msra.mxu0 0.0
    %1340 = vmatprep.subr.mxu0 0.0
    %1341 = vmatpush1.msra.mxu0 0.0
    %1342 = vmatprep.subr.mxu0 0.0
    %1343 = vmatpush1.msra.mxu0 0.0
    %1344 = vmatprep.subr.mxu0 0.0
    %1345 = vmatpush1.msra.mxu0 0.0
    %1346 = vmatprep.subr.mxu0 0.0
    %1347 = vmatpush1.msra.mxu0 0.0
    %1348 = vmatprep.subr.mxu0 0.0
    %1349 = vmatpush1.msra.mxu0 0.0
    %1350 = vmatprep.subr.mxu0 0.0
    %1351 = vmatpush1.msra.mxu0 0.0
    %1352 = vmatprep.subr.mxu0 0.0
    %1353 = vmatpush1.msra.mxu0 0.0
    %1354 = vmatprep.subr.mxu0 0.0
    %1355 = vmatpush1.msra.mxu0 0.0
    %1356 = vmatprep.subr.mxu0 0.0
    %1357 = vmatpush1.msra.mxu0 0.0
    %1358 = vmatprep.mubr.f32.mxu0 0.0
    %1359 = vmatmul.mubr.f32.gmra.mrb[0].mxu0 %v1292
    %v1360 = vpop.f32.mrb[0].mxu0
    %v1361 = vadd.f32 0.0, %v1360
    %v1362 = vpop.f32.mrb[0].mxu0
    %1363 = vdwg.mxu0
    %v1364 = vadd.f32 %v1291, %v1361
    %v1365 = vxor.u32 %v1290, 2147483648
    %v1366 = vmul.f32 %v1365, 1.442695
    %v1367 = vpow.pop %v1366
    %v1368 = vadd.f32 %v1367, 1.0
    %v1369 = vrcp.pop %v1368
    %v1370 = vmul.f32 1.0, %v1369
    %v1371 = vtanh.pop %v1290
    %v1372 = vmul.f32 %v1370, %v1176
    %1374 = vrot.lane.b32.xlu0 %v1371, 32
    %v1375 = vpop.permute.xlu0 %1374
    %v1377 = vmul.f32 %v1370, %v1375
    %1379 = vrot.lane.b32.xlu0 %v1377, 32
    %v1380 = vpop.permute.xlu0 %1379
    %v1382 = vadd.f32 %v1372, %v1380
    %v1383 = vtanh.pop %v1382
    %1385 = vrot.lane.b32.xlu0 %v1383, 32
    %v1386 = vpop.permute.xlu0 %1385
    %v1388 = vmul.f32 %v1370, %v1386
    %v1389 = vxor.u32 %v1364, 2147483648
    %v1390 = vmul.f32 %v1389, 1.442695
    %v1391 = vpow.pop %v1390
    %v1392 = vadd.f32 %v1391, 1.0
    %v1393 = vrcp.pop %v1392
    %v1394 = vmul.f32 1.0, %v1393
    %v1395 = vtanh.pop %v1364
    %v1396 = vmul.f32 %v1394, %v1200
    %1398 = vrot.lane.b32.xlu0 %v1395, 32
    %v1399 = vpop.permute.xlu0 %1398
    %v1401 = vmul.f32 %v1394, %v1399
    %1403 = vrot.lane.b32.xlu0 %v1401, 32
    %v1404 = vpop.permute.xlu0 %1403
    %v1406 = vadd.f32 %v1396, %v1404
    %v1407 = vtanh.pop %v1406
    %1409 = vrot.lane.b32.xlu0 %v1407, 32
    %v1410 = vpop.permute.xlu0 %1409
    %v1412 = vmul.f32 %v1394, %v1410
    %1414 = vrot.lane.b32.xlu0 %v1388, 64
    %v1415 = vpop.permute.xlu0 %1414
    %1417 = vst.msk [vmem:[#allocation4 + $0x28] sm:$0xff] %vm188, %v1415
    %1419 = vrot.lane.b32.xlu0 %v1412, 64
    %v1420 = vpop.permute.xlu0 %1419
    %1422 = vst.msk [vmem:[#allocation5 + $0x10] sm:$0xff] %vm188, %v1420
    %v1423 = vld [vmem:[#allocation2 + $0x30] sm:$0xff]
    %v1424 = vsel %vm188, %v1415, 0
    %1426 = vmatprep.subr.mxu0 0.0
    %1427 = vmatpush1.msra.mxu0 %v178
    %1428 = vmatprep.subr.mxu0 0.0
    %1429 = vmatpush1.msra.mxu0 %v179
    %1430 = vmatprep.subr.mxu0 0.0
    %1431 = vmatpush1.msra.mxu0 %v180
    %1432 = vmatprep.subr.mxu0 0.0
    %1433 = vmatpush1.msra.mxu0 %v181
    %1434 = vmatprep.subr.mxu0 0.0
    %1435 = vmatpush1.msra.mxu0 0.0
    %1436 = vmatprep.subr.mxu0 0.0
    %1437 = vmatpush1.msra.mxu0 0.0
    %1438 = vmatprep.subr.mxu0 0.0
    %1439 = vmatpush1.msra.mxu0 0.0
    %1440 = vmatprep.subr.mxu0 0.0
    %1441 = vmatpush1.msra.mxu0 0.0
    %1442 = vmatprep.subr.mxu0 0.0
    %1443 = vmatpush1.msra.mxu0 0.0
    %1444 = vmatprep.subr.mxu0 0.0
    %1445 = vmatpush1.msra.mxu0 0.0
    %1446 = vmatprep.subr.mxu0 0.0
    %1447 = vmatpush1.msra.mxu0 0.0
    %1448 = vmatprep.subr.mxu0 0.0
    %1449 = vmatpush1.msra.mxu0 0.0
    %1450 = vmatprep.subr.mxu0 0.0
    %1451 = vmatpush1.msra.mxu0 0.0
    %1452 = vmatprep.subr.mxu0 0.0
    %1453 = vmatpush1.msra.mxu0 0.0
    %1454 = vmatprep.subr.mxu0 0.0
    %1455 = vmatpush1.msra.mxu0 0.0
    %1456 = vmatprep.subr.mxu0 0.0
    %1457 = vmatpush1.msra.mxu0 0.0
    %1458 = vmatprep.subr.mxu0 0.0
    %1459 = vmatpush1.msra.mxu0 0.0
    %1460 = vmatprep.subr.mxu0 0.0
    %1461 = vmatpush1.msra.mxu0 0.0
    %1462 = vmatprep.subr.mxu0 0.0
    %1463 = vmatpush1.msra.mxu0 0.0
    %1464 = vmatprep.subr.mxu0 0.0
    %1465 = vmatpush1.msra.mxu0 0.0
    %1466 = vmatprep.subr.mxu0 0.0
    %1467 = vmatpush1.msra.mxu0 0.0
    %1468 = vmatprep.subr.mxu0 0.0
    %1469 = vmatpush1.msra.mxu0 0.0
    %1470 = vmatprep.subr.mxu0 0.0
    %1471 = vmatpush1.msra.mxu0 0.0
    %1472 = vmatprep.subr.mxu0 0.0
    %1473 = vmatpush1.msra.mxu0 0.0
    %1474 = vmatprep.subr.mxu0 0.0
    %1475 = vmatpush1.msra.mxu0 0.0
    %1476 = vmatprep.subr.mxu0 0.0
    %1477 = vmatpush1.msra.mxu0 0.0
    %1478 = vmatprep.subr.mxu0 0.0
    %1479 = vmatpush1.msra.mxu0 0.0
    %1480 = vmatprep.subr.mxu0 0.0
    %1481 = vmatpush1.msra.mxu0 0.0
    %1482 = vmatprep.subr.mxu0 0.0
    %1483 = vmatpush1.msra.mxu0 0.0
    %1484 = vmatprep.subr.mxu0 0.0
    %1485 = vmatpush1.msra.mxu0 0.0
    %1486 = vmatprep.subr.mxu0 0.0
    %1487 = vmatpush1.msra.mxu0 0.0
    %1488 = vmatprep.subr.mxu0 0.0
    %1489 = vmatpush1.msra.mxu0 0.0
    %1490 = vmatprep.mubr.f32.mxu0 0.0
    %1491 = vmatmul.mubr.f32.gmra.mrb[0].mxu0 %v1424
    %v1492 = vpop.f32.mrb[0].mxu0
    %v1493 = vadd.f32 0.0, %v1492
    %v1494 = vpop.f32.mrb[0].mxu0
    %1495 = vdwg.mxu0
    %v1496 = vadd.f32 %v1423, %v1493
    %v1497 = vld [vmem:[#allocation3 + $0x8] sm:$0xff]
    %v1498 = vsel %vm188, %v1420, 0
    %1500 = vmatprep.subr.mxu0 0.0
    %1501 = vmatpush1.msra.mxu0 %v183
    %1502 = vmatprep.subr.mxu0 0.0
    %1503 = vmatpush1.msra.mxu0 %v184
    %1504 = vmatprep.subr.mxu0 0.0
    %1505 = vmatpush1.msra.mxu0 %v185
    %1506 = vmatprep.subr.mxu0 0.0
    %1507 = vmatpush1.msra.mxu0 %v186
    %1508 = vmatprep.subr.mxu0 0.0
    %1509 = vmatpush1.msra.mxu0 0.0
    %1510 = vmatprep.subr.mxu0 0.0
    %1511 = vmatpush1.msra.mxu0 0.0
    %1512 = vmatprep.subr.mxu0 0.0
    %1513 = vmatpush1.msra.mxu0 0.0
    %1514 = vmatprep.subr.mxu0 0.0
    %1515 = vmatpush1.msra.mxu0 0.0
    %1516 = vmatprep.subr.mxu0 0.0
    %1517 = vmatpush1.msra.mxu0 0.0
    %1518 = vmatprep.subr.mxu0 0.0
    %1519 = vmatpush1.msra.mxu0 0.0
    %1520 = vmatprep.subr.mxu0 0.0
    %1521 = vmatpush1.msra.mxu0 0.0
    %1522 = vmatprep.subr.mxu0 0.0
    %1523 = vmatpush1.msra.mxu0 0.0
    %1524 = vmatprep.subr.mxu0 0.0
    %1525 = vmatpush1.msra.mxu0 0.0
    %1526 = vmatprep.subr.mxu0 0.0
    %1527 = vmatpush1.msra.mxu0 0.0
    %1528 = vmatprep.subr.mxu0 0.0
    %1529 = vmatpush1.msra.mxu0 0.0
    %1530 = vmatprep.subr.mxu0 0.0
    %1531 = vmatpush1.msra.mxu0 0.0
    %1532 = vmatprep.subr.mxu0 0.0
    %1533 = vmatpush1.msra.mxu0 0.0
    %1534 = vmatprep.subr.mxu0 0.0
    %1535 = vmatpush1.msra.mxu0 0.0
    %1536 = vmatprep.subr.mxu0 0.0
    %1537 = vmatpush1.msra.mxu0 0.0
    %1538 = vmatprep.subr.mxu0 0.0
    %1539 = vmatpush1.msra.mxu0 0.0
    %1540 = vmatprep.subr.mxu0 0.0
    %1541 = vmatpush1.msra.mxu0 0.0
    %1542 = vmatprep.subr.mxu0 0.0
    %1543 = vmatpush1.msra.mxu0 0.0
    %1544 = vmatprep.subr.mxu0 0.0
    %1545 = vmatpush1.msra.mxu0 0.0
    %1546 = vmatprep.subr.mxu0 0.0
    %1547 = vmatpush1.msra.mxu0 0.0
    %1548 = vmatprep.subr.mxu0 0.0
    %1549 = vmatpush1.msra.mxu0 0.0
    %1550 = vmatprep.subr.mxu0 0.0
    %1551 = vmatpush1.msra.mxu0 0.0
    %1552 = vmatprep.subr.mxu0 0.0
    %1553 = vmatpush1.msra.mxu0 0.0
    %1554 = vmatprep.subr.mxu0 0.0
    %1555 = vmatpush1.msra.mxu0 0.0
    %1556 = vmatprep.subr.mxu0 0.0
    %1557 = vmatpush1.msra.mxu0 0.0
    %1558 = vmatprep.subr.mxu0 0.0
    %1559 = vmatpush1.msra.mxu0 0.0
    %1560 = vmatprep.subr.mxu0 0.0
    %1561 = vmatpush1.msra.mxu0 0.0
    %1562 = vmatprep.subr.mxu0 0.0
    %1563 = vmatpush1.msra.mxu0 0.0
    %1564 = vmatprep.mubr.f32.mxu0 0.0
    %1565 = vmatmul.mubr.f32.gmra.mrb[0].mxu0 %v1498
    %v1566 = vpop.f32.mrb[0].mxu0
    %v1567 = vadd.f32 0.0, %v1566
    %v1568 = vpop.f32.mrb[0].mxu0
    %1569 = vdwg.mxu0
    %v1570 = vadd.f32 %v1497, %v1567
    %v1571 = vxor.u32 %v1496, 2147483648
    %v1572 = vmul.f32 %v1571, 1.442695
    %v1573 = vpow.pop %v1572
    %v1574 = vadd.f32 %v1573, 1.0
    %v1575 = vrcp.pop %v1574
    %v1576 = vmul.f32 1.0, %v1575
    %v1577 = vtanh.pop %v1496
    %v1578 = vmul.f32 %v1576, %v1382
    %1580 = vrot.lane.b32.xlu0 %v1577, 32
    %v1581 = vpop.permute.xlu0 %1580
    %v1583 = vmul.f32 %v1576, %v1581
    %1585 = vrot.lane.b32.xlu0 %v1583, 32
    %v1586 = vpop.permute.xlu0 %1585
    %v1588 = vadd.f32 %v1578, %v1586
    %v1589 = vtanh.pop %v1588
    %1591 = vrot.lane.b32.xlu0 %v1589, 32
    %v1592 = vpop.permute.xlu0 %1591
    %v1594 = vmul.f32 %v1576, %v1592
    %v1595 = vxor.u32 %v1570, 2147483648
    %v1596 = vmul.f32 %v1595, 1.442695
    %v1597 = vpow.pop %v1596
    %v1598 = vadd.f32 %v1597, 1.0
    %v1599 = vrcp.pop %v1598
    %v1600 = vmul.f32 1.0, %v1599
    %v1601 = vtanh.pop %v1570
    %v1602 = vmul.f32 %v1600, %v1406
    %1604 = vrot.lane.b32.xlu0 %v1601, 32
    %v1605 = vpop.permute.xlu0 %1604
    %v1607 = vmul.f32 %v1600, %v1605
    %1609 = vrot.lane.b32.xlu0 %v1607, 32
    %v1610 = vpop.permute.xlu0 %1609
    %v1612 = vadd.f32 %v1602, %v1610
    %v1613 = vtanh.pop %v1612
    %1615 = vrot.lane.b32.xlu0 %v1613, 32
    %v1616 = vpop.permute.xlu0 %1615
    %v1618 = vmul.f32 %v1600, %v1616
    %1620 = vrot.lane.b32.xlu0 %v1594, 64
    %v1621 = vpop.permute.xlu0 %1620
    %1623 = vst.msk [vmem:[#allocation4 + $0x30] sm:$0xff] %vm188, %v1621
    %1625 = vrot.lane.b32.xlu0 %v1618, 64
    %v1626 = vpop.permute.xlu0 %1625
    %1628 = vst.msk [vmem:[#allocation5 + $0x8] sm:$0xff] %vm188, %v1626
    %v1629 = vld [vmem:[#allocation2 + $0x38] sm:$0xff]
    %v1630 = vsel %vm188, %v1621, 0
    %1632 = vmatprep.subr.mxu0 0.0
    %1633 = vmatpush1.msra.mxu0 %v178
    %1634 = vmatprep.subr.mxu0 0.0
    %1635 = vmatpush1.msra.mxu0 %v179
    %1636 = vmatprep.subr.mxu0 0.0
    %1637 = vmatpush1.msra.mxu0 %v180
    %1638 = vmatprep.subr.mxu0 0.0
    %1639 = vmatpush1.msra.mxu0 %v181
    %1640 = vmatprep.subr.mxu0 0.0
    %1641 = vmatpush1.msra.mxu0 0.0
    %1642 = vmatprep.subr.mxu0 0.0
    %1643 = vmatpush1.msra.mxu0 0.0
    %1644 = vmatprep.subr.mxu0 0.0
    %1645 = vmatpush1.msra.mxu0 0.0
    %1646 = vmatprep.subr.mxu0 0.0
    %1647 = vmatpush1.msra.mxu0 0.0
    %1648 = vmatprep.subr.mxu0 0.0
    %1649 = vmatpush1.msra.mxu0 0.0
    %1650 = vmatprep.subr.mxu0 0.0
    %1651 = vmatpush1.msra.mxu0 0.0
    %1652 = vmatprep.subr.mxu0 0.0
    %1653 = vmatpush1.msra.mxu0 0.0
    %1654 = vmatprep.subr.mxu0 0.0
    %1655 = vmatpush1.msra.mxu0 0.0
    %1656 = vmatprep.subr.mxu0 0.0
    %1657 = vmatpush1.msra.mxu0 0.0
    %1658 = vmatprep.subr.mxu0 0.0
    %1659 = vmatpush1.msra.mxu0 0.0
    %1660 = vmatprep.subr.mxu0 0.0
    %1661 = vmatpush1.msra.mxu0 0.0
    %1662 = vmatprep.subr.mxu0 0.0
    %1663 = vmatpush1.msra.mxu0 0.0
    %1664 = vmatprep.subr.mxu0 0.0
    %1665 = vmatpush1.msra.mxu0 0.0
    %1666 = vmatprep.subr.mxu0 0.0
    %1667 = vmatpush1.msra.mxu0 0.0
    %1668 = vmatprep.subr.mxu0 0.0
    %1669 = vmatpush1.msra.mxu0 0.0
    %1670 = vmatprep.subr.mxu0 0.0
    %1671 = vmatpush1.msra.mxu0 0.0
    %1672 = vmatprep.subr.mxu0 0.0
    %1673 = vmatpush1.msra.mxu0 0.0
    %1674 = vmatprep.subr.mxu0 0.0
    %1675 = vmatpush1.msra.mxu0 0.0
    %1676 = vmatprep.subr.mxu0 0.0
    %1677 = vmatpush1.msra.mxu0 0.0
    %1678 = vmatprep.subr.mxu0 0.0
    %1679 = vmatpush1.msra.mxu0 0.0
    %1680 = vmatprep.subr.mxu0 0.0
    %1681 = vmatpush1.msra.mxu0 0.0
    %1682 = vmatprep.subr.mxu0 0.0
    %1683 = vmatpush1.msra.mxu0 0.0
    %1684 = vmatprep.subr.mxu0 0.0
    %1685 = vmatpush1.msra.mxu0 0.0
    %1686 = vmatprep.subr.mxu0 0.0
    %1687 = vmatpush1.msra.mxu0 0.0
    %1688 = vmatprep.subr.mxu0 0.0
    %1689 = vmatpush1.msra.mxu0 0.0
    %1690 = vmatprep.subr.mxu0 0.0
    %1691 = vmatpush1.msra.mxu0 0.0
    %1692 = vmatprep.subr.mxu0 0.0
    %1693 = vmatpush1.msra.mxu0 0.0
    %1694 = vmatprep.subr.mxu0 0.0
    %1695 = vmatpush1.msra.mxu0 0.0
    %1696 = vmatprep.mubr.f32.mxu0 0.0
    %1697 = vmatmul.mubr.f32.gmra.mrb[0].mxu0 %v1630
    %v1698 = vpop.f32.mrb[0].mxu0
    %v1699 = vadd.f32 0.0, %v1698
    %v1700 = vpop.f32.mrb[0].mxu0
    %1701 = vdwg.mxu0
    %v1702 = vadd.f32 %v1629, %v1699
    %v1703 = vld [vmem:[#allocation3] sm:$0xff]
    %v1704 = vsel %vm188, %v1626, 0
    %1706 = vmatprep.subr.mxu0 0.0
    %1707 = vmatpush1.msra.mxu0 %v183
    %1708 = vmatprep.subr.mxu0 0.0
    %1709 = vmatpush1.msra.mxu0 %v184
    %1710 = vmatprep.subr.mxu0 0.0
    %1711 = vmatpush1.msra.mxu0 %v185
    %1712 = vmatprep.subr.mxu0 0.0
    %1713 = vmatpush1.msra.mxu0 %v186
    %1714 = vmatprep.subr.mxu0 0.0
    %1715 = vmatpush1.msra.mxu0 0.0
    %1716 = vmatprep.subr.mxu0 0.0
    %1717 = vmatpush1.msra.mxu0 0.0
    %1718 = vmatprep.subr.mxu0 0.0
    %1719 = vmatpush1.msra.mxu0 0.0
    %1720 = vmatprep.subr.mxu0 0.0
    %1721 = vmatpush1.msra.mxu0 0.0
    %1722 = vmatprep.subr.mxu0 0.0
    %1723 = vmatpush1.msra.mxu0 0.0
    %1724 = vmatprep.subr.mxu0 0.0
    %1725 = vmatpush1.msra.mxu0 0.0
    %1726 = vmatprep.subr.mxu0 0.0
    %1727 = vmatpush1.msra.mxu0 0.0
    %1728 = vmatprep.subr.mxu0 0.0
    %1729 = vmatpush1.msra.mxu0 0.0
    %1730 = vmatprep.subr.mxu0 0.0
    %1731 = vmatpush1.msra.mxu0 0.0
    %1732 = vmatprep.subr.mxu0 0.0
    %1733 = vmatpush1.msra.mxu0 0.0
    %1734 = vmatprep.subr.mxu0 0.0
    %1735 = vmatpush1.msra.mxu0 0.0
    %1736 = vmatprep.subr.mxu0 0.0
    %1737 = vmatpush1.msra.mxu0 0.0
    %1738 = vmatprep.subr.mxu0 0.0
    %1739 = vmatpush1.msra.mxu0 0.0
    %1740 = vmatprep.subr.mxu0 0.0
    %1741 = vmatpush1.msra.mxu0 0.0
    %1742 = vmatprep.subr.mxu0 0.0
    %1743 = vmatpush1.msra.mxu0 0.0
    %1744 = vmatprep.subr.mxu0 0.0
    %1745 = vmatpush1.msra.mxu0 0.0
    %1746 = vmatprep.subr.mxu0 0.0
    %1747 = vmatpush1.msra.mxu0 0.0
    %1748 = vmatprep.subr.mxu0 0.0
    %1749 = vmatpush1.msra.mxu0 0.0
    %1750 = vmatprep.subr.mxu0 0.0
    %1751 = vmatpush1.msra.mxu0 0.0
    %1752 = vmatprep.subr.mxu0 0.0
    %1753 = vmatpush1.msra.mxu0 0.0
    %1754 = vmatprep.subr.mxu0 0.0
    %1755 = vmatpush1.msra.mxu0 0.0
    %1756 = vmatprep.subr.mxu0 0.0
    %1757 = vmatpush1.msra.mxu0 0.0
    %1758 = vmatprep.subr.mxu0 0.0
    %1759 = vmatpush1.msra.mxu0 0.0
    %1760 = vmatprep.subr.mxu0 0.0
    %1761 = vmatpush1.msra.mxu0 0.0
    %1762 = vmatprep.subr.mxu0 0.0
    %1763 = vmatpush1.msra.mxu0 0.0
    %1764 = vmatprep.subr.mxu0 0.0
    %1765 = vmatpush1.msra.mxu0 0.0
    %1766 = vmatprep.subr.mxu0 0.0
    %1767 = vmatpush1.msra.mxu0 0.0
    %1768 = vmatprep.subr.mxu0 0.0
    %1769 = vmatpush1.msra.mxu0 0.0
    %1770 = vmatprep.mubr.f32.mxu0 0.0
    %1771 = vmatmul.mubr.f32.gmra.mrb[0].mxu0 %v1704
    %v1772 = vpop.f32.mrb[0].mxu0
    %v1773 = vadd.f32 0.0, %v1772
    %v1774 = vpop.f32.mrb[0].mxu0
    %1775 = vdwg.mxu0
    %v1776 = vadd.f32 %v1703, %v1773
    %v1777 = vxor.u32 %v1702, 2147483648
    %v1778 = vmul.f32 %v1777, 1.442695
    %v1779 = vpow.pop %v1778
    %v1780 = vadd.f32 %v1779, 1.0
    %v1781 = vrcp.pop %v1780
    %v1782 = vmul.f32 1.0, %v1781
    %v1783 = vtanh.pop %v1702
    %v1784 = vmul.f32 %v1782, %v1588
    %1786 = vrot.lane.b32.xlu0 %v1783, 32
    %v1787 = vpop.permute.xlu0 %1786
    %v1789 = vmul.f32 %v1782, %v1787
    %1791 = vrot.lane.b32.xlu0 %v1789, 32
    %v1792 = vpop.permute.xlu0 %1791
    %v1794 = vadd.f32 %v1784, %v1792
    %v1795 = vtanh.pop %v1794
    %1797 = vrot.lane.b32.xlu0 %v1795, 32
    %v1798 = vpop.permute.xlu0 %1797
    %v1800 = vmul.f32 %v1782, %v1798
    %v1801 = vxor.u32 %v1776, 2147483648
    %v1802 = vmul.f32 %v1801, 1.442695
    %v1803 = vpow.pop %v1802
    %v1804 = vadd.f32 %v1803, 1.0
    %v1805 = vrcp.pop %v1804
    %v1806 = vmul.f32 1.0, %v1805
    %v1807 = vtanh.pop %v1776
    %v1808 = vmul.f32 %v1806, %v1612
    %1810 = vrot.lane.b32.xlu0 %v1807, 32
    %v1811 = vpop.permute.xlu0 %1810
    %v1813 = vmul.f32 %v1806, %v1811
    %1815 = vrot.lane.b32.xlu0 %v1813, 32
    %v1816 = vpop.permute.xlu0 %1815
    %v1818 = vadd.f32 %v1808, %v1816
    %v1819 = vtanh.pop %v1818
    %1821 = vrot.lane.b32.xlu0 %v1819, 32
    %v1822 = vpop.permute.xlu0 %1821
    %v1824 = vmul.f32 %v1806, %v1822
    %1826 = vrot.lane.b32.xlu0 %v1800, 64
    %v1827 = vpop.permute.xlu0 %1826
    %1829 = vst.msk [vmem:[#allocation4 + $0x38] sm:$0xff] %vm188, %v1827
    %1831 = vrot.lane.b32.xlu0 %v1824, 64
    %v1832 = vpop.permute.xlu0 %1831
    %1834 = vst.msk [vmem:[#allocation5] sm:$0xff] %vm188, %v1832
    %v1835 = vld [vmem:[#allocation4] sm:$0xff]
    %v1836 = vld [vmem:[#allocation4 + $0x8] sm:$0xff]
    %v1837 = vld [vmem:[#allocation4 + $0x10] sm:$0xff]
    %v1838 = vld [vmem:[#allocation4 + $0x18] sm:$0xff]
    %v1839 = vld [vmem:[#allocation4 + $0x20] sm:$0xff]
    %v1840 = vld [vmem:[#allocation4 + $0x28] sm:$0xff]
    %v1841 = vld [vmem:[#allocation4 + $0x30] sm:$0xff]
    %v1842 = vld [vmem:[#allocation4 + $0x38] sm:$0xff]
    %v1843 = vld [vmem:[#allocation5] sm:$0xff]
    %v1844 = vld [vmem:[#allocation5 + $0x8] sm:$0xff]
    %v1845 = vld [vmem:[#allocation5 + $0x10] sm:$0xff]
    %v1846 = vld [vmem:[#allocation5 + $0x18] sm:$0xff]
    %v1847 = vld [vmem:[#allocation5 + $0x20] sm:$0xff]
    %v1848 = vld [vmem:[#allocation5 + $0x28] sm:$0xff]
    %v1849 = vld [vmem:[#allocation5 + $0x30] sm:$0xff]
    %v1850 = vld [vmem:[#allocation5 + $0x38] sm:$0xff]
    %1859 = vrot.lane.b32.xlu0 %v1843, 32
    %v1860 = vpop.permute.xlu0 %1859
    %1861 = vrot.lane.b32.xlu0 %v1844, 32
    %v1862 = vpop.permute.xlu0 %1861
    %1863 = vrot.lane.b32.xlu0 %v1845, 32
    %v1864 = vpop.permute.xlu0 %1863
    %1865 = vrot.lane.b32.xlu0 %v1846, 32
    %v1866 = vpop.permute.xlu0 %1865
    %1867 = vrot.lane.b32.xlu0 %v1847, 32
    %v1868 = vpop.permute.xlu0 %1867
    %1869 = vrot.lane.b32.xlu0 %v1848, 32
    %v1870 = vpop.permute.xlu0 %1869
    %1871 = vrot.lane.b32.xlu0 %v1849, 32
    %v1872 = vpop.permute.xlu0 %1871
    %1873 = vrot.lane.b32.xlu0 %v1850, 32
    %v1874 = vpop.permute.xlu0 %1873
    %v1883 = vsel %vm188, %v1835, %v1860
    %v1884 = vsel %vm188, %v1836, %v1862
    %v1885 = vsel %vm188, %v1837, %v1864
    %v1886 = vsel %vm188, %v1838, %v1866
    %v1887 = vsel %vm188, %v1839, %v1868
    %v1888 = vsel %vm188, %v1840, %v1870
    %v1889 = vsel %vm188, %v1841, %v1872
    %v1890 = vsel %vm188, %v1842, %v1874
    %v1891 = vld [vmem:[#allocation7] sm:$0xff]
    %v1892 = vld [vmem:[#allocation7 + $0x8] sm:$0xff]
    %v1893 = vld [vmem:[#allocation7 + $0x10] sm:$0xff]
    %v1894 = vld [vmem:[#allocation7 + $0x18] sm:$0xff]
    %v1895 = vld [vmem:[#allocation7 + $0x20] sm:$0xff]
    %v1896 = vld [vmem:[#allocation7 + $0x28] sm:$0xff]
    %v1897 = vld [vmem:[#allocation7 + $0x30] sm:$0xff]
    %v1898 = vld [vmem:[#allocation7 + $0x38] sm:$0xff]
    %v1899 = vld [vmem:[%s5] sm:$0x1]
    %v1900 = vlaneseq
    %v1901 = vshrl.u32 %v1900, 7
    %v1902 = vsub.s32 0, %v1901
    %v1903 = vrot.slane %v1899, %v1902
    %vm1904 = vcmask 523264
    %v1906 = vsel %vm1904, %v1883, 0
    %v1909 = vsel %vm1904, %v1884, 0
    %v1912 = vsel %vm1904, %v1885, 0
    %v1915 = vsel %vm1904, %v1886, 0
    %v1918 = vsel %vm1904, %v1887, 0
    %v1921 = vsel %vm1904, %v1888, 0
    %v1924 = vsel %vm1904, %v1889, 0
    %v1927 = vsel %vm1904, %v1890, 0
    %1929 = vmatprep.subr.mxu0 0.0
    %1930 = vmatpush1.msra.mxu0 %v1891
    %1931 = vmatprep.subr.mxu0 0.0
    %1932 = vmatpush1.msra.mxu0 %v1892
    %1933 = vmatprep.subr.mxu0 0.0
    %1934 = vmatpush1.msra.mxu0 %v1893
    %1935 = vmatprep.subr.mxu0 0.0
    %1936 = vmatpush1.msra.mxu0 %v1894
    %1937 = vmatprep.subr.mxu0 0.0
    %1938 = vmatpush1.msra.mxu0 %v1895
    %1939 = vmatprep.subr.mxu0 0.0
    %1940 = vmatpush1.msra.mxu0 %v1896
    %1941 = vmatprep.subr.mxu0 0.0
    %1942 = vmatpush1.msra.mxu0 %v1897
    %1943 = vmatprep.subr.mxu0 0.0
    %1944 = vmatpush1.msra.mxu0 %v1898
    %1945 = vmatprep.subr.mxu0 0.0
    %1946 = vmatpush1.msra.mxu0 0.0
    %1947 = vmatprep.subr.mxu0 0.0
    %1948 = vmatpush1.msra.mxu0 0.0
    %1949 = vmatprep.subr.mxu0 0.0
    %1950 = vmatpush1.msra.mxu0 0.0
    %1951 = vmatprep.subr.mxu0 0.0
    %1952 = vmatpush1.msra.mxu0 0.0
    %1953 = vmatprep.subr.mxu0 0.0
    %1954 = vmatpush1.msra.mxu0 0.0
    %1955 = vmatprep.subr.mxu0 0.0
    %1956 = vmatpush1.msra.mxu0 0.0
    %1957 = vmatprep.subr.mxu0 0.0
    %1958 = vmatpush1.msra.mxu0 0.0
    %1959 = vmatprep.subr.mxu0 0.0
    %1960 = vmatpush1.msra.mxu0 0.0
    %1961 = vmatprep.subr.mxu0 0.0
    %1962 = vmatpush1.msra.mxu0 0.0
    %1963 = vmatprep.subr.mxu0 0.0
    %1964 = vmatpush1.msra.mxu0 0.0
    %1965 = vmatprep.subr.mxu0 0.0
    %1966 = vmatpush1.msra.mxu0 0.0
    %1967 = vmatprep.subr.mxu0 0.0
    %1968 = vmatpush1.msra.mxu0 0.0
    %1969 = vmatprep.subr.mxu0 0.0
    %1970 = vmatpush1.msra.mxu0 0.0
    %1971 = vmatprep.subr.mxu0 0.0
    %1972 = vmatpush1.msra.mxu0 0.0
    %1973 = vmatprep.subr.mxu0 0.0
    %1974 = vmatpush1.msra.mxu0 0.0
    %1975 = vmatprep.subr.mxu0 0.0
    %1976 = vmatpush1.msra.mxu0 0.0
    %1977 = vmatprep.subr.mxu0 0.0
    %1978 = vmatpush1.msra.mxu0 0.0
    %1979 = vmatprep.subr.mxu0 0.0
    %1980 = vmatpush1.msra.mxu0 0.0
    %1981 = vmatprep.subr.mxu0 0.0
    %1982 = vmatpush1.msra.mxu0 0.0
    %1983 = vmatprep.subr.mxu0 0.0
    %1984 = vmatpush1.msra.mxu0 0.0
    %1985 = vmatprep.subr.mxu0 0.0
    %1986 = vmatpush1.msra.mxu0 0.0
    %1987 = vmatprep.subr.mxu0 0.0
    %1988 = vmatpush1.msra.mxu0 0.0
    %1989 = vmatprep.subr.mxu0 0.0
    %1990 = vmatpush1.msra.mxu0 0.0
    %1991 = vmatprep.subr.mxu0 0.0
    %1992 = vmatpush1.msra.mxu0 0.0
    %1993 = vmatprep.mubr.f32.mxu0 0.0
    %1994 = vmatmul.mubr.f32.gmra.mrb[0].mxu0 %v1906
    %v1995 = vpop.f32.mrb[0].mxu0
    %v1996 = vadd.f32 %v1903, %v1995
    %v1997 = vpop.f32.mrb[0].mxu0
    %1998 = vmatprep.mubr.f32.mxu0 0.0
    %1999 = vmatmul.mubr.f32.gmra.mrb[0].mxu0 %v1909
    %v2000 = vpop.f32.mrb[0].mxu0
    %v2001 = vadd.f32 %v1903, %v2000
    %v2002 = vpop.f32.mrb[0].mxu0
    %2003 = vmatprep.mubr.f32.mxu0 0.0
    %2004 = vmatmul.mubr.f32.gmra.mrb[0].mxu0 %v1912
    %v2005 = vpop.f32.mrb[0].mxu0
    %v2006 = vadd.f32 %v1903, %v2005
    %v2007 = vpop.f32.mrb[0].mxu0
    %2008 = vmatprep.mubr.f32.mxu0 0.0
    %2009 = vmatmul.mubr.f32.gmra.mrb[0].mxu0 %v1915
    %v2010 = vpop.f32.mrb[0].mxu0
    %v2011 = vadd.f32 %v1903, %v2010
    %v2012 = vpop.f32.mrb[0].mxu0
    %2013 = vmatprep.mubr.f32.mxu0 0.0
    %2014 = vmatmul.mubr.f32.gmra.mrb[0].mxu0 %v1918
    %v2015 = vpop.f32.mrb[0].mxu0
    %v2016 = vadd.f32 %v1903, %v2015
    %v2017 = vpop.f32.mrb[0].mxu0
    %2018 = vmatprep.mubr.f32.mxu0 0.0
    %2019 = vmatmul.mubr.f32.gmra.mrb[0].mxu0 %v1921
    %v2020 = vpop.f32.mrb[0].mxu0
    %v2021 = vadd.f32 %v1903, %v2020
    %v2022 = vpop.f32.mrb[0].mxu0
    %2023 = vmatprep.mubr.f32.mxu0 0.0
    %2024 = vmatmul.mubr.f32.gmra.mrb[0].mxu0 %v1924
    %v2025 = vpop.f32.mrb[0].mxu0
    %v2026 = vadd.f32 %v1903, %v2025
    %v2027 = vpop.f32.mrb[0].mxu0
    %2028 = vmatprep.mubr.f32.mxu0 0.0
    %2029 = vmatmul.mubr.f32.gmra.mrb[0].mxu0 %v1927
    %v2030 = vpop.f32.mrb[0].mxu0
    %v2031 = vadd.f32 %v1903, %v2030
    %v2032 = vpop.f32.mrb[0].mxu0
    %2033 = vdwg.mxu0
    %2034 = vst [vmem:[#allocation2] sm:$0xff] %v1996
    %2035 = vst [vmem:[#allocation2 + $0x8] sm:$0xff] %v2001
    %2036 = vst [vmem:[#allocation2 + $0x10] sm:$0xff] %v2006
    %2037 = vst [vmem:[#allocation2 + $0x18] sm:$0xff] %v2011
    %2038 = vst [vmem:[#allocation2 + $0x20] sm:$0xff] %v2016
    %2039 = vst [vmem:[#allocation2 + $0x28] sm:$0xff] %v2021
    %2040 = vst [vmem:[#allocation2 + $0x30] sm:$0xff] %v2026
    %2041 = vst [vmem:[#allocation2 + $0x38] sm:$0xff] %v2031
    %s2042 = scalar_lea.vmem [#allocation7], 64
    %v2043 = vld [vmem:[%s2042] sm:$0xff]
    %v2044 = vld [vmem:[%s2042 + $0x8] sm:$0xff]
    %v2045 = vld [vmem:[%s2042 + $0x10] sm:$0xff]
    %v2046 = vld [vmem:[%s2042 + $0x18] sm:$0xff]
    %v2047 = vld [vmem:[%s2042 + $0x20] sm:$0xff]
    %v2048 = vld [vmem:[%s2042 + $0x28] sm:$0xff]
    %v2049 = vld [vmem:[%s2042 + $0x30] sm:$0xff]
    %v2050 = vld [vmem:[%s2042 + $0x38] sm:$0xff]
    %v2051 = vld [vmem:[%s5 + $0x1] sm:$0x1]
    %v2052 = vlaneseq
    %v2053 = vshrl.u32 %v2052, 7
    %v2054 = vsub.s32 0, %v2053
    %v2055 = vrot.slane %v2051, %v2054
    %2056 = vmatprep.subr.mxu0 0.0
    %2057 = vmatpush1.msra.mxu0 %v2043
    %2058 = vmatprep.subr.mxu0 0.0
    %2059 = vmatpush1.msra.mxu0 %v2044
    %2060 = vmatprep.subr.mxu0 0.0
    %2061 = vmatpush1.msra.mxu0 %v2045
    %2062 = vmatprep.subr.mxu0 0.0
    %2063 = vmatpush1.msra.mxu0 %v2046
    %2064 = vmatprep.subr.mxu0 0.0
    %2065 = vmatpush1.msra.mxu0 %v2047
    %2066 = vmatprep.subr.mxu0 0.0
    %2067 = vmatpush1.msra.mxu0 %v2048
    %2068 = vmatprep.subr.mxu0 0.0
    %2069 = vmatpush1.msra.mxu0 %v2049
    %2070 = vmatprep.subr.mxu0 0.0
    %2071 = vmatpush1.msra.mxu0 %v2050
    %2072 = vmatprep.subr.mxu0 0.0
    %2073 = vmatpush1.msra.mxu0 0.0
    %2074 = vmatprep.subr.mxu0 0.0
    %2075 = vmatpush1.msra.mxu0 0.0
    %2076 = vmatprep.subr.mxu0 0.0
    %2077 = vmatpush1.msra.mxu0 0.0
    %2078 = vmatprep.subr.mxu0 0.0
    %2079 = vmatpush1.msra.mxu0 0.0
    %2080 = vmatprep.subr.mxu0 0.0
    %2081 = vmatpush1.msra.mxu0 0.0
    %2082 = vmatprep.subr.mxu0 0.0
    %2083 = vmatpush1.msra.mxu0 0.0
    %2084 = vmatprep.subr.mxu0 0.0
    %2085 = vmatpush1.msra.mxu0 0.0
    %2086 = vmatprep.subr.mxu0 0.0
    %2087 = vmatpush1.msra.mxu0 0.0
    %2088 = vmatprep.subr.mxu0 0.0
    %2089 = vmatpush1.msra.mxu0 0.0
    %2090 = vmatprep.subr.mxu0 0.0
    %2091 = vmatpush1.msra.mxu0 0.0
    %2092 = vmatprep.subr.mxu0 0.0
    %2093 = vmatpush1.msra.mxu0 0.0
    %2094 = vmatprep.subr.mxu0 0.0
    %2095 = vmatpush1.msra.mxu0 0.0
    %2096 = vmatprep.subr.mxu0 0.0
    %2097 = vmatpush1.msra.mxu0 0.0
    %2098 = vmatprep.subr.mxu0 0.0
    %2099 = vmatpush1.msra.mxu0 0.0
    %2100 = vmatprep.subr.mxu0 0.0
    %2101 = vmatpush1.msra.mxu0 0.0
    %2102 = vmatprep.subr.mxu0 0.0
    %2103 = vmatpush1.msra.mxu0 0.0
    %2104 = vmatprep.subr.mxu0 0.0
    %2105 = vmatpush1.msra.mxu0 0.0
    %2106 = vmatprep.subr.mxu0 0.0
    %2107 = vmatpush1.msra.mxu0 0.0
    %2108 = vmatprep.subr.mxu0 0.0
    %2109 = vmatpush1.msra.mxu0 0.0
    %2110 = vmatprep.subr.mxu0 0.0
    %2111 = vmatpush1.msra.mxu0 0.0
    %2112 = vmatprep.subr.mxu0 0.0
    %2113 = vmatpush1.msra.mxu0 0.0
    %2114 = vmatprep.subr.mxu0 0.0
    %2115 = vmatpush1.msra.mxu0 0.0
    %2116 = vmatprep.subr.mxu0 0.0
    %2117 = vmatpush1.msra.mxu0 0.0
    %2118 = vmatprep.subr.mxu0 0.0
    %2119 = vmatpush1.msra.mxu0 0.0
    %2120 = vmatprep.mubr.f32.mxu0 0.0
    %2121 = vmatmul.mubr.f32.gmra.mrb[0].mxu0 %v1906
    %v2122 = vpop.f32.mrb[0].mxu0
    %v2123 = vadd.f32 %v2055, %v2122
    %v2124 = vpop.f32.mrb[0].mxu0
    %2125 = vmatprep.mubr.f32.mxu0 0.0
    %2126 = vmatmul.mubr.f32.gmra.mrb[0].mxu0 %v1909
    %v2127 = vpop.f32.mrb[0].mxu0
    %v2128 = vadd.f32 %v2055, %v2127
    %v2129 = vpop.f32.mrb[0].mxu0
    %2130 = vmatprep.mubr.f32.mxu0 0.0
    %2131 = vmatmul.mubr.f32.gmra.mrb[0].mxu0 %v1912
    %v2132 = vpop.f32.mrb[0].mxu0
    %v2133 = vadd.f32 %v2055, %v2132
    %v2134 = vpop.f32.mrb[0].mxu0
    %2135 = vmatprep.mubr.f32.mxu0 0.0
    %2136 = vmatmul.mubr.f32.gmra.mrb[0].mxu0 %v1915
    %v2137 = vpop.f32.mrb[0].mxu0
    %v2138 = vadd.f32 %v2055, %v2137
    %v2139 = vpop.f32.mrb[0].mxu0
    %2140 = vmatprep.mubr.f32.mxu0 0.0
    %2141 = vmatmul.mubr.f32.gmra.mrb[0].mxu0 %v1918
    %v2142 = vpop.f32.mrb[0].mxu0
    %v2143 = vadd.f32 %v2055, %v2142
    %v2144 = vpop.f32.mrb[0].mxu0
    %2145 = vmatprep.mubr.f32.mxu0 0.0
    %2146 = vmatmul.mubr.f32.gmra.mrb[0].mxu0 %v1921
    %v2147 = vpop.f32.mrb[0].mxu0
    %v2148 = vadd.f32 %v2055, %v2147
    %v2149 = vpop.f32.mrb[0].mxu0
    %2150 = vmatprep.mubr.f32.mxu0 0.0
    %2151 = vmatmul.mubr.f32.gmra.mrb[0].mxu0 %v1924
    %v2152 = vpop.f32.mrb[0].mxu0
    %v2153 = vadd.f32 %v2055, %v2152
    %v2154 = vpop.f32.mrb[0].mxu0
    %2155 = vmatprep.mubr.f32.mxu0 0.0
    %2156 = vmatmul.mubr.f32.gmra.mrb[0].mxu0 %v1927
    %v2157 = vpop.f32.mrb[0].mxu0
    %v2158 = vadd.f32 %v2055, %v2157
    %v2159 = vpop.f32.mrb[0].mxu0
    %2160 = vdwg.mxu0
    %2161 = vst [vmem:[#allocation3] sm:$0xff] %v2123
    %2162 = vst [vmem:[#allocation3 + $0x8] sm:$0xff] %v2128
    %2163 = vst [vmem:[#allocation3 + $0x10] sm:$0xff] %v2133
    %2164 = vst [vmem:[#allocation3 + $0x18] sm:$0xff] %v2138
    %2165 = vst [vmem:[#allocation3 + $0x20] sm:$0xff] %v2143
    %2166 = vst [vmem:[#allocation3 + $0x28] sm:$0xff] %v2148
    %2167 = vst [vmem:[#allocation3 + $0x30] sm:$0xff] %v2153
    %2168 = vst [vmem:[#allocation3 + $0x38] sm:$0xff] %v2158
    %v2169 = vld [vmem:[#allocation9] sm:$0xff]
    %v2170 = vld [vmem:[#allocation9 + $0x8] sm:$0xff]
    %v2171 = vld [vmem:[#allocation9 + $0x10] sm:$0xff]
    %v2172 = vld [vmem:[#allocation9 + $0x18] sm:$0xff]
    %s2173 = scalar_lea.vmem [#allocation9], 32
    %v2174 = vld [vmem:[%s2173] sm:$0xff]
    %v2175 = vld [vmem:[%s2173 + $0x8] sm:$0xff]
    %v2176 = vld [vmem:[%s2173 + $0x10] sm:$0xff]
    %v2177 = vld [vmem:[%s2173 + $0x18] sm:$0xff]
    %v2178 = vld [vmem:[#allocation2] sm:$0xff]
    %2179 = vmatprep.subr.mxu0 0.0
    %2180 = vmatpush1.msra.mxu0 %v2169
    %2181 = vmatprep.subr.mxu0 0.0
    %2182 = vmatpush1.msra.mxu0 %v2170
    %2183 = vmatprep.subr.mxu0 0.0
    %2184 = vmatpush1.msra.mxu0 %v2171
    %2185 = vmatprep.subr.mxu0 0.0
    %2186 = vmatpush1.msra.mxu0 %v2172
    %2187 = vmatprep.subr.mxu0 0.0
    %2188 = vmatpush1.msra.mxu0 0.0
    %2189 = vmatprep.subr.mxu0 0.0
    %2190 = vmatpush1.msra.mxu0 0.0
    %2191 = vmatprep.subr.mxu0 0.0
    %2192 = vmatpush1.msra.mxu0 0.0
    %2193 = vmatprep.subr.mxu0 0.0
    %2194 = vmatpush1.msra.mxu0 0.0
    %2195 = vmatprep.subr.mxu0 0.0
    %2196 = vmatpush1.msra.mxu0 0.0
    %2197 = vmatprep.subr.mxu0 0.0
    %2198 = vmatpush1.msra.mxu0 0.0
    %2199 = vmatprep.subr.mxu0 0.0
    %2200 = vmatpush1.msra.mxu0 0.0
    %2201 = vmatprep.subr.mxu0 0.0
    %2202 = vmatpush1.msra.mxu0 0.0
    %2203 = vmatprep.subr.mxu0 0.0
    %2204 = vmatpush1.msra.mxu0 0.0
    %2205 = vmatprep.subr.mxu0 0.0
    %2206 = vmatpush1.msra.mxu0 0.0
    %2207 = vmatprep.subr.mxu0 0.0
    %2208 = vmatpush1.msra.mxu0 0.0
    %2209 = vmatprep.subr.mxu0 0.0
    %2210 = vmatpush1.msra.mxu0 0.0
    %2211 = vmatprep.subr.mxu0 0.0
    %2212 = vmatpush1.msra.mxu0 0.0
    %2213 = vmatprep.subr.mxu0 0.0
    %2214 = vmatpush1.msra.mxu0 0.0
    %2215 = vmatprep.subr.mxu0 0.0
    %2216 = vmatpush1.msra.mxu0 0.0
    %2217 = vmatprep.subr.mxu0 0.0
    %2218 = vmatpush1.msra.mxu0 0.0
    %2219 = vmatprep.subr.mxu0 0.0
    %2220 = vmatpush1.msra.mxu0 0.0
    %2221 = vmatprep.subr.mxu0 0.0
    %2222 = vmatpush1.msra.mxu0 0.0
    %2223 = vmatprep.subr.mxu0 0.0
    %2224 = vmatpush1.msra.mxu0 0.0
    %2225 = vmatprep.subr.mxu0 0.0
    %2226 = vmatpush1.msra.mxu0 0.0
    %2227 = vmatprep.subr.mxu0 0.0
    %2228 = vmatpush1.msra.mxu0 0.0
    %2229 = vmatprep.subr.mxu0 0.0
    %2230 = vmatpush1.msra.mxu0 0.0
    %2231 = vmatprep.subr.mxu0 0.0
    %2232 = vmatpush1.msra.mxu0 0.0
    %2233 = vmatprep.subr.mxu0 0.0
    %2234 = vmatpush1.msra.mxu0 0.0
    %2235 = vmatprep.subr.mxu0 0.0
    %2236 = vmatpush1.msra.mxu0 0.0
    %2237 = vmatprep.subr.mxu0 0.0
    %2238 = vmatpush1.msra.mxu0 0.0
    %2239 = vmatprep.subr.mxu0 0.0
    %2240 = vmatpush1.msra.mxu0 0.0
    %2241 = vmatprep.subr.mxu0 0.0
    %2242 = vmatpush1.msra.mxu0 0.0
    %2243 = vmatprep.mubr.f32.mxu0 0.0
    %2244 = vmatmul.mubr.f32.gmra.mrb[0].mxu0 %v190
    %v2245 = vpop.f32.mrb[0].mxu0
    %v2246 = vadd.f32 0.0, %v2245
    %v2247 = vpop.f32.mrb[0].mxu0
    %2248 = vdwg.mxu0
    %v2249 = vadd.f32 %v2178, %v2246
    %v2250 = vld [vmem:[#allocation3 + $0x38] sm:$0xff]
    %2251 = vmatprep.subr.mxu0 0.0
    %2252 = vmatpush1.msra.mxu0 %v2174
    %2253 = vmatprep.subr.mxu0 0.0
    %2254 = vmatpush1.msra.mxu0 %v2175
    %2255 = vmatprep.subr.mxu0 0.0
    %2256 = vmatpush1.msra.mxu0 %v2176
    %2257 = vmatprep.subr.mxu0 0.0
    %2258 = vmatpush1.msra.mxu0 %v2177
    %2259 = vmatprep.subr.mxu0 0.0
    %2260 = vmatpush1.msra.mxu0 0.0
    %2261 = vmatprep.subr.mxu0 0.0
    %2262 = vmatpush1.msra.mxu0 0.0
    %2263 = vmatprep.subr.mxu0 0.0
    %2264 = vmatpush1.msra.mxu0 0.0
    %2265 = vmatprep.subr.mxu0 0.0
    %2266 = vmatpush1.msra.mxu0 0.0
    %2267 = vmatprep.subr.mxu0 0.0
    %2268 = vmatpush1.msra.mxu0 0.0
    %2269 = vmatprep.subr.mxu0 0.0
    %2270 = vmatpush1.msra.mxu0 0.0
    %2271 = vmatprep.subr.mxu0 0.0
    %2272 = vmatpush1.msra.mxu0 0.0
    %2273 = vmatprep.subr.mxu0 0.0
    %2274 = vmatpush1.msra.mxu0 0.0
    %2275 = vmatprep.subr.mxu0 0.0
    %2276 = vmatpush1.msra.mxu0 0.0
    %2277 = vmatprep.subr.mxu0 0.0
    %2278 = vmatpush1.msra.mxu0 0.0
    %2279 = vmatprep.subr.mxu0 0.0
    %2280 = vmatpush1.msra.mxu0 0.0
    %2281 = vmatprep.subr.mxu0 0.0
    %2282 = vmatpush1.msra.mxu0 0.0
    %2283 = vmatprep.subr.mxu0 0.0
    %2284 = vmatpush1.msra.mxu0 0.0
    %2285 = vmatprep.subr.mxu0 0.0
    %2286 = vmatpush1.msra.mxu0 0.0
    %2287 = vmatprep.subr.mxu0 0.0
    %2288 = vmatpush1.msra.mxu0 0.0
    %2289 = vmatprep.subr.mxu0 0.0
    %2290 = vmatpush1.msra.mxu0 0.0
    %2291 = vmatprep.subr.mxu0 0.0
    %2292 = vmatpush1.msra.mxu0 0.0
    %2293 = vmatprep.subr.mxu0 0.0
    %2294 = vmatpush1.msra.mxu0 0.0
    %2295 = vmatprep.subr.mxu0 0.0
    %2296 = vmatpush1.msra.mxu0 0.0
    %2297 = vmatprep.subr.mxu0 0.0
    %2298 = vmatpush1.msra.mxu0 0.0
    %2299 = vmatprep.subr.mxu0 0.0
    %2300 = vmatpush1.msra.mxu0 0.0
    %2301 = vmatprep.subr.mxu0 0.0
    %2302 = vmatpush1.msra.mxu0 0.0
    %2303 = vmatprep.subr.mxu0 0.0
    %2304 = vmatpush1.msra.mxu0 0.0
    %2305 = vmatprep.subr.mxu0 0.0
    %2306 = vmatpush1.msra.mxu0 0.0
    %2307 = vmatprep.subr.mxu0 0.0
    %2308 = vmatpush1.msra.mxu0 0.0
    %2309 = vmatprep.subr.mxu0 0.0
    %2310 = vmatpush1.msra.mxu0 0.0
    %2311 = vmatprep.subr.mxu0 0.0
    %2312 = vmatpush1.msra.mxu0 0.0
    %2313 = vmatprep.subr.mxu0 0.0
    %2314 = vmatpush1.msra.mxu0 0.0
    %2315 = vmatprep.mubr.f32.mxu0 0.0
    %2316 = vmatmul.mubr.f32.gmra.mrb[0].mxu0 %v190
    %v2317 = vpop.f32.mrb[0].mxu0
    %v2318 = vadd.f32 0.0, %v2317
    %v2319 = vpop.f32.mrb[0].mxu0
    %2320 = vdwg.mxu0
    %v2321 = vadd.f32 %v2250, %v2318
    %v2322 = vxor.u32 %v2249, 2147483648
    %v2323 = vmul.f32 %v2322, 1.442695
    %v2324 = vpow.pop %v2323
    %v2325 = vadd.f32 %v2324, 1.0
    %v2326 = vrcp.pop %v2325
    %v2327 = vmul.f32 1.0, %v2326
    %v2328 = vtanh.pop %v2249
    %v2329 = vmul.f32 %v2327, 0.0
    %2331 = vrot.lane.b32.xlu0 %v2328, 32
    %v2332 = vpop.permute.xlu0 %2331
    %v2334 = vmul.f32 %v2327, %v2332
    %2336 = vrot.lane.b32.xlu0 %v2334, 32
    %v2337 = vpop.permute.xlu0 %2336
    %v2339 = vadd.f32 %v2329, %v2337
    %v2340 = vtanh.pop %v2339
    %2342 = vrot.lane.b32.xlu0 %v2340, 32
    %v2343 = vpop.permute.xlu0 %2342
    %v2345 = vmul.f32 %v2327, %v2343
    %v2346 = vxor.u32 %v2321, 2147483648
    %v2347 = vmul.f32 %v2346, 1.442695
    %v2348 = vpow.pop %v2347
    %v2349 = vadd.f32 %v2348, 1.0
    %v2350 = vrcp.pop %v2349
    %v2351 = vmul.f32 1.0, %v2350
    %v2352 = vtanh.pop %v2321
    %v2353 = vmul.f32 %v2351, 0.0
    %2355 = vrot.lane.b32.xlu0 %v2352, 32
    %v2356 = vpop.permute.xlu0 %2355
    %v2358 = vmul.f32 %v2351, %v2356
    %2360 = vrot.lane.b32.xlu0 %v2358, 32
    %v2361 = vpop.permute.xlu0 %2360
    %v2363 = vadd.f32 %v2353, %v2361
    %v2364 = vtanh.pop %v2363
    %2366 = vrot.lane.b32.xlu0 %v2364, 32
    %v2367 = vpop.permute.xlu0 %2366
    %v2369 = vmul.f32 %v2351, %v2367
    %v2370 = vld [vmem:[#allocation2 + $0x8] sm:$0xff]
    %2372 = vrot.lane.b32.xlu0 %v2345, 64
    %v2373 = vpop.permute.xlu0 %2372
    %v2374 = vsel %vm188, %v2373, 0
    %2376 = vmatprep.subr.mxu0 0.0
    %2377 = vmatpush1.msra.mxu0 %v2169
    %2378 = vmatprep.subr.mxu0 0.0
    %2379 = vmatpush1.msra.mxu0 %v2170
    %2380 = vmatprep.subr.mxu0 0.0
    %2381 = vmatpush1.msra.mxu0 %v2171
    %2382 = vmatprep.subr.mxu0 0.0
    %2383 = vmatpush1.msra.mxu0 %v2172
    %2384 = vmatprep.subr.mxu0 0.0
    %2385 = vmatpush1.msra.mxu0 0.0
    %2386 = vmatprep.subr.mxu0 0.0
    %2387 = vmatpush1.msra.mxu0 0.0
    %2388 = vmatprep.subr.mxu0 0.0
    %2389 = vmatpush1.msra.mxu0 0.0
    %2390 = vmatprep.subr.mxu0 0.0
    %2391 = vmatpush1.msra.mxu0 0.0
    %2392 = vmatprep.subr.mxu0 0.0
    %2393 = vmatpush1.msra.mxu0 0.0
    %2394 = vmatprep.subr.mxu0 0.0
    %2395 = vmatpush1.msra.mxu0 0.0
    %2396 = vmatprep.subr.mxu0 0.0
    %2397 = vmatpush1.msra.mxu0 0.0
    %2398 = vmatprep.subr.mxu0 0.0
    %2399 = vmatpush1.msra.mxu0 0.0
    %2400 = vmatprep.subr.mxu0 0.0
    %2401 = vmatpush1.msra.mxu0 0.0
    %2402 = vmatprep.subr.mxu0 0.0
    %2403 = vmatpush1.msra.mxu0 0.0
    %2404 = vmatprep.subr.mxu0 0.0
    %2405 = vmatpush1.msra.mxu0 0.0
    %2406 = vmatprep.subr.mxu0 0.0
    %2407 = vmatpush1.msra.mxu0 0.0
    %2408 = vmatprep.subr.mxu0 0.0
    %2409 = vmatpush1.msra.mxu0 0.0
    %2410 = vmatprep.subr.mxu0 0.0
    %2411 = vmatpush1.msra.mxu0 0.0
    %2412 = vmatprep.subr.mxu0 0.0
    %2413 = vmatpush1.msra.mxu0 0.0
    %2414 = vmatprep.subr.mxu0 0.0
    %2415 = vmatpush1.msra.mxu0 0.0
    %2416 = vmatprep.subr.mxu0 0.0
    %2417 = vmatpush1.msra.mxu0 0.0
    %2418 = vmatprep.subr.mxu0 0.0
    %2419 = vmatpush1.msra.mxu0 0.0
    %2420 = vmatprep.subr.mxu0 0.0
    %2421 = vmatpush1.msra.mxu0 0.0
    %2422 = vmatprep.subr.mxu0 0.0
    %2423 = vmatpush1.msra.mxu0 0.0
    %2424 = vmatprep.subr.mxu0 0.0
    %2425 = vmatpush1.msra.mxu0 0.0
    %2426 = vmatprep.subr.mxu0 0.0
    %2427 = vmatpush1.msra.mxu0 0.0
    %2428 = vmatprep.subr.mxu0 0.0
    %2429 = vmatpush1.msra.mxu0 0.0
    %2430 = vmatprep.subr.mxu0 0.0
    %2431 = vmatpush1.msra.mxu0 0.0
    %2432 = vmatprep.subr.mxu0 0.0
    %2433 = vmatpush1.msra.mxu0 0.0
    %2434 = vmatprep.subr.mxu0 0.0
    %2435 = vmatpush1.msra.mxu0 0.0
    %2436 = vmatprep.subr.mxu0 0.0
    %2437 = vmatpush1.msra.mxu0 0.0
    %2438 = vmatprep.subr.mxu0 0.0
    %2439 = vmatpush1.msra.mxu0 0.0
    %2440 = vmatprep.mubr.f32.mxu0 0.0
    %2441 = vmatmul.mubr.f32.gmra.mrb[0].mxu0 %v2374
    %v2442 = vpop.f32.mrb[0].mxu0
    %v2443 = vadd.f32 0.0, %v2442
    %v2444 = vpop.f32.mrb[0].mxu0
    %2445 = vdwg.mxu0
    %v2446 = vadd.f32 %v2370, %v2443
    %v2447 = vld [vmem:[#allocation3 + $0x30] sm:$0xff]
    %2449 = vrot.lane.b32.xlu0 %v2369, 64
    %v2450 = vpop.permute.xlu0 %2449
    %v2451 = vsel %vm188, %v2450, 0
    %2453 = vmatprep.subr.mxu0 0.0
    %2454 = vmatpush1.msra.mxu0 %v2174
    %2455 = vmatprep.subr.mxu0 0.0
    %2456 = vmatpush1.msra.mxu0 %v2175
    %2457 = vmatprep.subr.mxu0 0.0
    %2458 = vmatpush1.msra.mxu0 %v2176
    %2459 = vmatprep.subr.mxu0 0.0
    %2460 = vmatpush1.msra.mxu0 %v2177
    %2461 = vmatprep.subr.mxu0 0.0
    %2462 = vmatpush1.msra.mxu0 0.0
    %2463 = vmatprep.subr.mxu0 0.0
    %2464 = vmatpush1.msra.mxu0 0.0
    %2465 = vmatprep.subr.mxu0 0.0
    %2466 = vmatpush1.msra.mxu0 0.0
    %2467 = vmatprep.subr.mxu0 0.0
    %2468 = vmatpush1.msra.mxu0 0.0
    %2469 = vmatprep.subr.mxu0 0.0
    %2470 = vmatpush1.msra.mxu0 0.0
    %2471 = vmatprep.subr.mxu0 0.0
    %2472 = vmatpush1.msra.mxu0 0.0
    %2473 = vmatprep.subr.mxu0 0.0
    %2474 = vmatpush1.msra.mxu0 0.0
    %2475 = vmatprep.subr.mxu0 0.0
    %2476 = vmatpush1.msra.mxu0 0.0
    %2477 = vmatprep.subr.mxu0 0.0
    %2478 = vmatpush1.msra.mxu0 0.0
    %2479 = vmatprep.subr.mxu0 0.0
    %2480 = vmatpush1.msra.mxu0 0.0
    %2481 = vmatprep.subr.mxu0 0.0
    %2482 = vmatpush1.msra.mxu0 0.0
    %2483 = vmatprep.subr.mxu0 0.0
    %2484 = vmatpush1.msra.mxu0 0.0
    %2485 = vmatprep.subr.mxu0 0.0
    %2486 = vmatpush1.msra.mxu0 0.0
    %2487 = vmatprep.subr.mxu0 0.0
    %2488 = vmatpush1.msra.mxu0 0.0
    %2489 = vmatprep.subr.mxu0 0.0
    %2490 = vmatpush1.msra.mxu0 0.0
    %2491 = vmatprep.subr.mxu0 0.0
    %2492 = vmatpush1.msra.mxu0 0.0
    %2493 = vmatprep.subr.mxu0 0.0
    %2494 = vmatpush1.msra.mxu0 0.0
    %2495 = vmatprep.subr.mxu0 0.0
    %2496 = vmatpush1.msra.mxu0 0.0
    %2497 = vmatprep.subr.mxu0 0.0
    %2498 = vmatpush1.msra.mxu0 0.0
    %2499 = vmatprep.subr.mxu0 0.0
    %2500 = vmatpush1.msra.mxu0 0.0
    %2501 = vmatprep.subr.mxu0 0.0
    %2502 = vmatpush1.msra.mxu0 0.0
    %2503 = vmatprep.subr.mxu0 0.0
    %2504 = vmatpush1.msra.mxu0 0.0
    %2505 = vmatprep.subr.mxu0 0.0
    %2506 = vmatpush1.msra.mxu0 0.0
    %2507 = vmatprep.subr.mxu0 0.0
    %2508 = vmatpush1.msra.mxu0 0.0
    %2509 = vmatprep.subr.mxu0 0.0
    %2510 = vmatpush1.msra.mxu0 0.0
    %2511 = vmatprep.subr.mxu0 0.0
    %2512 = vmatpush1.msra.mxu0 0.0
    %2513 = vmatprep.subr.mxu0 0.0
    %2514 = vmatpush1.msra.mxu0 0.0
    %2515 = vmatprep.subr.mxu0 0.0
    %2516 = vmatpush1.msra.mxu0 0.0
    %2517 = vmatprep.mubr.f32.mxu0 0.0
    %2518 = vmatmul.mubr.f32.gmra.mrb[0].mxu0 %v2451
    %v2519 = vpop.f32.mrb[0].mxu0
    %v2520 = vadd.f32 0.0, %v2519
    %v2521 = vpop.f32.mrb[0].mxu0
    %2522 = vdwg.mxu0
    %v2523 = vadd.f32 %v2447, %v2520
    %v2524 = vxor.u32 %v2446, 2147483648
    %v2525 = vmul.f32 %v2524, 1.442695
    %v2526 = vpow.pop %v2525
    %v2527 = vadd.f32 %v2526, 1.0
    %v2528 = vrcp.pop %v2527
    %v2529 = vmul.f32 1.0, %v2528
    %v2530 = vtanh.pop %v2446
    %v2531 = vmul.f32 %v2529, %v2339
    %2533 = vrot.lane.b32.xlu0 %v2530, 32
    %v2534 = vpop.permute.xlu0 %2533
    %v2536 = vmul.f32 %v2529, %v2534
    %2538 = vrot.lane.b32.xlu0 %v2536, 32
    %v2539 = vpop.permute.xlu0 %2538
    %v2541 = vadd.f32 %v2531, %v2539
    %v2542 = vtanh.pop %v2541
    %2544 = vrot.lane.b32.xlu0 %v2542, 32
    %v2545 = vpop.permute.xlu0 %2544
    %v2547 = vmul.f32 %v2529, %v2545
    %v2548 = vxor.u32 %v2523, 2147483648
    %v2549 = vmul.f32 %v2548, 1.442695
    %v2550 = vpow.pop %v2549
    %v2551 = vadd.f32 %v2550, 1.0
    %v2552 = vrcp.pop %v2551
    %v2553 = vmul.f32 1.0, %v2552
    %v2554 = vtanh.pop %v2523
    %v2555 = vmul.f32 %v2553, %v2363
    %2557 = vrot.lane.b32.xlu0 %v2554, 32
    %v2558 = vpop.permute.xlu0 %2557
    %v2560 = vmul.f32 %v2553, %v2558
    %2562 = vrot.lane.b32.xlu0 %v2560, 32
    %v2563 = vpop.permute.xlu0 %2562
    %v2565 = vadd.f32 %v2555, %v2563
    %v2566 = vtanh.pop %v2565
    %2568 = vrot.lane.b32.xlu0 %v2566, 32
    %v2569 = vpop.permute.xlu0 %2568
    %v2571 = vmul.f32 %v2553, %v2569
    %v2572 = vld [vmem:[#allocation2 + $0x10] sm:$0xff]
    %2574 = vrot.lane.b32.xlu0 %v2547, 64
    %v2575 = vpop.permute.xlu0 %2574
    %v2576 = vsel %vm188, %v2575, 0
    %2578 = vmatprep.subr.mxu0 0.0
    %2579 = vmatpush1.msra.mxu0 %v2169
    %2580 = vmatprep.subr.mxu0 0.0
    %2581 = vmatpush1.msra.mxu0 %v2170
    %2582 = vmatprep.subr.mxu0 0.0
    %2583 = vmatpush1.msra.mxu0 %v2171
    %2584 = vmatprep.subr.mxu0 0.0
    %2585 = vmatpush1.msra.mxu0 %v2172
    %2586 = vmatprep.subr.mxu0 0.0
    %2587 = vmatpush1.msra.mxu0 0.0
    %2588 = vmatprep.subr.mxu0 0.0
    %2589 = vmatpush1.msra.mxu0 0.0
    %2590 = vmatprep.subr.mxu0 0.0
    %2591 = vmatpush1.msra.mxu0 0.0
    %2592 = vmatprep.subr.mxu0 0.0
    %2593 = vmatpush1.msra.mxu0 0.0
    %2594 = vmatprep.subr.mxu0 0.0
    %2595 = vmatpush1.msra.mxu0 0.0
    %2596 = vmatprep.subr.mxu0 0.0
    %2597 = vmatpush1.msra.mxu0 0.0
    %2598 = vmatprep.subr.mxu0 0.0
    %2599 = vmatpush1.msra.mxu0 0.0
    %2600 = vmatprep.subr.mxu0 0.0
    %2601 = vmatpush1.msra.mxu0 0.0
    %2602 = vmatprep.subr.mxu0 0.0
    %2603 = vmatpush1.msra.mxu0 0.0
    %2604 = vmatprep.subr.mxu0 0.0
    %2605 = vmatpush1.msra.mxu0 0.0
    %2606 = vmatprep.subr.mxu0 0.0
    %2607 = vmatpush1.msra.mxu0 0.0
    %2608 = vmatprep.subr.mxu0 0.0
    %2609 = vmatpush1.msra.mxu0 0.0
    %2610 = vmatprep.subr.mxu0 0.0
    %2611 = vmatpush1.msra.mxu0 0.0
    %2612 = vmatprep.subr.mxu0 0.0
    %2613 = vmatpush1.msra.mxu0 0.0
    %2614 = vmatprep.subr.mxu0 0.0
    %2615 = vmatpush1.msra.mxu0 0.0
    %2616 = vmatprep.subr.mxu0 0.0
    %2617 = vmatpush1.msra.mxu0 0.0
    %2618 = vmatprep.subr.mxu0 0.0
    %2619 = vmatpush1.msra.mxu0 0.0
    %2620 = vmatprep.subr.mxu0 0.0
    %2621 = vmatpush1.msra.mxu0 0.0
    %2622 = vmatprep.subr.mxu0 0.0
    %2623 = vmatpush1.msra.mxu0 0.0
    %2624 = vmatprep.subr.mxu0 0.0
    %2625 = vmatpush1.msra.mxu0 0.0
    %2626 = vmatprep.subr.mxu0 0.0
    %2627 = vmatpush1.msra.mxu0 0.0
    %2628 = vmatprep.subr.mxu0 0.0
    %2629 = vmatpush1.msra.mxu0 0.0
    %2630 = vmatprep.subr.mxu0 0.0
    %2631 = vmatpush1.msra.mxu0 0.0
    %2632 = vmatprep.subr.mxu0 0.0
    %2633 = vmatpush1.msra.mxu0 0.0
    %2634 = vmatprep.subr.mxu0 0.0
    %2635 = vmatpush1.msra.mxu0 0.0
    %2636 = vmatprep.subr.mxu0 0.0
    %2637 = vmatpush1.msra.mxu0 0.0
    %2638 = vmatprep.subr.mxu0 0.0
    %2639 = vmatpush1.msra.mxu0 0.0
    %2640 = vmatprep.subr.mxu0 0.0
    %2641 = vmatpush1.msra.mxu0 0.0
    %2642 = vmatprep.mubr.f32.mxu0 0.0
    %2643 = vmatmul.mubr.f32.gmra.mrb[0].mxu0 %v2576
    %v2644 = vpop.f32.mrb[0].mxu0
    %v2645 = vadd.f32 0.0, %v2644
    %v2646 = vpop.f32.mrb[0].mxu0
    %2647 = vdwg.mxu0
    %v2648 = vadd.f32 %v2572, %v2645
    %v2649 = vld [vmem:[#allocation3 + $0x28] sm:$0xff]
    %2651 = vrot.lane.b32.xlu0 %v2571, 64
    %v2652 = vpop.permute.xlu0 %2651
    %v2653 = vsel %vm188, %v2652, 0
    %2655 = vmatprep.subr.mxu0 0.0
    %2656 = vmatpush1.msra.mxu0 %v2174
    %2657 = vmatprep.subr.mxu0 0.0
    %2658 = vmatpush1.msra.mxu0 %v2175
    %2659 = vmatprep.subr.mxu0 0.0
    %2660 = vmatpush1.msra.mxu0 %v2176
    %2661 = vmatprep.subr.mxu0 0.0
    %2662 = vmatpush1.msra.mxu0 %v2177
    %2663 = vmatprep.subr.mxu0 0.0
    %2664 = vmatpush1.msra.mxu0 0.0
    %2665 = vmatprep.subr.mxu0 0.0
    %2666 = vmatpush1.msra.mxu0 0.0
    %2667 = vmatprep.subr.mxu0 0.0
    %2668 = vmatpush1.msra.mxu0 0.0
    %2669 = vmatprep.subr.mxu0 0.0
    %2670 = vmatpush1.msra.mxu0 0.0
    %2671 = vmatprep.subr.mxu0 0.0
    %2672 = vmatpush1.msra.mxu0 0.0
    %2673 = vmatprep.subr.mxu0 0.0
    %2674 = vmatpush1.msra.mxu0 0.0
    %2675 = vmatprep.subr.mxu0 0.0
    %2676 = vmatpush1.msra.mxu0 0.0
    %2677 = vmatprep.subr.mxu0 0.0
    %2678 = vmatpush1.msra.mxu0 0.0
    %2679 = vmatprep.subr.mxu0 0.0
    %2680 = vmatpush1.msra.mxu0 0.0
    %2681 = vmatprep.subr.mxu0 0.0
    %2682 = vmatpush1.msra.mxu0 0.0
    %2683 = vmatprep.subr.mxu0 0.0
    %2684 = vmatpush1.msra.mxu0 0.0
    %2685 = vmatprep.subr.mxu0 0.0
    %2686 = vmatpush1.msra.mxu0 0.0
    %2687 = vmatprep.subr.mxu0 0.0
    %2688 = vmatpush1.msra.mxu0 0.0
    %2689 = vmatprep.subr.mxu0 0.0
    %2690 = vmatpush1.msra.mxu0 0.0
    %2691 = vmatprep.subr.mxu0 0.0
    %2692 = vmatpush1.msra.mxu0 0.0
    %2693 = vmatprep.subr.mxu0 0.0
    %2694 = vmatpush1.msra.mxu0 0.0
    %2695 = vmatprep.subr.mxu0 0.0
    %2696 = vmatpush1.msra.mxu0 0.0
    %2697 = vmatprep.subr.mxu0 0.0
    %2698 = vmatpush1.msra.mxu0 0.0
    %2699 = vmatprep.subr.mxu0 0.0
    %2700 = vmatpush1.msra.mxu0 0.0
    %2701 = vmatprep.subr.mxu0 0.0
    %2702 = vmatpush1.msra.mxu0 0.0
    %2703 = vmatprep.subr.mxu0 0.0
    %2704 = vmatpush1.msra.mxu0 0.0
    %2705 = vmatprep.subr.mxu0 0.0
    %2706 = vmatpush1.msra.mxu0 0.0
    %2707 = vmatprep.subr.mxu0 0.0
    %2708 = vmatpush1.msra.mxu0 0.0
    %2709 = vmatprep.subr.mxu0 0.0
    %2710 = vmatpush1.msra.mxu0 0.0
    %2711 = vmatprep.subr.mxu0 0.0
    %2712 = vmatpush1.msra.mxu0 0.0
    %2713 = vmatprep.subr.mxu0 0.0
    %2714 = vmatpush1.msra.mxu0 0.0
    %2715 = vmatprep.subr.mxu0 0.0
    %2716 = vmatpush1.msra.mxu0 0.0
    %2717 = vmatprep.subr.mxu0 0.0
    %2718 = vmatpush1.msra.mxu0 0.0
    %2719 = vmatprep.mubr.f32.mxu0 0.0
    %2720 = vmatmul.mubr.f32.gmra.mrb[0].mxu0 %v2653
    %v2721 = vpop.f32.mrb[0].mxu0
    %v2722 = vadd.f32 0.0, %v2721
    %v2723 = vpop.f32.mrb[0].mxu0
    %2724 = vdwg.mxu0
    %v2725 = vadd.f32 %v2649, %v2722
    %v2726 = vxor.u32 %v2648, 2147483648
    %v2727 = vmul.f32 %v2726, 1.442695
    %v2728 = vpow.pop %v2727
    %v2729 = vadd.f32 %v2728, 1.0
    %v2730 = vrcp.pop %v2729
    %v2731 = vmul.f32 1.0, %v2730
    %v2732 = vtanh.pop %v2648
    %v2733 = vmul.f32 %v2731, %v2541
    %2735 = vrot.lane.b32.xlu0 %v2732, 32
    %v2736 = vpop.permute.xlu0 %2735
    %v2738 = vmul.f32 %v2731, %v2736
    %2740 = vrot.lane.b32.xlu0 %v2738, 32
    %v2741 = vpop.permute.xlu0 %2740
    %v2743 = vadd.f32 %v2733, %v2741
    %v2744 = vtanh.pop %v2743
    %2746 = vrot.lane.b32.xlu0 %v2744, 32
    %v2747 = vpop.permute.xlu0 %2746
    %v2749 = vmul.f32 %v2731, %v2747
    %v2750 = vxor.u32 %v2725, 2147483648
    %v2751 = vmul.f32 %v2750, 1.442695
    %v2752 = vpow.pop %v2751
    %v2753 = vadd.f32 %v2752, 1.0
    %v2754 = vrcp.pop %v2753
    %v2755 = vmul.f32 1.0, %v2754
    %v2756 = vtanh.pop %v2725
    %v2757 = vmul.f32 %v2755, %v2565
    %2759 = vrot.lane.b32.xlu0 %v2756, 32
    %v2760 = vpop.permute.xlu0 %2759
    %v2762 = vmul.f32 %v2755, %v2760
    %2764 = vrot.lane.b32.xlu0 %v2762, 32
    %v2765 = vpop.permute.xlu0 %2764
    %v2767 = vadd.f32 %v2757, %v2765
    %v2768 = vtanh.pop %v2767
    %2770 = vrot.lane.b32.xlu0 %v2768, 32
    %v2771 = vpop.permute.xlu0 %2770
    %v2773 = vmul.f32 %v2755, %v2771
    %v2774 = vld [vmem:[#allocation2 + $0x18] sm:$0xff]
    %2776 = vrot.lane.b32.xlu0 %v2749, 64
    %v2777 = vpop.permute.xlu0 %2776
    %v2778 = vsel %vm188, %v2777, 0
    %2780 = vmatprep.subr.mxu0 0.0
    %2781 = vmatpush1.msra.mxu0 %v2169
    %2782 = vmatprep.subr.mxu0 0.0
    %2783 = vmatpush1.msra.mxu0 %v2170
    %2784 = vmatprep.subr.mxu0 0.0
    %2785 = vmatpush1.msra.mxu0 %v2171
    %2786 = vmatprep.subr.mxu0 0.0
    %2787 = vmatpush1.msra.mxu0 %v2172
    %2788 = vmatprep.subr.mxu0 0.0
    %2789 = vmatpush1.msra.mxu0 0.0
    %2790 = vmatprep.subr.mxu0 0.0
    %2791 = vmatpush1.msra.mxu0 0.0
    %2792 = vmatprep.subr.mxu0 0.0
    %2793 = vmatpush1.msra.mxu0 0.0
    %2794 = vmatprep.subr.mxu0 0.0
    %2795 = vmatpush1.msra.mxu0 0.0
    %2796 = vmatprep.subr.mxu0 0.0
    %2797 = vmatpush1.msra.mxu0 0.0
    %2798 = vmatprep.subr.mxu0 0.0
    %2799 = vmatpush1.msra.mxu0 0.0
    %2800 = vmatprep.subr.mxu0 0.0
    %2801 = vmatpush1.msra.mxu0 0.0
    %2802 = vmatprep.subr.mxu0 0.0
    %2803 = vmatpush1.msra.mxu0 0.0
    %2804 = vmatprep.subr.mxu0 0.0
    %2805 = vmatpush1.msra.mxu0 0.0
    %2806 = vmatprep.subr.mxu0 0.0
    %2807 = vmatpush1.msra.mxu0 0.0
    %2808 = vmatprep.subr.mxu0 0.0
    %2809 = vmatpush1.msra.mxu0 0.0
    %2810 = vmatprep.subr.mxu0 0.0
    %2811 = vmatpush1.msra.mxu0 0.0
    %2812 = vmatprep.subr.mxu0 0.0
    %2813 = vmatpush1.msra.mxu0 0.0
    %2814 = vmatprep.subr.mxu0 0.0
    %2815 = vmatpush1.msra.mxu0 0.0
    %2816 = vmatprep.subr.mxu0 0.0
    %2817 = vmatpush1.msra.mxu0 0.0
    %2818 = vmatprep.subr.mxu0 0.0
    %2819 = vmatpush1.msra.mxu0 0.0
    %2820 = vmatprep.subr.mxu0 0.0
    %2821 = vmatpush1.msra.mxu0 0.0
    %2822 = vmatprep.subr.mxu0 0.0
    %2823 = vmatpush1.msra.mxu0 0.0
    %2824 = vmatprep.subr.mxu0 0.0
    %2825 = vmatpush1.msra.mxu0 0.0
    %2826 = vmatprep.subr.mxu0 0.0
    %2827 = vmatpush1.msra.mxu0 0.0
    %2828 = vmatprep.subr.mxu0 0.0
    %2829 = vmatpush1.msra.mxu0 0.0
    %2830 = vmatprep.subr.mxu0 0.0
    %2831 = vmatpush1.msra.mxu0 0.0
    %2832 = vmatprep.subr.mxu0 0.0
    %2833 = vmatpush1.msra.mxu0 0.0
    %2834 = vmatprep.subr.mxu0 0.0
    %2835 = vmatpush1.msra.mxu0 0.0
    %2836 = vmatprep.subr.mxu0 0.0
    %2837 = vmatpush1.msra.mxu0 0.0
    %2838 = vmatprep.subr.mxu0 0.0
    %2839 = vmatpush1.msra.mxu0 0.0
    %2840 = vmatprep.subr.mxu0 0.0
    %2841 = vmatpush1.msra.mxu0 0.0
    %2842 = vmatprep.subr.mxu0 0.0
    %2843 = vmatpush1.msra.mxu0 0.0
    %2844 = vmatprep.mubr.f32.mxu0 0.0
    %2845 = vmatmul.mubr.f32.gmra.mrb[0].mxu0 %v2778
    %v2846 = vpop.f32.mrb[0].mxu0
    %v2847 = vadd.f32 0.0, %v2846
    %v2848 = vpop.f32.mrb[0].mxu0
    %2849 = vdwg.mxu0
    %v2850 = vadd.f32 %v2774, %v2847
    %v2851 = vld [vmem:[#allocation3 + $0x20] sm:$0xff]
    %2853 = vrot.lane.b32.xlu0 %v2773, 64
    %v2854 = vpop.permute.xlu0 %2853
    %v2855 = vsel %vm188, %v2854, 0
    %2857 = vmatprep.subr.mxu0 0.0
    %2858 = vmatpush1.msra.mxu0 %v2174
    %2859 = vmatprep.subr.mxu0 0.0
    %2860 = vmatpush1.msra.mxu0 %v2175
    %2861 = vmatprep.subr.mxu0 0.0
    %2862 = vmatpush1.msra.mxu0 %v2176
    %2863 = vmatprep.subr.mxu0 0.0
    %2864 = vmatpush1.msra.mxu0 %v2177
    %2865 = vmatprep.subr.mxu0 0.0
    %2866 = vmatpush1.msra.mxu0 0.0
    %2867 = vmatprep.subr.mxu0 0.0
    %2868 = vmatpush1.msra.mxu0 0.0
    %2869 = vmatprep.subr.mxu0 0.0
    %2870 = vmatpush1.msra.mxu0 0.0
    %2871 = vmatprep.subr.mxu0 0.0
    %2872 = vmatpush1.msra.mxu0 0.0
    %2873 = vmatprep.subr.mxu0 0.0
    %2874 = vmatpush1.msra.mxu0 0.0
    %2875 = vmatprep.subr.mxu0 0.0
    %2876 = vmatpush1.msra.mxu0 0.0
    %2877 = vmatprep.subr.mxu0 0.0
    %2878 = vmatpush1.msra.mxu0 0.0
    %2879 = vmatprep.subr.mxu0 0.0
    %2880 = vmatpush1.msra.mxu0 0.0
    %2881 = vmatprep.subr.mxu0 0.0
    %2882 = vmatpush1.msra.mxu0 0.0
    %2883 = vmatprep.subr.mxu0 0.0
    %2884 = vmatpush1.msra.mxu0 0.0
    %2885 = vmatprep.subr.mxu0 0.0
    %2886 = vmatpush1.msra.mxu0 0.0
    %2887 = vmatprep.subr.mxu0 0.0
    %2888 = vmatpush1.msra.mxu0 0.0
    %2889 = vmatprep.subr.mxu0 0.0
    %2890 = vmatpush1.msra.mxu0 0.0
    %2891 = vmatprep.subr.mxu0 0.0
    %2892 = vmatpush1.msra.mxu0 0.0
    %2893 = vmatprep.subr.mxu0 0.0
    %2894 = vmatpush1.msra.mxu0 0.0
    %2895 = vmatprep.subr.mxu0 0.0
    %2896 = vmatpush1.msra.mxu0 0.0
    %2897 = vmatprep.subr.mxu0 0.0
    %2898 = vmatpush1.msra.mxu0 0.0
    %2899 = vmatprep.subr.mxu0 0.0
    %2900 = vmatpush1.msra.mxu0 0.0
    %2901 = vmatprep.subr.mxu0 0.0
    %2902 = vmatpush1.msra.mxu0 0.0
    %2903 = vmatprep.subr.mxu0 0.0
    %2904 = vmatpush1.msra.mxu0 0.0
    %2905 = vmatprep.subr.mxu0 0.0
    %2906 = vmatpush1.msra.mxu0 0.0
    %2907 = vmatprep.subr.mxu0 0.0
    %2908 = vmatpush1.msra.mxu0 0.0
    %2909 = vmatprep.subr.mxu0 0.0
    %2910 = vmatpush1.msra.mxu0 0.0
    %2911 = vmatprep.subr.mxu0 0.0
    %2912 = vmatpush1.msra.mxu0 0.0
    %2913 = vmatprep.subr.mxu0 0.0
    %2914 = vmatpush1.msra.mxu0 0.0
    %2915 = vmatprep.subr.mxu0 0.0
    %2916 = vmatpush1.msra.mxu0 0.0
    %2917 = vmatprep.subr.mxu0 0.0
    %2918 = vmatpush1.msra.mxu0 0.0
    %2919 = vmatprep.subr.mxu0 0.0
    %2920 = vmatpush1.msra.mxu0 0.0
    %2921 = vmatprep.mubr.f32.mxu0 0.0
    %2922 = vmatmul.mubr.f32.gmra.mrb[0].mxu0 %v2855
    %v2923 = vpop.f32.mrb[0].mxu0
    %v2924 = vadd.f32 0.0, %v2923
    %v2925 = vpop.f32.mrb[0].mxu0
    %2926 = vdwg.mxu0
    %v2927 = vadd.f32 %v2851, %v2924
    %v2928 = vxor.u32 %v2850, 2147483648
    %v2929 = vmul.f32 %v2928, 1.442695
    %v2930 = vpow.pop %v2929
    %v2931 = vadd.f32 %v2930, 1.0
    %v2932 = vrcp.pop %v2931
    %v2933 = vmul.f32 1.0, %v2932
    %v2934 = vtanh.pop %v2850
    %v2935 = vmul.f32 %v2933, %v2743
    %2937 = vrot.lane.b32.xlu0 %v2934, 32
    %v2938 = vpop.permute.xlu0 %2937
    %v2940 = vmul.f32 %v2933, %v2938
    %2942 = vrot.lane.b32.xlu0 %v2940, 32
    %v2943 = vpop.permute.xlu0 %2942
    %v2945 = vadd.f32 %v2935, %v2943
    %v2946 = vtanh.pop %v2945
    %2948 = vrot.lane.b32.xlu0 %v2946, 32
    %v2949 = vpop.permute.xlu0 %2948
    %v2951 = vmul.f32 %v2933, %v2949
    %v2952 = vxor.u32 %v2927, 2147483648
    %v2953 = vmul.f32 %v2952, 1.442695
    %v2954 = vpow.pop %v2953
    %v2955 = vadd.f32 %v2954, 1.0
    %v2956 = vrcp.pop %v2955
    %v2957 = vmul.f32 1.0, %v2956
    %v2958 = vtanh.pop %v2927
    %v2959 = vmul.f32 %v2957, %v2767
    %2961 = vrot.lane.b32.xlu0 %v2958, 32
    %v2962 = vpop.permute.xlu0 %2961
    %v2964 = vmul.f32 %v2957, %v2962
    %2966 = vrot.lane.b32.xlu0 %v2964, 32
    %v2967 = vpop.permute.xlu0 %2966
    %v2969 = vadd.f32 %v2959, %v2967
    %v2970 = vtanh.pop %v2969
    %2972 = vrot.lane.b32.xlu0 %v2970, 32
    %v2973 = vpop.permute.xlu0 %2972
    %v2975 = vmul.f32 %v2957, %v2973
    %v2976 = vld [vmem:[#allocation2 + $0x20] sm:$0xff]
    %2978 = vrot.lane.b32.xlu0 %v2951, 64
    %v2979 = vpop.permute.xlu0 %2978
    %v2980 = vsel %vm188, %v2979, 0
    %2982 = vmatprep.subr.mxu0 0.0
    %2983 = vmatpush1.msra.mxu0 %v2169
    %2984 = vmatprep.subr.mxu0 0.0
    %2985 = vmatpush1.msra.mxu0 %v2170
    %2986 = vmatprep.subr.mxu0 0.0
    %2987 = vmatpush1.msra.mxu0 %v2171
    %2988 = vmatprep.subr.mxu0 0.0
    %2989 = vmatpush1.msra.mxu0 %v2172
    %2990 = vmatprep.subr.mxu0 0.0
    %2991 = vmatpush1.msra.mxu0 0.0
    %2992 = vmatprep.subr.mxu0 0.0
    %2993 = vmatpush1.msra.mxu0 0.0
    %2994 = vmatprep.subr.mxu0 0.0
    %2995 = vmatpush1.msra.mxu0 0.0
    %2996 = vmatprep.subr.mxu0 0.0
    %2997 = vmatpush1.msra.mxu0 0.0
    %2998 = vmatprep.subr.mxu0 0.0
    %2999 = vmatpush1.msra.mxu0 0.0
    %3000 = vmatprep.subr.mxu0 0.0
    %3001 = vmatpush1.msra.mxu0 0.0
    %3002 = vmatprep.subr.mxu0 0.0
    %3003 = vmatpush1.msra.mxu0 0.0
    %3004 = vmatprep.subr.mxu0 0.0
    %3005 = vmatpush1.msra.mxu0 0.0
    %3006 = vmatprep.subr.mxu0 0.0
    %3007 = vmatpush1.msra.mxu0 0.0
    %3008 = vmatprep.subr.mxu0 0.0
    %3009 = vmatpush1.msra.mxu0 0.0
    %3010 = vmatprep.subr.mxu0 0.0
    %3011 = vmatpush1.msra.mxu0 0.0
    %3012 = vmatprep.subr.mxu0 0.0
    %3013 = vmatpush1.msra.mxu0 0.0
    %3014 = vmatprep.subr.mxu0 0.0
    %3015 = vmatpush1.msra.mxu0 0.0
    %3016 = vmatprep.subr.mxu0 0.0
    %3017 = vmatpush1.msra.mxu0 0.0
    %3018 = vmatprep.subr.mxu0 0.0
    %3019 = vmatpush1.msra.mxu0 0.0
    %3020 = vmatprep.subr.mxu0 0.0
    %3021 = vmatpush1.msra.mxu0 0.0
    %3022 = vmatprep.subr.mxu0 0.0
    %3023 = vmatpush1.msra.mxu0 0.0
    %3024 = vmatprep.subr.mxu0 0.0
    %3025 = vmatpush1.msra.mxu0 0.0
    %3026 = vmatprep.subr.mxu0 0.0
    %3027 = vmatpush1.msra.mxu0 0.0
    %3028 = vmatprep.subr.mxu0 0.0
    %3029 = vmatpush1.msra.mxu0 0.0
    %3030 = vmatprep.subr.mxu0 0.0
    %3031 = vmatpush1.msra.mxu0 0.0
    %3032 = vmatprep.subr.mxu0 0.0
    %3033 = vmatpush1.msra.mxu0 0.0
    %3034 = vmatprep.subr.mxu0 0.0
    %3035 = vmatpush1.msra.mxu0 0.0
    %3036 = vmatprep.subr.mxu0 0.0
    %3037 = vmatpush1.msra.mxu0 0.0
    %3038 = vmatprep.subr.mxu0 0.0
    %3039 = vmatpush1.msra.mxu0 0.0
    %3040 = vmatprep.subr.mxu0 0.0
    %3041 = vmatpush1.msra.mxu0 0.0
    %3042 = vmatprep.subr.mxu0 0.0
    %3043 = vmatpush1.msra.mxu0 0.0
    %3044 = vmatprep.subr.mxu0 0.0
    %3045 = vmatpush1.msra.mxu0 0.0
    %3046 = vmatprep.mubr.f32.mxu0 0.0
    %3047 = vmatmul.mubr.f32.gmra.mrb[0].mxu0 %v2980
    %v3048 = vpop.f32.mrb[0].mxu0
    %v3049 = vadd.f32 0.0, %v3048
    %v3050 = vpop.f32.mrb[0].mxu0
    %3051 = vdwg.mxu0
    %v3052 = vadd.f32 %v2976, %v3049
    %v3053 = vld [vmem:[#allocation3 + $0x18] sm:$0xff]
    %3055 = vrot.lane.b32.xlu0 %v2975, 64
    %v3056 = vpop.permute.xlu0 %3055
    %v3057 = vsel %vm188, %v3056, 0
    %3059 = vmatprep.subr.mxu0 0.0
    %3060 = vmatpush1.msra.mxu0 %v2174
    %3061 = vmatprep.subr.mxu0 0.0
    %3062 = vmatpush1.msra.mxu0 %v2175
    %3063 = vmatprep.subr.mxu0 0.0
    %3064 = vmatpush1.msra.mxu0 %v2176
    %3065 = vmatprep.subr.mxu0 0.0
    %3066 = vmatpush1.msra.mxu0 %v2177
    %3067 = vmatprep.subr.mxu0 0.0
    %3068 = vmatpush1.msra.mxu0 0.0
    %3069 = vmatprep.subr.mxu0 0.0
    %3070 = vmatpush1.msra.mxu0 0.0
    %3071 = vmatprep.subr.mxu0 0.0
    %3072 = vmatpush1.msra.mxu0 0.0
    %3073 = vmatprep.subr.mxu0 0.0
    %3074 = vmatpush1.msra.mxu0 0.0
    %3075 = vmatprep.subr.mxu0 0.0
    %3076 = vmatpush1.msra.mxu0 0.0
    %3077 = vmatprep.subr.mxu0 0.0
    %3078 = vmatpush1.msra.mxu0 0.0
    %3079 = vmatprep.subr.mxu0 0.0
    %3080 = vmatpush1.msra.mxu0 0.0
    %3081 = vmatprep.subr.mxu0 0.0
    %3082 = vmatpush1.msra.mxu0 0.0
    %3083 = vmatprep.subr.mxu0 0.0
    %3084 = vmatpush1.msra.mxu0 0.0
    %3085 = vmatprep.subr.mxu0 0.0
    %3086 = vmatpush1.msra.mxu0 0.0
    %3087 = vmatprep.subr.mxu0 0.0
    %3088 = vmatpush1.msra.mxu0 0.0
    %3089 = vmatprep.subr.mxu0 0.0
    %3090 = vmatpush1.msra.mxu0 0.0
    %3091 = vmatprep.subr.mxu0 0.0
    %3092 = vmatpush1.msra.mxu0 0.0
    %3093 = vmatprep.subr.mxu0 0.0
    %3094 = vmatpush1.msra.mxu0 0.0
    %3095 = vmatprep.subr.mxu0 0.0
    %3096 = vmatpush1.msra.mxu0 0.0
    %3097 = vmatprep.subr.mxu0 0.0
    %3098 = vmatpush1.msra.mxu0 0.0
    %3099 = vmatprep.subr.mxu0 0.0
    %3100 = vmatpush1.msra.mxu0 0.0
    %3101 = vmatprep.subr.mxu0 0.0
    %3102 = vmatpush1.msra.mxu0 0.0
    %3103 = vmatprep.subr.mxu0 0.0
    %3104 = vmatpush1.msra.mxu0 0.0
    %3105 = vmatprep.subr.mxu0 0.0
    %3106 = vmatpush1.msra.mxu0 0.0
    %3107 = vmatprep.subr.mxu0 0.0
    %3108 = vmatpush1.msra.mxu0 0.0
    %3109 = vmatprep.subr.mxu0 0.0
    %3110 = vmatpush1.msra.mxu0 0.0
    %3111 = vmatprep.subr.mxu0 0.0
    %3112 = vmatpush1.msra.mxu0 0.0
    %3113 = vmatprep.subr.mxu0 0.0
    %3114 = vmatpush1.msra.mxu0 0.0
    %3115 = vmatprep.subr.mxu0 0.0
    %3116 = vmatpush1.msra.mxu0 0.0
    %3117 = vmatprep.subr.mxu0 0.0
    %3118 = vmatpush1.msra.mxu0 0.0
    %3119 = vmatprep.subr.mxu0 0.0
    %3120 = vmatpush1.msra.mxu0 0.0
    %3121 = vmatprep.subr.mxu0 0.0
    %3122 = vmatpush1.msra.mxu0 0.0
    %3123 = vmatprep.mubr.f32.mxu0 0.0
    %3124 = vmatmul.mubr.f32.gmra.mrb[0].mxu0 %v3057
    %v3125 = vpop.f32.mrb[0].mxu0
    %v3126 = vadd.f32 0.0, %v3125
    %v3127 = vpop.f32.mrb[0].mxu0
    %3128 = vdwg.mxu0
    %v3129 = vadd.f32 %v3053, %v3126
    %v3130 = vxor.u32 %v3052, 2147483648
    %v3131 = vmul.f32 %v3130, 1.442695
    %v3132 = vpow.pop %v3131
    %v3133 = vadd.f32 %v3132, 1.0
    %v3134 = vrcp.pop %v3133
    %v3135 = vmul.f32 1.0, %v3134
    %v3136 = vtanh.pop %v3052
    %v3137 = vmul.f32 %v3135, %v2945
    %3139 = vrot.lane.b32.xlu0 %v3136, 32
    %v3140 = vpop.permute.xlu0 %3139
    %v3142 = vmul.f32 %v3135, %v3140
    %3144 = vrot.lane.b32.xlu0 %v3142, 32
    %v3145 = vpop.permute.xlu0 %3144
    %v3147 = vadd.f32 %v3137, %v3145
    %v3148 = vtanh.pop %v3147
    %3150 = vrot.lane.b32.xlu0 %v3148, 32
    %v3151 = vpop.permute.xlu0 %3150
    %v3153 = vmul.f32 %v3135, %v3151
    %v3154 = vxor.u32 %v3129, 2147483648
    %v3155 = vmul.f32 %v3154, 1.442695
    %v3156 = vpow.pop %v3155
    %v3157 = vadd.f32 %v3156, 1.0
    %v3158 = vrcp.pop %v3157
    %v3159 = vmul.f32 1.0, %v3158
    %v3160 = vtanh.pop %v3129
    %v3161 = vmul.f32 %v3159, %v2969
    %3163 = vrot.lane.b32.xlu0 %v3160, 32
    %v3164 = vpop.permute.xlu0 %3163
    %v3166 = vmul.f32 %v3159, %v3164
    %3168 = vrot.lane.b32.xlu0 %v3166, 32
    %v3169 = vpop.permute.xlu0 %3168
    %v3171 = vadd.f32 %v3161, %v3169
    %v3172 = vtanh.pop %v3171
    %3174 = vrot.lane.b32.xlu0 %v3172, 32
    %v3175 = vpop.permute.xlu0 %3174
    %v3177 = vmul.f32 %v3159, %v3175
    %v3178 = vld [vmem:[#allocation2 + $0x28] sm:$0xff]
    %3180 = vrot.lane.b32.xlu0 %v3153, 64
    %v3181 = vpop.permute.xlu0 %3180
    %v3182 = vsel %vm188, %v3181, 0
    %3184 = vmatprep.subr.mxu0 0.0
    %3185 = vmatpush1.msra.mxu0 %v2169
    %3186 = vmatprep.subr.mxu0 0.0
    %3187 = vmatpush1.msra.mxu0 %v2170
    %3188 = vmatprep.subr.mxu0 0.0
    %3189 = vmatpush1.msra.mxu0 %v2171
    %3190 = vmatprep.subr.mxu0 0.0
    %3191 = vmatpush1.msra.mxu0 %v2172
    %3192 = vmatprep.subr.mxu0 0.0
    %3193 = vmatpush1.msra.mxu0 0.0
    %3194 = vmatprep.subr.mxu0 0.0
    %3195 = vmatpush1.msra.mxu0 0.0
    %3196 = vmatprep.subr.mxu0 0.0
    %3197 = vmatpush1.msra.mxu0 0.0
    %3198 = vmatprep.subr.mxu0 0.0
    %3199 = vmatpush1.msra.mxu0 0.0
    %3200 = vmatprep.subr.mxu0 0.0
    %3201 = vmatpush1.msra.mxu0 0.0
    %3202 = vmatprep.subr.mxu0 0.0
    %3203 = vmatpush1.msra.mxu0 0.0
    %3204 = vmatprep.subr.mxu0 0.0
    %3205 = vmatpush1.msra.mxu0 0.0
    %3206 = vmatprep.subr.mxu0 0.0
    %3207 = vmatpush1.msra.mxu0 0.0
    %3208 = vmatprep.subr.mxu0 0.0
    %3209 = vmatpush1.msra.mxu0 0.0
    %3210 = vmatprep.subr.mxu0 0.0
    %3211 = vmatpush1.msra.mxu0 0.0
    %3212 = vmatprep.subr.mxu0 0.0
    %3213 = vmatpush1.msra.mxu0 0.0
    %3214 = vmatprep.subr.mxu0 0.0
    %3215 = vmatpush1.msra.mxu0 0.0
    %3216 = vmatprep.subr.mxu0 0.0
    %3217 = vmatpush1.msra.mxu0 0.0
    %3218 = vmatprep.subr.mxu0 0.0
    %3219 = vmatpush1.msra.mxu0 0.0
    %3220 = vmatprep.subr.mxu0 0.0
    %3221 = vmatpush1.msra.mxu0 0.0
    %3222 = vmatprep.subr.mxu0 0.0
    %3223 = vmatpush1.msra.mxu0 0.0
    %3224 = vmatprep.subr.mxu0 0.0
    %3225 = vmatpush1.msra.mxu0 0.0
    %3226 = vmatprep.subr.mxu0 0.0
    %3227 = vmatpush1.msra.mxu0 0.0
    %3228 = vmatprep.subr.mxu0 0.0
    %3229 = vmatpush1.msra.mxu0 0.0
    %3230 = vmatprep.subr.mxu0 0.0
    %3231 = vmatpush1.msra.mxu0 0.0
    %3232 = vmatprep.subr.mxu0 0.0
    %3233 = vmatpush1.msra.mxu0 0.0
    %3234 = vmatprep.subr.mxu0 0.0
    %3235 = vmatpush1.msra.mxu0 0.0
    %3236 = vmatprep.subr.mxu0 0.0
    %3237 = vmatpush1.msra.mxu0 0.0
    %3238 = vmatprep.subr.mxu0 0.0
    %3239 = vmatpush1.msra.mxu0 0.0
    %3240 = vmatprep.subr.mxu0 0.0
    %3241 = vmatpush1.msra.mxu0 0.0
    %3242 = vmatprep.subr.mxu0 0.0
    %3243 = vmatpush1.msra.mxu0 0.0
    %3244 = vmatprep.subr.mxu0 0.0
    %3245 = vmatpush1.msra.mxu0 0.0
    %3246 = vmatprep.subr.mxu0 0.0
    %3247 = vmatpush1.msra.mxu0 0.0
    %3248 = vmatprep.mubr.f32.mxu0 0.0
    %3249 = vmatmul.mubr.f32.gmra.mrb[0].mxu0 %v3182
    %v3250 = vpop.f32.mrb[0].mxu0
    %v3251 = vadd.f32 0.0, %v3250
    %v3252 = vpop.f32.mrb[0].mxu0
    %3253 = vdwg.mxu0
    %v3254 = vadd.f32 %v3178, %v3251
    %v3255 = vld [vmem:[#allocation3 + $0x10] sm:$0xff]
    %3257 = vrot.lane.b32.xlu0 %v3177, 64
    %v3258 = vpop.permute.xlu0 %3257
    %v3259 = vsel %vm188, %v3258, 0
    %3261 = vmatprep.subr.mxu0 0.0
    %3262 = vmatpush1.msra.mxu0 %v2174
    %3263 = vmatprep.subr.mxu0 0.0
    %3264 = vmatpush1.msra.mxu0 %v2175
    %3265 = vmatprep.subr.mxu0 0.0
    %3266 = vmatpush1.msra.mxu0 %v2176
    %3267 = vmatprep.subr.mxu0 0.0
    %3268 = vmatpush1.msra.mxu0 %v2177
    %3269 = vmatprep.subr.mxu0 0.0
    %3270 = vmatpush1.msra.mxu0 0.0
    %3271 = vmatprep.subr.mxu0 0.0
    %3272 = vmatpush1.msra.mxu0 0.0
    %3273 = vmatprep.subr.mxu0 0.0
    %3274 = vmatpush1.msra.mxu0 0.0
    %3275 = vmatprep.subr.mxu0 0.0
    %3276 = vmatpush1.msra.mxu0 0.0
    %3277 = vmatprep.subr.mxu0 0.0
    %3278 = vmatpush1.msra.mxu0 0.0
    %3279 = vmatprep.subr.mxu0 0.0
    %3280 = vmatpush1.msra.mxu0 0.0
    %3281 = vmatprep.subr.mxu0 0.0
    %3282 = vmatpush1.msra.mxu0 0.0
    %3283 = vmatprep.subr.mxu0 0.0
    %3284 = vmatpush1.msra.mxu0 0.0
    %3285 = vmatprep.subr.mxu0 0.0
    %3286 = vmatpush1.msra.mxu0 0.0
    %3287 = vmatprep.subr.mxu0 0.0
    %3288 = vmatpush1.msra.mxu0 0.0
    %3289 = vmatprep.subr.mxu0 0.0
    %3290 = vmatpush1.msra.mxu0 0.0
    %3291 = vmatprep.subr.mxu0 0.0
    %3292 = vmatpush1.msra.mxu0 0.0
    %3293 = vmatprep.subr.mxu0 0.0
    %3294 = vmatpush1.msra.mxu0 0.0
    %3295 = vmatprep.subr.mxu0 0.0
    %3296 = vmatpush1.msra.mxu0 0.0
    %3297 = vmatprep.subr.mxu0 0.0
    %3298 = vmatpush1.msra.mxu0 0.0
    %3299 = vmatprep.subr.mxu0 0.0
    %3300 = vmatpush1.msra.mxu0 0.0
    %3301 = vmatprep.subr.mxu0 0.0
    %3302 = vmatpush1.msra.mxu0 0.0
    %3303 = vmatprep.subr.mxu0 0.0
    %3304 = vmatpush1.msra.mxu0 0.0
    %3305 = vmatprep.subr.mxu0 0.0
    %3306 = vmatpush1.msra.mxu0 0.0
    %3307 = vmatprep.subr.mxu0 0.0
    %3308 = vmatpush1.msra.mxu0 0.0
    %3309 = vmatprep.subr.mxu0 0.0
    %3310 = vmatpush1.msra.mxu0 0.0
    %3311 = vmatprep.subr.mxu0 0.0
    %3312 = vmatpush1.msra.mxu0 0.0
    %3313 = vmatprep.subr.mxu0 0.0
    %3314 = vmatpush1.msra.mxu0 0.0
    %3315 = vmatprep.subr.mxu0 0.0
    %3316 = vmatpush1.msra.mxu0 0.0
    %3317 = vmatprep.subr.mxu0 0.0
    %3318 = vmatpush1.msra.mxu0 0.0
    %3319 = vmatprep.subr.mxu0 0.0
    %3320 = vmatpush1.msra.mxu0 0.0
    %3321 = vmatprep.subr.mxu0 0.0
    %3322 = vmatpush1.msra.mxu0 0.0
    %3323 = vmatprep.subr.mxu0 0.0
    %3324 = vmatpush1.msra.mxu0 0.0
    %3325 = vmatprep.mubr.f32.mxu0 0.0
    %3326 = vmatmul.mubr.f32.gmra.mrb[0].mxu0 %v3259
    %v3327 = vpop.f32.mrb[0].mxu0
    %v3328 = vadd.f32 0.0, %v3327
    %v3329 = vpop.f32.mrb[0].mxu0
    %3330 = vdwg.mxu0
    %v3331 = vadd.f32 %v3255, %v3328
    %v3332 = vxor.u32 %v3254, 2147483648
    %v3333 = vmul.f32 %v3332, 1.442695
    %v3334 = vpow.pop %v3333
    %v3335 = vadd.f32 %v3334, 1.0
    %v3336 = vrcp.pop %v3335
    %v3337 = vmul.f32 1.0, %v3336
    %v3338 = vtanh.pop %v3254
    %v3339 = vmul.f32 %v3337, %v3147
    %3341 = vrot.lane.b32.xlu0 %v3338, 32
    %v3342 = vpop.permute.xlu0 %3341
    %v3344 = vmul.f32 %v3337, %v3342
    %3346 = vrot.lane.b32.xlu0 %v3344, 32
    %v3347 = vpop.permute.xlu0 %3346
    %v3349 = vadd.f32 %v3339, %v3347
    %v3350 = vtanh.pop %v3349
    %3352 = vrot.lane.b32.xlu0 %v3350, 32
    %v3353 = vpop.permute.xlu0 %3352
    %v3355 = vmul.f32 %v3337, %v3353
    %v3356 = vxor.u32 %v3331, 2147483648
    %v3357 = vmul.f32 %v3356, 1.442695
    %v3358 = vpow.pop %v3357
    %v3359 = vadd.f32 %v3358, 1.0
    %v3360 = vrcp.pop %v3359
    %v3361 = vmul.f32 1.0, %v3360
    %v3362 = vtanh.pop %v3331
    %v3363 = vmul.f32 %v3361, %v3171
    %3365 = vrot.lane.b32.xlu0 %v3362, 32
    %v3366 = vpop.permute.xlu0 %3365
    %v3368 = vmul.f32 %v3361, %v3366
    %3370 = vrot.lane.b32.xlu0 %v3368, 32
    %v3371 = vpop.permute.xlu0 %3370
    %v3373 = vadd.f32 %v3363, %v3371
    %v3374 = vtanh.pop %v3373
    %3376 = vrot.lane.b32.xlu0 %v3374, 32
    %v3377 = vpop.permute.xlu0 %3376
    %v3379 = vmul.f32 %v3361, %v3377
    %v3380 = vld [vmem:[#allocation2 + $0x30] sm:$0xff]
    %3382 = vrot.lane.b32.xlu0 %v3355, 64
    %v3383 = vpop.permute.xlu0 %3382
    %v3384 = vsel %vm188, %v3383, 0
    %3386 = vmatprep.subr.mxu0 0.0
    %3387 = vmatpush1.msra.mxu0 %v2169
    %3388 = vmatprep.subr.mxu0 0.0
    %3389 = vmatpush1.msra.mxu0 %v2170
    %3390 = vmatprep.subr.mxu0 0.0
    %3391 = vmatpush1.msra.mxu0 %v2171
    %3392 = vmatprep.subr.mxu0 0.0
    %3393 = vmatpush1.msra.mxu0 %v2172
    %3394 = vmatprep.subr.mxu0 0.0
    %3395 = vmatpush1.msra.mxu0 0.0
    %3396 = vmatprep.subr.mxu0 0.0
    %3397 = vmatpush1.msra.mxu0 0.0
    %3398 = vmatprep.subr.mxu0 0.0
    %3399 = vmatpush1.msra.mxu0 0.0
    %3400 = vmatprep.subr.mxu0 0.0
    %3401 = vmatpush1.msra.mxu0 0.0
    %3402 = vmatprep.subr.mxu0 0.0
    %3403 = vmatpush1.msra.mxu0 0.0
    %3404 = vmatprep.subr.mxu0 0.0
    %3405 = vmatpush1.msra.mxu0 0.0
    %3406 = vmatprep.subr.mxu0 0.0
    %3407 = vmatpush1.msra.mxu0 0.0
    %3408 = vmatprep.subr.mxu0 0.0
    %3409 = vmatpush1.msra.mxu0 0.0
    %3410 = vmatprep.subr.mxu0 0.0
    %3411 = vmatpush1.msra.mxu0 0.0
    %3412 = vmatprep.subr.mxu0 0.0
    %3413 = vmatpush1.msra.mxu0 0.0
    %3414 = vmatprep.subr.mxu0 0.0
    %3415 = vmatpush1.msra.mxu0 0.0
    %3416 = vmatprep.subr.mxu0 0.0
    %3417 = vmatpush1.msra.mxu0 0.0
    %3418 = vmatprep.subr.mxu0 0.0
    %3419 = vmatpush1.msra.mxu0 0.0
    %3420 = vmatprep.subr.mxu0 0.0
    %3421 = vmatpush1.msra.mxu0 0.0
    %3422 = vmatprep.subr.mxu0 0.0
    %3423 = vmatpush1.msra.mxu0 0.0
    %3424 = vmatprep.subr.mxu0 0.0
    %3425 = vmatpush1.msra.mxu0 0.0
    %3426 = vmatprep.subr.mxu0 0.0
    %3427 = vmatpush1.msra.mxu0 0.0
    %3428 = vmatprep.subr.mxu0 0.0
    %3429 = vmatpush1.msra.mxu0 0.0
    %3430 = vmatprep.subr.mxu0 0.0
    %3431 = vmatpush1.msra.mxu0 0.0
    %3432 = vmatprep.subr.mxu0 0.0
    %3433 = vmatpush1.msra.mxu0 0.0
    %3434 = vmatprep.subr.mxu0 0.0
    %3435 = vmatpush1.msra.mxu0 0.0
    %3436 = vmatprep.subr.mxu0 0.0
    %3437 = vmatpush1.msra.mxu0 0.0
    %3438 = vmatprep.subr.mxu0 0.0
    %3439 = vmatpush1.msra.mxu0 0.0
    %3440 = vmatprep.subr.mxu0 0.0
    %3441 = vmatpush1.msra.mxu0 0.0
    %3442 = vmatprep.subr.mxu0 0.0
    %3443 = vmatpush1.msra.mxu0 0.0
    %3444 = vmatprep.subr.mxu0 0.0
    %3445 = vmatpush1.msra.mxu0 0.0
    %3446 = vmatprep.subr.mxu0 0.0
    %3447 = vmatpush1.msra.mxu0 0.0
    %3448 = vmatprep.subr.mxu0 0.0
    %3449 = vmatpush1.msra.mxu0 0.0
    %3450 = vmatprep.mubr.f32.mxu0 0.0
    %3451 = vmatmul.mubr.f32.gmra.mrb[0].mxu0 %v3384
    %v3452 = vpop.f32.mrb[0].mxu0
    %v3453 = vadd.f32 0.0, %v3452
    %v3454 = vpop.f32.mrb[0].mxu0
    %3455 = vdwg.mxu0
    %v3456 = vadd.f32 %v3380, %v3453
    %v3457 = vld [vmem:[#allocation3 + $0x8] sm:$0xff]
    %3459 = vrot.lane.b32.xlu0 %v3379, 64
    %v3460 = vpop.permute.xlu0 %3459
    %v3461 = vsel %vm188, %v3460, 0
    %3463 = vmatprep.subr.mxu0 0.0
    %3464 = vmatpush1.msra.mxu0 %v2174
    %3465 = vmatprep.subr.mxu0 0.0
    %3466 = vmatpush1.msra.mxu0 %v2175
    %3467 = vmatprep.subr.mxu0 0.0
    %3468 = vmatpush1.msra.mxu0 %v2176
    %3469 = vmatprep.subr.mxu0 0.0
    %3470 = vmatpush1.msra.mxu0 %v2177
    %3471 = vmatprep.subr.mxu0 0.0
    %3472 = vmatpush1.msra.mxu0 0.0
    %3473 = vmatprep.subr.mxu0 0.0
    %3474 = vmatpush1.msra.mxu0 0.0
    %3475 = vmatprep.subr.mxu0 0.0
    %3476 = vmatpush1.msra.mxu0 0.0
    %3477 = vmatprep.subr.mxu0 0.0
    %3478 = vmatpush1.msra.mxu0 0.0
    %3479 = vmatprep.subr.mxu0 0.0
    %3480 = vmatpush1.msra.mxu0 0.0
    %3481 = vmatprep.subr.mxu0 0.0
    %3482 = vmatpush1.msra.mxu0 0.0
    %3483 = vmatprep.subr.mxu0 0.0
    %3484 = vmatpush1.msra.mxu0 0.0
    %3485 = vmatprep.subr.mxu0 0.0
    %3486 = vmatpush1.msra.mxu0 0.0
    %3487 = vmatprep.subr.mxu0 0.0
    %3488 = vmatpush1.msra.mxu0 0.0
    %3489 = vmatprep.subr.mxu0 0.0
    %3490 = vmatpush1.msra.mxu0 0.0
    %3491 = vmatprep.subr.mxu0 0.0
    %3492 = vmatpush1.msra.mxu0 0.0
    %3493 = vmatprep.subr.mxu0 0.0
    %3494 = vmatpush1.msra.mxu0 0.0
    %3495 = vmatprep.subr.mxu0 0.0
    %3496 = vmatpush1.msra.mxu0 0.0
    %3497 = vmatprep.subr.mxu0 0.0
    %3498 = vmatpush1.msra.mxu0 0.0
    %3499 = vmatprep.subr.mxu0 0.0
    %3500 = vmatpush1.msra.mxu0 0.0
    %3501 = vmatprep.subr.mxu0 0.0
    %3502 = vmatpush1.msra.mxu0 0.0
    %3503 = vmatprep.subr.mxu0 0.0
    %3504 = vmatpush1.msra.mxu0 0.0
    %3505 = vmatprep.subr.mxu0 0.0
    %3506 = vmatpush1.msra.mxu0 0.0
    %3507 = vmatprep.subr.mxu0 0.0
    %3508 = vmatpush1.msra.mxu0 0.0
    %3509 = vmatprep.subr.mxu0 0.0
    %3510 = vmatpush1.msra.mxu0 0.0
    %3511 = vmatprep.subr.mxu0 0.0
    %3512 = vmatpush1.msra.mxu0 0.0
    %3513 = vmatprep.subr.mxu0 0.0
    %3514 = vmatpush1.msra.mxu0 0.0
    %3515 = vmatprep.subr.mxu0 0.0
    %3516 = vmatpush1.msra.mxu0 0.0
    %3517 = vmatprep.subr.mxu0 0.0
    %3518 = vmatpush1.msra.mxu0 0.0
    %3519 = vmatprep.subr.mxu0 0.0
    %3520 = vmatpush1.msra.mxu0 0.0
    %3521 = vmatprep.subr.mxu0 0.0
    %3522 = vmatpush1.msra.mxu0 0.0
    %3523 = vmatprep.subr.mxu0 0.0
    %3524 = vmatpush1.msra.mxu0 0.0
    %3525 = vmatprep.subr.mxu0 0.0
    %3526 = vmatpush1.msra.mxu0 0.0
    %3527 = vmatprep.mubr.f32.mxu0 0.0
    %3528 = vmatmul.mubr.f32.gmra.mrb[0].mxu0 %v3461
    %v3529 = vpop.f32.mrb[0].mxu0
    %v3530 = vadd.f32 0.0, %v3529
    %v3531 = vpop.f32.mrb[0].mxu0
    %3532 = vdwg.mxu0
    %v3533 = vadd.f32 %v3457, %v3530
    %v3534 = vxor.u32 %v3456, 2147483648
    %v3535 = vmul.f32 %v3534, 1.442695
    %v3536 = vpow.pop %v3535
    %v3537 = vadd.f32 %v3536, 1.0
    %v3538 = vrcp.pop %v3537
    %v3539 = vmul.f32 1.0, %v3538
    %v3540 = vtanh.pop %v3456
    %v3541 = vmul.f32 %v3539, %v3349
    %3543 = vrot.lane.b32.xlu0 %v3540, 32
    %v3544 = vpop.permute.xlu0 %3543
    %v3546 = vmul.f32 %v3539, %v3544
    %3548 = vrot.lane.b32.xlu0 %v3546, 32
    %v3549 = vpop.permute.xlu0 %3548
    %v3551 = vadd.f32 %v3541, %v3549
    %v3552 = vtanh.pop %v3551
    %3554 = vrot.lane.b32.xlu0 %v3552, 32
    %v3555 = vpop.permute.xlu0 %3554
    %v3557 = vmul.f32 %v3539, %v3555
    %v3558 = vxor.u32 %v3533, 2147483648
    %v3559 = vmul.f32 %v3558, 1.442695
    %v3560 = vpow.pop %v3559
    %v3561 = vadd.f32 %v3560, 1.0
    %v3562 = vrcp.pop %v3561
    %v3563 = vmul.f32 1.0, %v3562
    %v3564 = vtanh.pop %v3533
    %v3565 = vmul.f32 %v3563, %v3373
    %3567 = vrot.lane.b32.xlu0 %v3564, 32
    %v3568 = vpop.permute.xlu0 %3567
    %v3570 = vmul.f32 %v3563, %v3568
    %3572 = vrot.lane.b32.xlu0 %v3570, 32
    %v3573 = vpop.permute.xlu0 %3572
    %v3575 = vadd.f32 %v3565, %v3573
    %v3576 = vtanh.pop %v3575
    %3578 = vrot.lane.b32.xlu0 %v3576, 32
    %v3579 = vpop.permute.xlu0 %3578
    %v3581 = vmul.f32 %v3563, %v3579
    %v3582 = vld [vmem:[#allocation2 + $0x38] sm:$0xff]
    %3584 = vrot.lane.b32.xlu0 %v3557, 64
    %v3585 = vpop.permute.xlu0 %3584
    %v3586 = vsel %vm188, %v3585, 0
    %3588 = vmatprep.subr.mxu0 0.0
    %3589 = vmatpush1.msra.mxu0 %v2169
    %3590 = vmatprep.subr.mxu0 0.0
    %3591 = vmatpush1.msra.mxu0 %v2170
    %3592 = vmatprep.subr.mxu0 0.0
    %3593 = vmatpush1.msra.mxu0 %v2171
    %3594 = vmatprep.subr.mxu0 0.0
    %3595 = vmatpush1.msra.mxu0 %v2172
    %3596 = vmatprep.subr.mxu0 0.0
    %3597 = vmatpush1.msra.mxu0 0.0
    %3598 = vmatprep.subr.mxu0 0.0
    %3599 = vmatpush1.msra.mxu0 0.0
    %3600 = vmatprep.subr.mxu0 0.0
    %3601 = vmatpush1.msra.mxu0 0.0
    %3602 = vmatprep.subr.mxu0 0.0
    %3603 = vmatpush1.msra.mxu0 0.0
    %3604 = vmatprep.subr.mxu0 0.0
    %3605 = vmatpush1.msra.mxu0 0.0
    %3606 = vmatprep.subr.mxu0 0.0
    %3607 = vmatpush1.msra.mxu0 0.0
    %3608 = vmatprep.subr.mxu0 0.0
    %3609 = vmatpush1.msra.mxu0 0.0
    %3610 = vmatprep.subr.mxu0 0.0
    %3611 = vmatpush1.msra.mxu0 0.0
    %3612 = vmatprep.subr.mxu0 0.0
    %3613 = vmatpush1.msra.mxu0 0.0
    %3614 = vmatprep.subr.mxu0 0.0
    %3615 = vmatpush1.msra.mxu0 0.0
    %3616 = vmatprep.subr.mxu0 0.0
    %3617 = vmatpush1.msra.mxu0 0.0
    %3618 = vmatprep.subr.mxu0 0.0
    %3619 = vmatpush1.msra.mxu0 0.0
    %3620 = vmatprep.subr.mxu0 0.0
    %3621 = vmatpush1.msra.mxu0 0.0
    %3622 = vmatprep.subr.mxu0 0.0
    %3623 = vmatpush1.msra.mxu0 0.0
    %3624 = vmatprep.subr.mxu0 0.0
    %3625 = vmatpush1.msra.mxu0 0.0
    %3626 = vmatprep.subr.mxu0 0.0
    %3627 = vmatpush1.msra.mxu0 0.0
    %3628 = vmatprep.subr.mxu0 0.0
    %3629 = vmatpush1.msra.mxu0 0.0
    %3630 = vmatprep.subr.mxu0 0.0
    %3631 = vmatpush1.msra.mxu0 0.0
    %3632 = vmatprep.subr.mxu0 0.0
    %3633 = vmatpush1.msra.mxu0 0.0
    %3634 = vmatprep.subr.mxu0 0.0
    %3635 = vmatpush1.msra.mxu0 0.0
    %3636 = vmatprep.subr.mxu0 0.0
    %3637 = vmatpush1.msra.mxu0 0.0
    %3638 = vmatprep.subr.mxu0 0.0
    %3639 = vmatpush1.msra.mxu0 0.0
    %3640 = vmatprep.subr.mxu0 0.0
    %3641 = vmatpush1.msra.mxu0 0.0
    %3642 = vmatprep.subr.mxu0 0.0
    %3643 = vmatpush1.msra.mxu0 0.0
    %3644 = vmatprep.subr.mxu0 0.0
    %3645 = vmatpush1.msra.mxu0 0.0
    %3646 = vmatprep.subr.mxu0 0.0
    %3647 = vmatpush1.msra.mxu0 0.0
    %3648 = vmatprep.subr.mxu0 0.0
    %3649 = vmatpush1.msra.mxu0 0.0
    %3650 = vmatprep.subr.mxu0 0.0
    %3651 = vmatpush1.msra.mxu0 0.0
    %3652 = vmatprep.mubr.f32.mxu0 0.0
    %3653 = vmatmul.mubr.f32.gmra.mrb[0].mxu0 %v3586
    %v3654 = vpop.f32.mrb[0].mxu0
    %v3655 = vadd.f32 0.0, %v3654
    %v3656 = vpop.f32.mrb[0].mxu0
    %3657 = vdwg.mxu0
    %v3658 = vadd.f32 %v3582, %v3655
    %v3659 = vld [vmem:[#allocation3] sm:$0xff]
    %3661 = vrot.lane.b32.xlu0 %v3581, 64
    %v3662 = vpop.permute.xlu0 %3661
    %v3663 = vsel %vm188, %v3662, 0
    %3665 = vmatprep.subr.mxu0 0.0
    %3666 = vmatpush1.msra.mxu0 %v2174
    %3667 = vmatprep.subr.mxu0 0.0
    %3668 = vmatpush1.msra.mxu0 %v2175
    %3669 = vmatprep.subr.mxu0 0.0
    %3670 = vmatpush1.msra.mxu0 %v2176
    %3671 = vmatprep.subr.mxu0 0.0
    %3672 = vmatpush1.msra.mxu0 %v2177
    %3673 = vmatprep.subr.mxu0 0.0
    %3674 = vmatpush1.msra.mxu0 0.0
    %3675 = vmatprep.subr.mxu0 0.0
    %3676 = vmatpush1.msra.mxu0 0.0
    %3677 = vmatprep.subr.mxu0 0.0
    %3678 = vmatpush1.msra.mxu0 0.0
    %3679 = vmatprep.subr.mxu0 0.0
    %3680 = vmatpush1.msra.mxu0 0.0
    %3681 = vmatprep.subr.mxu0 0.0
    %3682 = vmatpush1.msra.mxu0 0.0
    %3683 = vmatprep.subr.mxu0 0.0
    %3684 = vmatpush1.msra.mxu0 0.0
    %3685 = vmatprep.subr.mxu0 0.0
    %3686 = vmatpush1.msra.mxu0 0.0
    %3687 = vmatprep.subr.mxu0 0.0
    %3688 = vmatpush1.msra.mxu0 0.0
    %3689 = vmatprep.subr.mxu0 0.0
    %3690 = vmatpush1.msra.mxu0 0.0
    %3691 = vmatprep.subr.mxu0 0.0
    %3692 = vmatpush1.msra.mxu0 0.0
    %3693 = vmatprep.subr.mxu0 0.0
    %3694 = vmatpush1.msra.mxu0 0.0
    %3695 = vmatprep.subr.mxu0 0.0
    %3696 = vmatpush1.msra.mxu0 0.0
    %3697 = vmatprep.subr.mxu0 0.0
    %3698 = vmatpush1.msra.mxu0 0.0
    %3699 = vmatprep.subr.mxu0 0.0
    %3700 = vmatpush1.msra.mxu0 0.0
    %3701 = vmatprep.subr.mxu0 0.0
    %3702 = vmatpush1.msra.mxu0 0.0
    %3703 = vmatprep.subr.mxu0 0.0
    %3704 = vmatpush1.msra.mxu0 0.0
    %3705 = vmatprep.subr.mxu0 0.0
    %3706 = vmatpush1.msra.mxu0 0.0
    %3707 = vmatprep.subr.mxu0 0.0
    %3708 = vmatpush1.msra.mxu0 0.0
    %3709 = vmatprep.subr.mxu0 0.0
    %3710 = vmatpush1.msra.mxu0 0.0
    %3711 = vmatprep.subr.mxu0 0.0
    %3712 = vmatpush1.msra.mxu0 0.0
    %3713 = vmatprep.subr.mxu0 0.0
    %3714 = vmatpush1.msra.mxu0 0.0
    %3715 = vmatprep.subr.mxu0 0.0
    %3716 = vmatpush1.msra.mxu0 0.0
    %3717 = vmatprep.subr.mxu0 0.0
    %3718 = vmatpush1.msra.mxu0 0.0
    %3719 = vmatprep.subr.mxu0 0.0
    %3720 = vmatpush1.msra.mxu0 0.0
    %3721 = vmatprep.subr.mxu0 0.0
    %3722 = vmatpush1.msra.mxu0 0.0
    %3723 = vmatprep.subr.mxu0 0.0
    %3724 = vmatpush1.msra.mxu0 0.0
    %3725 = vmatprep.subr.mxu0 0.0
    %3726 = vmatpush1.msra.mxu0 0.0
    %3727 = vmatprep.subr.mxu0 0.0
    %3728 = vmatpush1.msra.mxu0 0.0
    %3729 = vmatprep.mubr.f32.mxu0 0.0
    %3730 = vmatmul.mubr.f32.gmra.mrb[0].mxu0 %v3663
    %v3731 = vpop.f32.mrb[0].mxu0
    %v3732 = vadd.f32 0.0, %v3731
    %v3733 = vpop.f32.mrb[0].mxu0
    %3734 = vdwg.mxu0
    %v3735 = vadd.f32 %v3659, %v3732
    %v3736 = vxor.u32 %v3658, 2147483648
    %v3737 = vmul.f32 %v3736, 1.442695
    %v3738 = vpow.pop %v3737
    %v3739 = vadd.f32 %v3738, 1.0
    %v3740 = vrcp.pop %v3739
    %v3741 = vmul.f32 1.0, %v3740
    %v3742 = vtanh.pop %v3658
    %v3743 = vmul.f32 %v3741, %v3551
    %3745 = vrot.lane.b32.xlu0 %v3742, 32
    %v3746 = vpop.permute.xlu0 %3745
    %v3748 = vmul.f32 %v3741, %v3746
    %3750 = vrot.lane.b32.xlu0 %v3748, 32
    %v3751 = vpop.permute.xlu0 %3750
    %v3753 = vadd.f32 %v3743, %v3751
    %v3754 = vtanh.pop %v3753
    %3756 = vrot.lane.b32.xlu0 %v3754, 32
    %v3757 = vpop.permute.xlu0 %3756
    %v3759 = vmul.f32 %v3741, %v3757
    %v3760 = vxor.u32 %v3735, 2147483648
    %v3761 = vmul.f32 %v3760, 1.442695
    %v3762 = vpow.pop %v3761
    %v3763 = vadd.f32 %v3762, 1.0
    %v3764 = vrcp.pop %v3763
    %v3765 = vmul.f32 1.0, %v3764
    %v3766 = vtanh.pop %v3735
    %v3767 = vmul.f32 %v3765, %v3575
    %3769 = vrot.lane.b32.xlu0 %v3766, 32
    %v3770 = vpop.permute.xlu0 %3769
    %v3772 = vmul.f32 %v3765, %v3770
    %3774 = vrot.lane.b32.xlu0 %v3772, 32
    %v3775 = vpop.permute.xlu0 %3774
    %v3777 = vadd.f32 %v3767, %v3775
    %v3778 = vtanh.pop %v3777
    %3780 = vrot.lane.b32.xlu0 %v3778, 32
    %v3781 = vpop.permute.xlu0 %3780
    %v3783 = vmul.f32 %v3765, %v3781
    %v3784 = vld [vmem:[%s7] sm:$0x1]
    %v3785 = vlaneseq
    %v3786 = vshrl.u32 %v3785, 7
    %v3787 = vsub.s32 0, %v3786
    %v3788 = vrot.slane %v3784, %v3787
    %3790 = vrot.lane.b32.xlu0 %v3788, 64
    %v3791 = vpop.permute.xlu0 %3790
    %v3793 = vmul.f32 %v3759, %v3791
    %3795 = vrot.lane.b32.xlu0 %v3793, 64
    %v3796 = vpop.permute.xlu0 %3795
    %v3798 = vsel %vm188, %v3796, 0.0
    %3799 = vadd.xlane.f32.xlu0 %v3798
    %v3800 = vpop.xlane.xlu0 %3799
    %v3801 = vld [vmem:[%s7 + $0x1] sm:$0x1]
    %v3802 = vlaneseq
    %v3803 = vshrl.u32 %v3802, 7
    %v3804 = vsub.s32 0, %v3803
    %v3805 = vrot.slane %v3801, %v3804
    %3807 = vrot.lane.b32.xlu0 %v3805, 64
    %v3808 = vpop.permute.xlu0 %3807
    %v3810 = vmul.f32 %v3783, %v3808
    %3812 = vrot.lane.b32.xlu0 %v3810, 64
    %v3813 = vpop.permute.xlu0 %3812
    %v3815 = vsel %vm188, %v3813, 0.0
    %3816 = vadd.xlane.f32.xlu0 %v3815
    %v3817 = vpop.xlane.xlu0 %3816
    %v3818 = vadd.f32 %v3800, %v3817
    %v3819 = vld [vmem:[#allocation6] sm:$0x1]
    %v3821 = vlaneseq
    %v3822 = vshrl.u32 %v3821, 7
    %v3823 = vsub.s32 0, %v3822
    %v3824 = vrot.slane %v3819, %v3823
    %v3826 = vadd.f32 %v3818, %v3824
    %vm3827 = vcmask 7168
    %3828 = vst.msk [vmem:[%s9] sm:$0xff] %vm3827, %v3826
    // Predicated region
    $region46: #{baseline_bilstm_forward.1} parent=1 // pred_check
      _
    $region47: #{baseline_bilstm_forward.1} parent=1 // pred_check_branch
      %3830 = sbr.rel (0) target = $region49
    $region48: #{baseline_bilstm_forward.1} parent=1 // pred_region
      _
    $region49: #{baseline_bilstm_forward.1} parent=1 // pred_fallthru
      _
    // Predicated region
    $region50: #{baseline_bilstm_forward.1} parent=1 // pred_check
      _
    $region51: #{baseline_bilstm_forward.1} parent=1 // pred_check_branch
      %3832 = sbr.rel (0) target = $region53
    $region52: #{baseline_bilstm_forward.1} parent=1 // pred_region
      _
    $region53: #{baseline_bilstm_forward.1} parent=1 // pred_fallthru
      _
    %3833 = vsyncpa [#allocation8], 1
    %3834 = vsyncpa [#allocation10], 1

</llo_original>
